<compile_context>
chip_gen: v5e
topology: v5e:2x2
jax: 0.10.0
libtpu: 0.0.40
codegen_flags: <defaults>
</compile_context>

<pallas_src>
import jax
import jax.numpy as jnp
from jax.experimental import pallas as pl
from jax.experimental.pallas import tpu as pltpu


# ----------------------------------------------------------------------------
# Fused Conv_block kernel: one batch element per grid step.
#   x_ref   : (1, H, W, Cin)        NHWC input tile (f32)
#   w1_ref  : (9*Cin, Cmid)         conv1 weights, (dy,dx,cin)-major rows (bf16)
#   b1_ref  : (1, Cmid)             f32
#   w2t_ref : (Cout, 9*Cmid)        conv2 weights, pre-transposed (bf16)
#   b2_ref  : (Cout, 1)             f32
#   o_ref   : (1, Cout, H*W)        NCHW-flattened, lane-dense output
# scratches : padded input (f32), padded intermediate (f32),
#             im2col patches x2 (bf16) in VMEM.
# Invariant: the interiors of xpad_ref/mid_ref are fully overwritten every
# grid step; only the 1-pixel halo is (re-)zeroed.
# ----------------------------------------------------------------------------
def _conv_block_kernel(x_ref, w1_ref, b1_ref, w2t_ref, b2_ref, o_ref,
                       xpad_ref, mid_ref, p1_ref, p2_ref):
    H, W, Cin = x_ref.shape[1], x_ref.shape[2], x_ref.shape[3]
    Cmid = w1_ref.shape[1]
    HW = H * W
    f32 = jnp.float32
    bf16 = jnp.bfloat16
    taps = [(dy, dx) for dy in range(3) for dx in range(3)]  # static unroll

    # ---- halo-only zeroing (cheap: O(perimeter), not O(H*W)) ----
    xpad_ref[0:1, :, :] = jnp.zeros((1, W + 2, Cin), f32)
    xpad_ref[H + 1:H + 2, :, :] = jnp.zeros((1, W + 2, Cin), f32)
    xpad_ref[:, 0:1, :] = jnp.zeros((H + 2, 1, Cin), f32)
    xpad_ref[:, W + 1:W + 2, :] = jnp.zeros((H + 2, 1, Cin), f32)

    mid_ref[0:1, :, :] = jnp.zeros((1, W + 2, Cmid), f32)
    mid_ref[H + 1:H + 2, :, :] = jnp.zeros((1, W + 2, Cmid), f32)
    mid_ref[:, 0:1, :] = jnp.zeros((H + 2, 1, Cmid), f32)
    mid_ref[:, W + 1:W + 2, :] = jnp.zeros((H + 2, 1, Cmid), f32)

    # ---- conv1: pad -> im2col (bf16 patches) -> one MXU matmul (f32 acc) ----
    xpad_ref[1:H + 1, 1:W + 1, :] = x_ref[0].astype(f32)
    for t, (dy, dx) in enumerate(taps):
        p1_ref[:, t * Cin:(t + 1) * Cin] = (
            xpad_ref[dy:dy + H, dx:dx + W, :].astype(bf16).reshape(HW, Cin))
    act1 = jnp.dot(p1_ref[...], w1_ref[...], preferred_element_type=f32)
    act1 = jnp.maximum(act1 + b1_ref[...], 0.0)          # f32 bias + ReLU (VPU)

    # ---- conv2: pad intermediate -> im2col (bf16) -> NT matmul (f32 acc) ----
    mid_ref[1:H + 1, 1:W + 1, :] = act1.reshape(H, W, Cmid)
    for t, (dy, dx) in enumerate(taps):
        p2_ref[:, t * Cmid:(t + 1) * Cmid] = (
            mid_ref[dy:dy + H, dx:dx + W, :].astype(bf16).reshape(HW, Cmid))
    # (Cout, 9*Cmid) x (H*W, 9*Cmid)^T -> (Cout, H*W): both operands contract
    # their minor dim (same structure as flash-attention q@k^T).
    act2 = jax.lax.dot_general(
        w2t_ref[...], p2_ref[...],
        dimension_numbers=(((1,), (1,)), ((), ())),
        preferred_element_type=f32)
    act2 = jnp.maximum(act2 + b2_ref[...], 0.0)          # f32 bias + ReLU (VPU)

    # Lane-dense store: minor dim H*W is a multiple of 128 (asserted by wrapper).
    o_ref[0] = act2.astype(o_ref.dtype)


# ----------------------------------------------------------------------------
# VMEM footprint estimate (includes (sublane, lane) tile padding) used to set
# an explicit vmem_limit_bytes.
# ----------------------------------------------------------------------------
def _ceil_to(x, m):
    return (x + m - 1) // m * m


def _padded_vmem_bytes(shape, dtype):
    itemsize = jnp.dtype(dtype).itemsize
    sublane = 8 * (4 // itemsize)          # 8 rows for f32, 16 for bf16
    if len(shape) < 2:
        return _ceil_to(int(shape[0]) if shape else 1, 128) * itemsize
    lead = 1
    for d in shape[:-2]:
        lead *= int(d)
    return (lead * _ceil_to(int(shape[-2]), sublane)
            * _ceil_to(int(shape[-1]), 128) * itemsize)


def conv_block_forward(params, x_nchw, drop_rate=0.0):
    """Conv_block forward. Takes/returns NCHW like the PyTorch module."""
    del drop_rate  # eval-mode dropout is identity (see TODO at top)
    w1, b1, w2, b2 = params
    N, Cin, H, W = x_nchw.shape
    Cmid = w1.shape[-1]
    Cout = w2.shape[-1]
    HW = H * W
    assert w1.shape == (3, 3, Cin, Cmid) and w2.shape == (3, 3, Cmid, Cout)
    # Lane-dense output guard: minor dim of the NCHW-flat store must be a
    # multiple of 128, otherwise the store degrades to masked vst.msk.
    assert HW % 128 == 0, (
        f"H*W={HW} must be a multiple of 128 for the lane-dense NCHW output. "
        "TODO(synk): pad H*W up to a multiple of 128 for odd spatial sizes.")

    # Layout glue (input only): NCHW -> NHWC so channels sit on lanes in-kernel.
    x_nhwc = jnp.transpose(x_nchw, (0, 2, 3, 1))

    # Weights go to the MXU in bf16 (f32 accumulation); biases stay f32.
    w1_2d = w1.reshape(9 * Cin, Cmid).astype(jnp.bfloat16)
    w2_t = w2.reshape(9 * Cmid, Cout).T.astype(jnp.bfloat16)   # (Cout, 9*Cmid)
    b1_2d = b1.reshape(1, Cmid).astype(jnp.float32)
    b2_2d = b2.reshape(Cout, 1).astype(jnp.float32)

    scratch_shapes = [
        pltpu.VMEM((H + 2, W + 2, Cin), jnp.float32),    # padded input
        pltpu.VMEM((H + 2, W + 2, Cmid), jnp.float32),   # padded intermediate
        pltpu.VMEM((HW, 9 * Cin), jnp.bfloat16),         # im2col patches, conv1
        pltpu.VMEM((HW, 9 * Cmid), jnp.bfloat16),        # im2col patches, conv2
    ]

    # Explicit VMEM budget: double-buffered I/O blocks + resident weights +
    # scratches, with headroom for compiler temps (relayouts). Floor at the
    # 32 MiB scoped default, cap at v7x's 64 MiB per-TensorCore VMEM.
    io_blocks = [((1, H, W, Cin), x_nchw.dtype),
                 ((9 * Cin, Cmid), jnp.bfloat16),
                 ((1, Cmid), jnp.float32),
                 ((Cout, 9 * Cmid), jnp.bfloat16),
                 ((Cout, 1), jnp.float32),
                 ((1, Cout, HW), x_nchw.dtype)]
    scr_blocks = [((H + 2, W + 2, Cin), jnp.float32),
                  ((H + 2, W + 2, Cmid), jnp.float32),
                  ((HW, 9 * Cin), jnp.bfloat16),
                  ((HW, 9 * Cmid), jnp.bfloat16)]
    est = (2 * sum(_padded_vmem_bytes(s, d) for s, d in io_blocks)
           + sum(_padded_vmem_bytes(s, d) for s, d in scr_blocks))
    vmem_limit = int(min(max(4 * est, 32 * 1024 * 1024), 64 * 1024 * 1024))

    out_flat = pl.pallas_call(
        _conv_block_kernel,
        out_shape=jax.ShapeDtypeStruct((N, Cout, HW), x_nchw.dtype),
        grid=(N,),
        in_specs=[
            pl.BlockSpec((1, H, W, Cin), lambda n: (n, 0, 0, 0)),
            pl.BlockSpec((9 * Cin, Cmid), lambda n: (0, 0)),   # resident weights
            pl.BlockSpec((1, Cmid), lambda n: (0, 0)),
            pl.BlockSpec((Cout, 9 * Cmid), lambda n: (0, 0)),
            pl.BlockSpec((Cout, 1), lambda n: (0, 0)),
        ],
        out_specs=pl.BlockSpec((1, Cout, HW), lambda n: (n, 0, 0)),
        scratch_shapes=scratch_shapes,
        compiler_params=pltpu.CompilerParams(
            dimension_semantics=("parallel",),
            vmem_limit_bytes=vmem_limit),
    )(x_nhwc, w1_2d, b1_2d, w2_t, b2_2d)

    # NCHW output: (N, Cout, H*W) -> (N, Cout, H, W) is a contiguous reshape.
    return out_flat.reshape(N, Cout, H, W)


# ----------------------------------------------------------------------------
# Pure-JAX reference mimicking the kernel's precision: conv operands rounded
# to bf16 (what the MXU sees), accumulation / bias / ReLU in f32.
# ----------------------------------------------------------------------------
def conv_block_reference(params, x_nchw):
    w1, b1, w2, b2 = params
    rb = lambda a: a.astype(jnp.bfloat16).astype(jnp.float32)
    x = jnp.transpose(x_nchw, (0, 2, 3, 1)).astype(jnp.float32)

    def conv(y, w):
        return jax.lax.conv_general_dilated(
            rb(y), rb(w), window_strides=(1, 1), padding=((1, 1), (1, 1)),
            dimension_numbers=("NHWC", "HWIO", "NHWC"))

    y = jnp.maximum(conv(x, w1) + b1, 0.0)
    y = jnp.maximum(conv(y, w2) + b2, 0.0)
    return jnp.transpose(y, (0, 3, 1, 2))


def init_conv_block_params(key, in_channels, out_channels):
    k1, k2, k3, k4 = jax.random.split(key, 4)
    w1 = jax.random.normal(k1, (3, 3, in_channels, out_channels), jnp.float32) * 0.1
    b1 = jax.random.normal(k2, (out_channels,), jnp.float32) * 0.01
    w2 = jax.random.normal(k3, (3, 3, out_channels, out_channels), jnp.float32) * 0.1
    b2 = jax.random.normal(k4, (out_channels,), jnp.float32) * 0.01
    return (w1, b1, w2, b2)


if __name__ == "__main__":
    key = jax.random.PRNGKey(0)
    kx, kp = jax.random.split(key)

    N, Cin, H, W = 2, 4, 16, 16
    Cout = 8

    x = jax.random.normal(kx, (N, Cin, H, W), jnp.float32)
    params = init_conv_block_params(kp, Cin, Cout)

    out = conv_block_forward(params, x, drop_rate=0.0)
    out = jax.block_until_ready(out)

    assert out.shape == (N, Cout, H, W)
    assert bool(jnp.all(jnp.isfinite(out)))

    # The reference uses the same bf16-rounded matmul operands and f32
    # accumulation, so agreement should be ~1e-4; 1e-2 still flags any tap
    # ordering / layout bug (those produce O(0.1..1) errors).
    ref = conv_block_reference(params, x)
    max_err = float(jnp.max(jnp.abs(out - ref)))
    assert max_err < 1e-2, f"mismatch vs reference: max abs err {max_err}"

    print("KERNEL_OK")
</pallas_src>

<mosaic_0001>
module attributes {stable_mosaic.version = 11 : i64} {
  func.func @_conv_block_kernel(%arg0: i32, %arg1: memref<1x16x16x4xf32, #tpu.memory_space<vmem>>, %arg2: memref<36x8xbf16, #tpu.memory_space<vmem>>, %arg3: memref<1x8xf32, #tpu.memory_space<vmem>>, %arg4: memref<8x72xbf16, #tpu.memory_space<vmem>>, %arg5: memref<8x1xf32, #tpu.memory_space<vmem>>, %arg6: memref<1x8x256xf32, #tpu.memory_space<vmem>>, %arg7: memref<18x18x4xf32, #tpu.memory_space<vmem>>, %arg8: memref<18x18x8xf32, #tpu.memory_space<vmem>>, %arg9: memref<256x36xbf16, #tpu.memory_space<vmem>>, %arg10: memref<256x72xbf16, #tpu.memory_space<vmem>>) attributes {dimension_semantics = [#tpu.dimension_semantics<parallel>], iteration_bounds = array<i64: 2>, scalar_prefetch = 0 : i64, scratch_operands = 4 : i64, tpu.core_type = #tpu.core_type<tc>, window_params = [{transform_indices = @transform_0, window_bounds = array<i64: 1, 16, 16, 4>}, {pipeline_mode = #tpu.pipeline_mode<synchronous>, transform_indices = @transform_1, window_bounds = array<i64: 36, 8>}, {pipeline_mode = #tpu.pipeline_mode<synchronous>, transform_indices = @transform_2, window_bounds = array<i64: 1, 8>}, {pipeline_mode = #tpu.pipeline_mode<synchronous>, transform_indices = @transform_3, window_bounds = array<i64: 8, 72>}, {pipeline_mode = #tpu.pipeline_mode<synchronous>, transform_indices = @transform_4, window_bounds = array<i64: 8, 1>}, {transform_indices = @transform_5, window_bounds = array<i64: 1, 8, 256>}]} {
    %cst = arith.constant 0.000000e+00 : f32
    %0 = vector.broadcast %cst : f32 to vector<1x18x4xf32>
    %c0 = arith.constant 0 : index
    %c0_0 = arith.constant 0 : index
    %c0_1 = arith.constant 0 : index
    %1 = vector.load %arg7[%c0, %c0_0, %c0_1] : memref<18x18x4xf32, #tpu.memory_space<vmem>>, vector<1x18x4xf32>
    tpu.vector_store %arg7[%c0, %c0_0, %c0_1], %0 {strides = array<i32>} : memref<18x18x4xf32, #tpu.memory_space<vmem>>, vector<1x18x4xf32>,
    %cst_2 = arith.constant 0.000000e+00 : f32
    %2 = vector.broadcast %cst_2 : f32 to vector<1x18x4xf32>
    %c17 = arith.constant 17 : index
    %c0_3 = arith.constant 0 : index
    %c0_4 = arith.constant 0 : index
    %3 = vector.load %arg7[%c17, %c0_3, %c0_4] : memref<18x18x4xf32, #tpu.memory_space<vmem>>, vector<1x18x4xf32>
    tpu.vector_store %arg7[%c17, %c0_3, %c0_4], %2 {strides = array<i32>} : memref<18x18x4xf32, #tpu.memory_space<vmem>>, vector<1x18x4xf32>,
    %cst_5 = arith.constant 0.000000e+00 : f32
    %4 = vector.broadcast %cst_5 : f32 to vector<18x1x4xf32>
    %c0_6 = arith.constant 0 : index
    %c0_7 = arith.constant 0 : index
    %c0_8 = arith.constant 0 : index
    %5 = vector.load %arg7[%c0_6, %c0_7, %c0_8] : memref<18x18x4xf32, #tpu.memory_space<vmem>>, vector<18x1x4xf32>
    tpu.vector_store %arg7[%c0_6, %c0_7, %c0_8], %4 {strides = array<i32>} : memref<18x18x4xf32, #tpu.memory_space<vmem>>, vector<18x1x4xf32>,
    %cst_9 = arith.constant 0.000000e+00 : f32
    %6 = vector.broadcast %cst_9 : f32 to vector<18x1x4xf32>
    %c0_10 = arith.constant 0 : index
    %c17_11 = arith.constant 17 : index
    %c0_12 = arith.constant 0 : index
    %7 = vector.load %arg7[%c0_10, %c17_11, %c0_12] : memref<18x18x4xf32, #tpu.memory_space<vmem>>, vector<18x1x4xf32>
    tpu.vector_store %arg7[%c0_10, %c17_11, %c0_12], %6 {strides = array<i32>} : memref<18x18x4xf32, #tpu.memory_space<vmem>>, vector<18x1x4xf32>,
    %cst_13 = arith.constant 0.000000e+00 : f32
    %8 = vector.broadcast %cst_13 : f32 to vector<1x18x8xf32>
    %c0_14 = arith.constant 0 : index
    %c0_15 = arith.constant 0 : index
    %c0_16 = arith.constant 0 : index
    %9 = vector.load %arg8[%c0_14, %c0_15, %c0_16] : memref<18x18x8xf32, #tpu.memory_space<vmem>>, vector<1x18x8xf32>
    tpu.vector_store %arg8[%c0_14, %c0_15, %c0_16], %8 {strides = array<i32>} : memref<18x18x8xf32, #tpu.memory_space<vmem>>, vector<1x18x8xf32>,
    %cst_17 = arith.constant 0.000000e+00 : f32
    %10 = vector.broadcast %cst_17 : f32 to vector<1x18x8xf32>
    %c17_18 = arith.constant 17 : index
    %c0_19 = arith.constant 0 : index
    %c0_20 = arith.constant 0 : index
    %11 = vector.load %arg8[%c17_18, %c0_19, %c0_20] : memref<18x18x8xf32, #tpu.memory_space<vmem>>, vector<1x18x8xf32>
    tpu.vector_store %arg8[%c17_18, %c0_19, %c0_20], %10 {strides = array<i32>} : memref<18x18x8xf32, #tpu.memory_space<vmem>>, vector<1x18x8xf32>,
    %cst_21 = arith.constant 0.000000e+00 : f32
    %12 = vector.broadcast %cst_21 : f32 to vector<18x1x8xf32>
    %c0_22 = arith.constant 0 : index
    %c0_23 = arith.constant 0 : index
    %c0_24 = arith.constant 0 : index
    %13 = vector.load %arg8[%c0_22, %c0_23, %c0_24] : memref<18x18x8xf32, #tpu.memory_space<vmem>>, vector<18x1x8xf32>
    tpu.vector_store %arg8[%c0_22, %c0_23, %c0_24], %12 {strides = array<i32>} : memref<18x18x8xf32, #tpu.memory_space<vmem>>, vector<18x1x8xf32>,
    %cst_25 = arith.constant 0.000000e+00 : f32
    %14 = vector.broadcast %cst_25 : f32 to vector<18x1x8xf32>
    %c0_26 = arith.constant 0 : index
    %c17_27 = arith.constant 17 : index
    %c0_28 = arith.constant 0 : index
    %15 = vector.load %arg8[%c0_26, %c17_27, %c0_28] : memref<18x18x8xf32, #tpu.memory_space<vmem>>, vector<18x1x8xf32>
    tpu.vector_store %arg8[%c0_26, %c17_27, %c0_28], %14 {strides = array<i32>} : memref<18x18x8xf32, #tpu.memory_space<vmem>>, vector<18x1x8xf32>,
    %c0_29 = arith.constant 0 : index
    %c0_30 = arith.constant 0 : index
    %c0_31 = arith.constant 0 : index
    %c0_32 = arith.constant 0 : index
    %16 = vector.load %arg1[%c0_29, %c0_30, %c0_31, %c0_32] : memref<1x16x16x4xf32, #tpu.memory_space<vmem>>, vector<1x16x16x4xf32>
    %17 = vector.shape_cast %16 : vector<1x16x16x4xf32> to vector<16x16x4xf32>
    %c1 = arith.constant 1 : index
    %c1_33 = arith.constant 1 : index
    %c0_34 = arith.constant 0 : index
    %18 = vector.load %arg7[%c1, %c1_33, %c0_34] : memref<18x18x4xf32, #tpu.memory_space<vmem>>, vector<16x16x4xf32>
    tpu.vector_store %arg7[%c1, %c1_33, %c0_34], %17 {strides = array<i32>} : memref<18x18x4xf32, #tpu.memory_space<vmem>>, vector<16x16x4xf32>,
    %c0_35 = arith.constant 0 : index
    %c0_36 = arith.constant 0 : index
    %c0_37 = arith.constant 0 : index
    %19 = vector.load %arg7[%c0_35, %c0_36, %c0_37] : memref<18x18x4xf32, #tpu.memory_space<vmem>>, vector<16x16x4xf32>
    %20 = arith.truncf %19 : vector<16x16x4xf32> to vector<16x16x4xbf16>
    %21 = vector.shape_cast %20 : vector<16x16x4xbf16> to vector<256x4xbf16>
    %c0_38 = arith.constant 0 : index
    %c0_39 = arith.constant 0 : index
    %22 = vector.load %arg9[%c0_38, %c0_39] : memref<256x36xbf16, #tpu.memory_space<vmem>>, vector<256x4xbf16>
    tpu.vector_store %arg9[%c0_38, %c0_39], %21 {strides = array<i32>} : memref<256x36xbf16, #tpu.memory_space<vmem>>, vector<256x4xbf16>,
    %c0_40 = arith.constant 0 : index
    %c1_41 = arith.constant 1 : index
    %c0_42 = arith.constant 0 : index
    %23 = vector.load %arg7[%c0_40, %c1_41, %c0_42] : memref<18x18x4xf32, #tpu.memory_space<vmem>>, vector<16x16x4xf32>
    %24 = arith.truncf %23 : vector<16x16x4xf32> to vector<16x16x4xbf16>
    %25 = vector.shape_cast %24 : vector<16x16x4xbf16> to vector<256x4xbf16>
    %c0_43 = arith.constant 0 : index
    %c4 = arith.constant 4 : index
    %26 = vector.load %arg9[%c0_43, %c4] : memref<256x36xbf16, #tpu.memory_space<vmem>>, vector<256x4xbf16>
    tpu.vector_store %arg9[%c0_43, %c4], %25 {strides = array<i32>} : memref<256x36xbf16, #tpu.memory_space<vmem>>, vector<256x4xbf16>,
    %c0_44 = arith.constant 0 : index
    %c2 = arith.constant 2 : index
    %c0_45 = arith.constant 0 : index
    %27 = vector.load %arg7[%c0_44, %c2, %c0_45] : memref<18x18x4xf32, #tpu.memory_space<vmem>>, vector<16x16x4xf32>
    %28 = arith.truncf %27 : vector<16x16x4xf32> to vector<16x16x4xbf16>
    %29 = vector.shape_cast %28 : vector<16x16x4xbf16> to vector<256x4xbf16>
    %c0_46 = arith.constant 0 : index
    %c8 = arith.constant 8 : index
    %30 = vector.load %arg9[%c0_46, %c8] : memref<256x36xbf16, #tpu.memory_space<vmem>>, vector<256x4xbf16>
    tpu.vector_store %arg9[%c0_46, %c8], %29 {strides = array<i32>} : memref<256x36xbf16, #tpu.memory_space<vmem>>, vector<256x4xbf16>,
    %c1_47 = arith.constant 1 : index
    %c0_48 = arith.constant 0 : index
    %c0_49 = arith.constant 0 : index
    %31 = vector.load %arg7[%c1_47, %c0_48, %c0_49] : memref<18x18x4xf32, #tpu.memory_space<vmem>>, vector<16x16x4xf32>
    %32 = arith.truncf %31 : vector<16x16x4xf32> to vector<16x16x4xbf16>
    %33 = vector.shape_cast %32 : vector<16x16x4xbf16> to vector<256x4xbf16>
    %c0_50 = arith.constant 0 : index
    %c12 = arith.constant 12 : index
    %34 = vector.load %arg9[%c0_50, %c12] : memref<256x36xbf16, #tpu.memory_space<vmem>>, vector<256x4xbf16>
    tpu.vector_store %arg9[%c0_50, %c12], %33 {strides = array<i32>} : memref<256x36xbf16, #tpu.memory_space<vmem>>, vector<256x4xbf16>,
    %c1_51 = arith.constant 1 : index
    %c1_52 = arith.constant 1 : index
    %c0_53 = arith.constant 0 : index
    %35 = vector.load %arg7[%c1_51, %c1_52, %c0_53] : memref<18x18x4xf32, #tpu.memory_space<vmem>>, vector<16x16x4xf32>
    %36 = arith.truncf %35 : vector<16x16x4xf32> to vector<16x16x4xbf16>
    %37 = vector.shape_cast %36 : vector<16x16x4xbf16> to vector<256x4xbf16>
    %c0_54 = arith.constant 0 : index
    %c16 = arith.constant 16 : index
    %38 = vector.load %arg9[%c0_54, %c16] : memref<256x36xbf16, #tpu.memory_space<vmem>>, vector<256x4xbf16>
    tpu.vector_store %arg9[%c0_54, %c16], %37 {strides = array<i32>} : memref<256x36xbf16, #tpu.memory_space<vmem>>, vector<256x4xbf16>,
    %c1_55 = arith.constant 1 : index
    %c2_56 = arith.constant 2 : index
    %c0_57 = arith.constant 0 : index
    %39 = vector.load %arg7[%c1_55, %c2_56, %c0_57] : memref<18x18x4xf32, #tpu.memory_space<vmem>>, vector<16x16x4xf32>
    %40 = arith.truncf %39 : vector<16x16x4xf32> to vector<16x16x4xbf16>
    %41 = vector.shape_cast %40 : vector<16x16x4xbf16> to vector<256x4xbf16>
    %c0_58 = arith.constant 0 : index
    %c20 = arith.constant 20 : index
    %42 = vector.load %arg9[%c0_58, %c20] : memref<256x36xbf16, #tpu.memory_space<vmem>>, vector<256x4xbf16>
    tpu.vector_store %arg9[%c0_58, %c20], %41 {strides = array<i32>} : memref<256x36xbf16, #tpu.memory_space<vmem>>, vector<256x4xbf16>,
    %c2_59 = arith.constant 2 : index
    %c0_60 = arith.constant 0 : index
    %c0_61 = arith.constant 0 : index
    %43 = vector.load %arg7[%c2_59, %c0_60, %c0_61] : memref<18x18x4xf32, #tpu.memory_space<vmem>>, vector<16x16x4xf32>
    %44 = arith.truncf %43 : vector<16x16x4xf32> to vector<16x16x4xbf16>
    %45 = vector.shape_cast %44 : vector<16x16x4xbf16> to vector<256x4xbf16>
    %c0_62 = arith.constant 0 : index
    %c24 = arith.constant 24 : index
    %46 = vector.load %arg9[%c0_62, %c24] : memref<256x36xbf16, #tpu.memory_space<vmem>>, vector<256x4xbf16>
    tpu.vector_store %arg9[%c0_62, %c24], %45 {strides = array<i32>} : memref<256x36xbf16, #tpu.memory_space<vmem>>, vector<256x4xbf16>,
    %c2_63 = arith.constant 2 : index
    %c1_64 = arith.constant 1 : index
    %c0_65 = arith.constant 0 : index
    %47 = vector.load %arg7[%c2_63, %c1_64, %c0_65] : memref<18x18x4xf32, #tpu.memory_space<vmem>>, vector<16x16x4xf32>
    %48 = arith.truncf %47 : vector<16x16x4xf32> to vector<16x16x4xbf16>
    %49 = vector.shape_cast %48 : vector<16x16x4xbf16> to vector<256x4xbf16>
    %c0_66 = arith.constant 0 : index
    %c28 = arith.constant 28 : index
    %50 = vector.load %arg9[%c0_66, %c28] : memref<256x36xbf16, #tpu.memory_space<vmem>>, vector<256x4xbf16>
    tpu.vector_store %arg9[%c0_66, %c28], %49 {strides = array<i32>} : memref<256x36xbf16, #tpu.memory_space<vmem>>, vector<256x4xbf16>,
    %c2_67 = arith.constant 2 : index
    %c2_68 = arith.constant 2 : index
    %c0_69 = arith.constant 0 : index
    %51 = vector.load %arg7[%c2_67, %c2_68, %c0_69] : memref<18x18x4xf32, #tpu.memory_space<vmem>>, vector<16x16x4xf32>
    %52 = arith.truncf %51 : vector<16x16x4xf32> to vector<16x16x4xbf16>
    %53 = vector.shape_cast %52 : vector<16x16x4xbf16> to vector<256x4xbf16>
    %c0_70 = arith.constant 0 : index
    %c32 = arith.constant 32 : index
    %54 = vector.load %arg9[%c0_70, %c32] : memref<256x36xbf16, #tpu.memory_space<vmem>>, vector<256x4xbf16>
    tpu.vector_store %arg9[%c0_70, %c32], %53 {strides = array<i32>} : memref<256x36xbf16, #tpu.memory_space<vmem>>, vector<256x4xbf16>,
    %c0_71 = arith.constant 0 : index
    %c0_72 = arith.constant 0 : index
    %55 = vector.load %arg9[%c0_71, %c0_72] : memref<256x36xbf16, #tpu.memory_space<vmem>>, vector<256x36xbf16>
    %c0_73 = arith.constant 0 : index
    %c0_74 = arith.constant 0 : index
    %56 = vector.load %arg2[%c0_73, %c0_74] : memref<36x8xbf16, #tpu.memory_space<vmem>>, vector<36x8xbf16>
    %cst_75 = arith.constant dense<0.000000e+00> : vector<256x8xf32>
    %57 = tpu.matmul %55, %56, %cst_75 {dimension_numbers = #tpu.dot_dimension_numbers<[1], [0], [0], [1], [0, 0, 1, 1], [], []>} : vector<256x36xbf16>, vector<36x8xbf16>, vector<256x8xf32> -> vector<256x8xf32>
    %c0_76 = arith.constant 0 : index
    %c0_77 = arith.constant 0 : index
    %58 = vector.load %arg3[%c0_76, %c0_77] : memref<1x8xf32, #tpu.memory_space<vmem>>, vector<1x8xf32>
    %59 = vector.broadcast %58 : vector<1x8xf32> to vector<256x8xf32>
    %60 = arith.addf %57, %59 : vector<256x8xf32>
    %cst_78 = arith.constant 0.000000e+00 : f32
    %61 = vector.broadcast %cst_78 : f32 to vector<256x8xf32>
    %62 = arith.maximumf %60, %61 : vector<256x8xf32>
    %63 = vector.shape_cast %62 : vector<256x8xf32> to vector<16x16x8xf32>
    %c1_79 = arith.constant 1 : index
    %c1_80 = arith.constant 1 : index
    %c0_81 = arith.constant 0 : index
    %64 = vector.load %arg8[%c1_79, %c1_80, %c0_81] : memref<18x18x8xf32, #tpu.memory_space<vmem>>, vector<16x16x8xf32>
    tpu.vector_store %arg8[%c1_79, %c1_80, %c0_81], %63 {strides = array<i32>} : memref<18x18x8xf32, #tpu.memory_space<vmem>>, vector<16x16x8xf32>,
    %c0_82 = arith.constant 0 : index
    %c0_83 = arith.constant 0 : index
    %c0_84 = arith.constant 0 : index
    %65 = vector.load %arg8[%c0_82, %c0_83, %c0_84] : memref<18x18x8xf32, #tpu.memory_space<vmem>>, vector<16x16x8xf32>
    %66 = arith.truncf %65 : vector<16x16x8xf32> to vector<16x16x8xbf16>
    %67 = vector.shape_cast %66 : vector<16x16x8xbf16> to vector<256x8xbf16>
    %c0_85 = arith.constant 0 : index
    %c0_86 = arith.constant 0 : index
    %68 = vector.load %arg10[%c0_85, %c0_86] : memref<256x72xbf16, #tpu.memory_space<vmem>>, vector<256x8xbf16>
    tpu.vector_store %arg10[%c0_85, %c0_86], %67 {strides = array<i32>} : memref<256x72xbf16, #tpu.memory_space<vmem>>, vector<256x8xbf16>,
    %c0_87 = arith.constant 0 : index
    %c1_88 = arith.constant 1 : index
    %c0_89 = arith.constant 0 : index
    %69 = vector.load %arg8[%c0_87, %c1_88, %c0_89] : memref<18x18x8xf32, #tpu.memory_space<vmem>>, vector<16x16x8xf32>
    %70 = arith.truncf %69 : vector<16x16x8xf32> to vector<16x16x8xbf16>
    %71 = vector.shape_cast %70 : vector<16x16x8xbf16> to vector<256x8xbf16>
    %c0_90 = arith.constant 0 : index
    %c8_91 = arith.constant 8 : index
    %72 = vector.load %arg10[%c0_90, %c8_91] : memref<256x72xbf16, #tpu.memory_space<vmem>>, vector<256x8xbf16>
    tpu.vector_store %arg10[%c0_90, %c8_91], %71 {strides = array<i32>} : memref<256x72xbf16, #tpu.memory_space<vmem>>, vector<256x8xbf16>,
    %c0_92 = arith.constant 0 : index
    %c2_93 = arith.constant 2 : index
    %c0_94 = arith.constant 0 : index
    %73 = vector.load %arg8[%c0_92, %c2_93, %c0_94] : memref<18x18x8xf32, #tpu.memory_space<vmem>>, vector<16x16x8xf32>
    %74 = arith.truncf %73 : vector<16x16x8xf32> to vector<16x16x8xbf16>
    %75 = vector.shape_cast %74 : vector<16x16x8xbf16> to vector<256x8xbf16>
    %c0_95 = arith.constant 0 : index
    %c16_96 = arith.constant 16 : index
    %76 = vector.load %arg10[%c0_95, %c16_96] : memref<256x72xbf16, #tpu.memory_space<vmem>>, vector<256x8xbf16>
    tpu.vector_store %arg10[%c0_95, %c16_96], %75 {strides = array<i32>} : memref<256x72xbf16, #tpu.memory_space<vmem>>, vector<256x8xbf16>,
    %c1_97 = arith.constant 1 : index
    %c0_98 = arith.constant 0 : index
    %c0_99 = arith.constant 0 : index
    %77 = vector.load %arg8[%c1_97, %c0_98, %c0_99] : memref<18x18x8xf32, #tpu.memory_space<vmem>>, vector<16x16x8xf32>
    %78 = arith.truncf %77 : vector<16x16x8xf32> to vector<16x16x8xbf16>
    %79 = vector.shape_cast %78 : vector<16x16x8xbf16> to vector<256x8xbf16>
    %c0_100 = arith.constant 0 : index
    %c24_101 = arith.constant 24 : index
    %80 = vector.load %arg10[%c0_100, %c24_101] : memref<256x72xbf16, #tpu.memory_space<vmem>>, vector<256x8xbf16>
    tpu.vector_store %arg10[%c0_100, %c24_101], %79 {strides = array<i32>} : memref<256x72xbf16, #tpu.memory_space<vmem>>, vector<256x8xbf16>,
    %c1_102 = arith.constant 1 : index
    %c1_103 = arith.constant 1 : index
    %c0_104 = arith.constant 0 : index
    %81 = vector.load %arg8[%c1_102, %c1_103, %c0_104] : memref<18x18x8xf32, #tpu.memory_space<vmem>>, vector<16x16x8xf32>
    %82 = arith.truncf %81 : vector<16x16x8xf32> to vector<16x16x8xbf16>
    %83 = vector.shape_cast %82 : vector<16x16x8xbf16> to vector<256x8xbf16>
    %c0_105 = arith.constant 0 : index
    %c32_106 = arith.constant 32 : index
    %84 = vector.load %arg10[%c0_105, %c32_106] : memref<256x72xbf16, #tpu.memory_space<vmem>>, vector<256x8xbf16>
    tpu.vector_store %arg10[%c0_105, %c32_106], %83 {strides = array<i32>} : memref<256x72xbf16, #tpu.memory_space<vmem>>, vector<256x8xbf16>,
    %c1_107 = arith.constant 1 : index
    %c2_108 = arith.constant 2 : index
    %c0_109 = arith.constant 0 : index
    %85 = vector.load %arg8[%c1_107, %c2_108, %c0_109] : memref<18x18x8xf32, #tpu.memory_space<vmem>>, vector<16x16x8xf32>
    %86 = arith.truncf %85 : vector<16x16x8xf32> to vector<16x16x8xbf16>
    %87 = vector.shape_cast %86 : vector<16x16x8xbf16> to vector<256x8xbf16>
    %c0_110 = arith.constant 0 : index
    %c40 = arith.constant 40 : index
    %88 = vector.load %arg10[%c0_110, %c40] : memref<256x72xbf16, #tpu.memory_space<vmem>>, vector<256x8xbf16>
    tpu.vector_store %arg10[%c0_110, %c40], %87 {strides = array<i32>} : memref<256x72xbf16, #tpu.memory_space<vmem>>, vector<256x8xbf16>,
    %c2_111 = arith.constant 2 : index
    %c0_112 = arith.constant 0 : index
    %c0_113 = arith.constant 0 : index
    %89 = vector.load %arg8[%c2_111, %c0_112, %c0_113] : memref<18x18x8xf32, #tpu.memory_space<vmem>>, vector<16x16x8xf32>
    %90 = arith.truncf %89 : vector<16x16x8xf32> to vector<16x16x8xbf16>
    %91 = vector.shape_cast %90 : vector<16x16x8xbf16> to vector<256x8xbf16>
    %c0_114 = arith.constant 0 : index
    %c48 = arith.constant 48 : index
    %92 = vector.load %arg10[%c0_114, %c48] : memref<256x72xbf16, #tpu.memory_space<vmem>>, vector<256x8xbf16>
    tpu.vector_store %arg10[%c0_114, %c48], %91 {strides = array<i32>} : memref<256x72xbf16, #tpu.memory_space<vmem>>, vector<256x8xbf16>,
    %c2_115 = arith.constant 2 : index
    %c1_116 = arith.constant 1 : index
    %c0_117 = arith.constant 0 : index
    %93 = vector.load %arg8[%c2_115, %c1_116, %c0_117] : memref<18x18x8xf32, #tpu.memory_space<vmem>>, vector<16x16x8xf32>
    %94 = arith.truncf %93 : vector<16x16x8xf32> to vector<16x16x8xbf16>
    %95 = vector.shape_cast %94 : vector<16x16x8xbf16> to vector<256x8xbf16>
    %c0_118 = arith.constant 0 : index
    %c56 = arith.constant 56 : index
    %96 = vector.load %arg10[%c0_118, %c56] : memref<256x72xbf16, #tpu.memory_space<vmem>>, vector<256x8xbf16>
    tpu.vector_store %arg10[%c0_118, %c56], %95 {strides = array<i32>} : memref<256x72xbf16, #tpu.memory_space<vmem>>, vector<256x8xbf16>,
    %c2_119 = arith.constant 2 : index
    %c2_120 = arith.constant 2 : index
    %c0_121 = arith.constant 0 : index
    %97 = vector.load %arg8[%c2_119, %c2_120, %c0_121] : memref<18x18x8xf32, #tpu.memory_space<vmem>>, vector<16x16x8xf32>
    %98 = arith.truncf %97 : vector<16x16x8xf32> to vector<16x16x8xbf16>
    %99 = vector.shape_cast %98 : vector<16x16x8xbf16> to vector<256x8xbf16>
    %c0_122 = arith.constant 0 : index
    %c64 = arith.constant 64 : index
    %100 = vector.load %arg10[%c0_122, %c64] : memref<256x72xbf16, #tpu.memory_space<vmem>>, vector<256x8xbf16>
    tpu.vector_store %arg10[%c0_122, %c64], %99 {strides = array<i32>} : memref<256x72xbf16, #tpu.memory_space<vmem>>, vector<256x8xbf16>,
    %c0_123 = arith.constant 0 : index
    %c0_124 = arith.constant 0 : index
    %101 = vector.load %arg4[%c0_123, %c0_124] : memref<8x72xbf16, #tpu.memory_space<vmem>>, vector<8x72xbf16>
    %c0_125 = arith.constant 0 : index
    %c0_126 = arith.constant 0 : index
    %102 = vector.load %arg10[%c0_125, %c0_126] : memref<256x72xbf16, #tpu.memory_space<vmem>>, vector<256x72xbf16>
    %cst_127 = arith.constant dense<0.000000e+00> : vector<8x256xf32>
    %103 = tpu.matmul %101, %102, %cst_127 {dimension_numbers = #tpu.dot_dimension_numbers<[1], [1], [0], [0], [0, 0, 1, 0], [], []>} : vector<8x72xbf16>, vector<256x72xbf16>, vector<8x256xf32> -> vector<8x256xf32>
    %c0_128 = arith.constant 0 : index
    %c0_129 = arith.constant 0 : index
    %104 = vector.load %arg5[%c0_128, %c0_129] : memref<8x1xf32, #tpu.memory_space<vmem>>, vector<8x1xf32>
    %105 = vector.broadcast %104 : vector<8x1xf32> to vector<8x256xf32>
    %106 = arith.addf %103, %105 : vector<8x256xf32>
    %cst_130 = arith.constant 0.000000e+00 : f32
    %107 = vector.broadcast %cst_130 : f32 to vector<8x256xf32>
    %108 = arith.maximumf %106, %107 : vector<8x256xf32>
    %c0_131 = arith.constant 0 : index
    %c0_132 = arith.constant 0 : index
    %c0_133 = arith.constant 0 : index
    %109 = vector.load %arg6[%c0_131, %c0_132, %c0_133] : memref<1x8x256xf32, #tpu.memory_space<vmem>>, vector<1x8x256xf32>
    %110 = vector.shape_cast %109 : vector<1x8x256xf32> to vector<8x256xf32>
    %111 = vector.shape_cast %108 : vector<8x256xf32> to vector<1x8x256xf32>
    tpu.vector_store %arg6[%c0_131, %c0_132, %c0_133], %111 {strides = array<i32>} : memref<1x8x256xf32, #tpu.memory_space<vmem>>, vector<1x8x256xf32>,
    return
  }
  func.func @transform_0(%arg0: i32) -> (i32, i32, i32, i32) {
    %c0_i32 = arith.constant 0 : i32
    %c0_i32_0 = arith.constant 0 : i32
    %c0_i32_1 = arith.constant 0 : i32
    %c0_i32_2 = arith.constant 0 : i32
    return %arg0, %c0_i32, %c0_i32_0, %c0_i32_1 : i32, i32, i32, i32
  }
  func.func @transform_1(%arg0: i32) -> (i32, i32) {
    %c0_i32 = arith.constant 0 : i32
    %c0_i32_0 = arith.constant 0 : i32
    %c0_i32_1 = arith.constant 0 : i32
    return %c0_i32, %c0_i32_0 : i32, i32
  }
  func.func @transform_2(%arg0: i32) -> (i32, i32) {
    %c0_i32 = arith.constant 0 : i32
    %c0_i32_0 = arith.constant 0 : i32
    %c0_i32_1 = arith.constant 0 : i32
    return %c0_i32, %c0_i32_0 : i32, i32
  }
  func.func @transform_3(%arg0: i32) -> (i32, i32) {
    %c0_i32 = arith.constant 0 : i32
    %c0_i32_0 = arith.constant 0 : i32
    %c0_i32_1 = arith.constant 0 : i32
    return %c0_i32, %c0_i32_0 : i32, i32
  }
  func.func @transform_4(%arg0: i32) -> (i32, i32) {
    %c0_i32 = arith.constant 0 : i32
    %c0_i32_0 = arith.constant 0 : i32
    %c0_i32_1 = arith.constant 0 : i32
    return %c0_i32, %c0_i32_0 : i32, i32
  }
  func.func @transform_5(%arg0: i32) -> (i32, i32, i32) {
    %c0_i32 = arith.constant 0 : i32
    %c0_i32_0 = arith.constant 0 : i32
    %c0_i32_1 = arith.constant 0 : i32
    return %arg0, %c0_i32, %c0_i32_0 : i32, i32, i32
  }
}

</mosaic_0001>

<llo_original>
// kernel: tpu_custom_call.1
$region0: #{tpu_custom_call.1}
  #allocation0 [shape = 'u32[]', space=smem, size = 0x4, offset = 0x4, fixed_abs, tag = 'smem constant byte address 0x4 - core index']
  #allocation1 [shape = 'u32[72,128]{1,0:T(1,128)}', space=vmem, size = 0x9000, scoped, tag = 'internal scratch']
  #allocation2 [shape = 'f32[18,18,4]{2,1,0:T(8,128)}', space=vmem, size = 0x36000, scoped, tag = 'scratch operand']
  #allocation3 [shape = 'f32[18,18,8]{2,1,0:T(8,128)}', space=vmem, size = 0x36000, scoped, tag = 'scratch operand']
  #allocation4 [shape = 'bf16[256,36]{1,0:T(8,128)(2,1)}', space=vmem, size = 0x10000, scoped, tag = 'scratch operand']
  #allocation5 [shape = 'bf16[256,72]{1,0:T(8,128)(2,1)}', space=vmem, size = 0x10000, scoped, tag = 'scratch operand']
  %s0 = inlined_call_operand.vmem [shape: f32[2,16,16,4], index: 0, kind: input, shape index: {}]
  %s1 = inlined_call_operand.vmem [shape: bf16[36,8], index: 1, kind: input, shape index: {}]
  %s2 = inlined_call_operand.vmem [shape: f32[1,8], index: 2, kind: input, shape index: {}]
  %s3 = inlined_call_operand.vmem [shape: bf16[8,72], index: 3, kind: input, shape index: {}]
  %s4 = inlined_call_operand.vmem [shape: f32[8,1], index: 4, kind: input, shape index: {}]
  %s5 = inlined_call_operand.hbm [shape: f32[2,8,256], index: 5, kind: output, shape index: {}]
  %s6 = sld [smem:[#allocation0]]
  $region53: #{tpu_custom_call.1} parent=0
    _
  %s8 = ssub.s32 1, %s6
  %s9 = scalar_select 0, %s8, %s6
  $region1: #{tpu_custom_call.1} parent=0
    #allocation6 [shape = 'u8[16384]{0}', space=vmem, size = 0x4000, scoped, tag = 'output window, operand 0']
    #allocation7 [shape = 's32[2]{0}', space=sflag, size = 0x8, scoped, tag = 'scoped memory for tpu_custom_call.1']
    %10 = vsyncpa [#allocation7], 0
    %s11 = scalar_lea.sflag [#allocation7], 1
    %12 = vsyncpa %s11, 0
    loop: start=0, step=1, limit=4
    $region2: #{tpu_custom_call.1} parent=1 // loop_pre_header
      _
    $region3: #{tpu_custom_call.1} parent=1 // loop_header
      %s14 = sphi 0, %s18
      %p15 = scmp.ge.s32.totalorder %s14, 4
      %s24 = sphi 0, %s26
      %s27 = sphi 0, %s24
      %s28 = sphi 0, %s27
      %s44 = sphi 0, %s28
      %s48 = sphi 0, %s48
      %s50 = sphi 0, %s48
      %s51 = sphi 0, %s50
      %s65 = sphi 0, %s51
      %s69 = sphi 0, %s69
      %s71 = sphi 0, %s69
      %s72 = sphi 0, %s71
      %s86 = sphi 0, %s72
      %s90 = sphi 0, %s90
      %s92 = sphi 0, %s90
      %s93 = sphi 0, %s92
      %s107 = sphi 0, %s93
      %s111 = sphi 0, %s111
      %s113 = sphi 0, %s111
      %s114 = sphi 0, %s113
      %s128 = sphi 0, %s114
      %s134 = sphi 0, %s136
      %s137 = sphi 0, %s134
      %s138 = sphi 0, %s137
      %s154 = sphi 0, %s138
    $region4: #{tpu_custom_call.1} parent=1 // loop_header_branch
      %17 = sbr.rel (%p15) target = $region8
    $region5: #{tpu_custom_call.1} parent=1 // loop_body
      %s19 = ssub.s32 %s14, 1
      %s20 = ssub.s32 %s14, 2
      %s21 = sadd.s32 %s14, 1
      %s22 = ssub.s32 %s14, %s21
      %p23 = scmp.eq.s32.totalorder %s22, 0
      %s25 = sadd.s32 %s24, 1
      %s26 = scalar_select %p23, %s24, %s25
      %p29 = pneg %p23
      %p30 = scmp.eq.s32.totalorder %s14, 1
      %p31 = por %p29, %p30
      %p32 = scmp.ne.s32.totalorder %s24, %s27
      %p33 = scmp.eq.s32.totalorder %s14, 0
      %p34 = por %p32, %p33
      %p35 = scmp.ne.s32.totalorder %s24, %s27
      %p36 = scmp.eq.s32.totalorder %s19, 1
      %p37 = por %p35, %p36
      %p38 = scmp.ne.s32.totalorder %s27, %s28
      %p39 = scmp.eq.s32.totalorder %s19, 0
      %p40 = por %p38, %p39
      %p41 = scmp.ne.s32.totalorder %s27, %s28
      %p42 = scmp.eq.s32.totalorder %s20, 1
      %p43 = por %p41, %p42
      %p45 = scmp.ne.s32.totalorder %s28, %s44
      %p46 = scmp.eq.s32.totalorder %s20, 0
      %p47 = por %p45, %p46
      %s49 = sadd.s32 %s48, 1
      %p52 = scmp.eq.s32.totalorder %s14, 1
      %p53 = scmp.ne.s32.totalorder %s48, %s50
      %p54 = scmp.eq.s32.totalorder %s14, 0
      %p55 = por %p53, %p54
      %p56 = scmp.ne.s32.totalorder %s48, %s50
      %p57 = scmp.eq.s32.totalorder %s19, 1
      %p58 = por %p56, %p57
      %p59 = scmp.ne.s32.totalorder %s50, %s51
      %p60 = scmp.eq.s32.totalorder %s19, 0
      %p61 = por %p59, %p60
      %p62 = scmp.ne.s32.totalorder %s50, %s51
      %p63 = scmp.eq.s32.totalorder %s20, 1
      %p64 = por %p62, %p63
      %p66 = scmp.ne.s32.totalorder %s51, %s65
      %p67 = scmp.eq.s32.totalorder %s20, 0
      %p68 = por %p66, %p67
      %s70 = sadd.s32 %s69, 1
      %p73 = scmp.eq.s32.totalorder %s14, 1
      %p74 = scmp.ne.s32.totalorder %s69, %s71
      %p75 = scmp.eq.s32.totalorder %s14, 0
      %p76 = por %p74, %p75
      %p77 = scmp.ne.s32.totalorder %s69, %s71
      %p78 = scmp.eq.s32.totalorder %s19, 1
      %p79 = por %p77, %p78
      %p80 = scmp.ne.s32.totalorder %s71, %s72
      %p81 = scmp.eq.s32.totalorder %s19, 0
      %p82 = por %p80, %p81
      %p83 = scmp.ne.s32.totalorder %s71, %s72
      %p84 = scmp.eq.s32.totalorder %s20, 1
      %p85 = por %p83, %p84
      %p87 = scmp.ne.s32.totalorder %s72, %s86
      %p88 = scmp.eq.s32.totalorder %s20, 0
      %p89 = por %p87, %p88
      %s91 = sadd.s32 %s90, 1
      %p94 = scmp.eq.s32.totalorder %s14, 1
      %p95 = scmp.ne.s32.totalorder %s90, %s92
      %p96 = scmp.eq.s32.totalorder %s14, 0
      %p97 = por %p95, %p96
      %p98 = scmp.ne.s32.totalorder %s90, %s92
      %p99 = scmp.eq.s32.totalorder %s19, 1
      %p100 = por %p98, %p99
      %p101 = scmp.ne.s32.totalorder %s92, %s93
      %p102 = scmp.eq.s32.totalorder %s19, 0
      %p103 = por %p101, %p102
      %p104 = scmp.ne.s32.totalorder %s92, %s93
      %p105 = scmp.eq.s32.totalorder %s20, 1
      %p106 = por %p104, %p105
      %p108 = scmp.ne.s32.totalorder %s93, %s107
      %p109 = scmp.eq.s32.totalorder %s20, 0
      %p110 = por %p108, %p109
      %s112 = sadd.s32 %s111, 1
      %p115 = scmp.eq.s32.totalorder %s14, 1
      %p116 = scmp.ne.s32.totalorder %s111, %s113
      %p117 = scmp.eq.s32.totalorder %s14, 0
      %p118 = por %p116, %p117
      %p119 = scmp.ne.s32.totalorder %s111, %s113
      %p120 = scmp.eq.s32.totalorder %s19, 1
      %p121 = por %p119, %p120
      %p122 = scmp.ne.s32.totalorder %s113, %s114
      %p123 = scmp.eq.s32.totalorder %s19, 0
      %p124 = por %p122, %p123
      %p125 = scmp.ne.s32.totalorder %s113, %s114
      %p126 = scmp.eq.s32.totalorder %s20, 1
      %p127 = por %p125, %p126
      %p129 = scmp.ne.s32.totalorder %s114, %s128
      %p130 = scmp.eq.s32.totalorder %s20, 0
      %p131 = por %p129, %p130
      %s132 = ssub.s32 %s14, %s21
      %p133 = scmp.eq.s32.totalorder %s132, 0
      %s135 = sadd.s32 %s134, 1
      %s136 = scalar_select %p133, %s134, %s135
      %p139 = pneg %p133
      %p140 = scmp.eq.s32.totalorder %s14, 1
      %p141 = por %p139, %p140
      %p142 = scmp.ne.s32.totalorder %s134, %s137
      %p143 = scmp.eq.s32.totalorder %s14, 0
      %p144 = por %p142, %p143
      %p145 = scmp.ne.s32.totalorder %s134, %s137
      %p146 = scmp.eq.s32.totalorder %s19, 1
      %p147 = por %p145, %p146
      %p148 = scmp.ne.s32.totalorder %s137, %s138
      %p149 = scmp.eq.s32.totalorder %s19, 0
      %p150 = por %p148, %p149
      %p151 = scmp.ne.s32.totalorder %s137, %s138
      %p152 = scmp.eq.s32.totalorder %s20, 1
      %p153 = por %p151, %p152
      %p155 = scmp.ne.s32.totalorder %s138, %s154
      %p156 = scmp.eq.s32.totalorder %s20, 0
      %p157 = por %p155, %p156
      %p158 = scmp.le.s32.totalorder 1, %s14
      %p159 = scmp.lt.s32.totalorder %s14, 3
      %p160 = pnand %p158, %p159
      %p161 = pneg %p160
      // Predicated region
      $region9: #{tpu_custom_call.1} parent=5 // pred_check
        _
      $region10: #{tpu_custom_call.1} parent=5 // pred_check_branch
        %163 = sbr.rel (%p160) target = $region12
      $region11: #{tpu_custom_call.1} parent=5 // pred_region
        %s164 = ssub.s32 %s14, 1
        // Predicated region
        $region13: #{tpu_custom_call.1} parent=11 // pred_check
          %p165 = pneg %p61
        $region14: #{tpu_custom_call.1} parent=11 // pred_check_branch
          %167 = sbr.rel (%p165) target = $region16
        $region15: #{tpu_custom_call.1} parent=11 // pred_region
          _
        $region16: #{tpu_custom_call.1} parent=11 // pred_fallthru
          _
        // Predicated region
        $region17: #{tpu_custom_call.1} parent=11 // pred_check
          %p168 = pneg %p82
        $region18: #{tpu_custom_call.1} parent=11 // pred_check_branch
          %170 = sbr.rel (%p168) target = $region20
        $region19: #{tpu_custom_call.1} parent=11 // pred_region
          _
        $region20: #{tpu_custom_call.1} parent=11 // pred_fallthru
          _
        // Predicated region
        $region21: #{tpu_custom_call.1} parent=11 // pred_check
          %p171 = pneg %p103
        $region22: #{tpu_custom_call.1} parent=11 // pred_check_branch
          %173 = sbr.rel (%p171) target = $region24
        $region23: #{tpu_custom_call.1} parent=11 // pred_region
          _
        $region24: #{tpu_custom_call.1} parent=11 // pred_fallthru
          _
        // Predicated region
        $region25: #{tpu_custom_call.1} parent=11 // pred_check
          %p174 = pneg %p124
        $region26: #{tpu_custom_call.1} parent=11 // pred_check_branch
          %176 = sbr.rel (%p174) target = $region28
        $region27: #{tpu_custom_call.1} parent=11 // pred_region
          _
        $region28: #{tpu_custom_call.1} parent=11 // pred_fallthru
          _
      $region12: #{tpu_custom_call.1} parent=5 // pred_fallthru
        _
      %p177 = scmp.lt.s32.totalorder %s14, 2
      // Predicated region
      $region29: #{tpu_custom_call.1} parent=5 // pred_check
        %p178 = pneg %p177
      $region30: #{tpu_custom_call.1} parent=5 // pred_check_branch
        %180 = sbr.rel (%p178) target = $region32
      $region31: #{tpu_custom_call.1} parent=5 // pred_region
        // Predicated region
        $region33: #{tpu_custom_call.1} parent=31 // pred_check
          %p181 = pneg %p34
        $region34: #{tpu_custom_call.1} parent=31 // pred_check_branch
          %183 = sbr.rel (%p181) target = $region36
        $region35: #{tpu_custom_call.1} parent=31 // pred_region
          %p184 = scmp.lt.s32.totalorder %s14, 1
          %s185 = scalar_select %p184, %s14, 1
          %s186 = smul.addr %s185, 32
          %s187 = smul.addr %s186, 8
          %s188 = scalar_lea.vmem %s0, %s187
        $region36: #{tpu_custom_call.1} parent=31 // pred_fallthru
          _
      $region32: #{tpu_custom_call.1} parent=5 // pred_fallthru
        _
      %p189 = scmp.le.s32.totalorder 1, %s14
      %p190 = scmp.lt.s32.totalorder %s14, 3
      %p191 = pnand %p189, %p190
      %p192 = pneg %p191
      // Predicated region
      $region37: #{tpu_custom_call.1} parent=5 // pred_check
        _
      $region38: #{tpu_custom_call.1} parent=5 // pred_check_branch
        %194 = sbr.rel (%p191) target = $region40
      $region39: #{tpu_custom_call.1} parent=5 // pred_region
        %s195 = ssub.s32 %s14, 1
        %p196 = scmp.lt.s32.totalorder %s19, 1
        %s197 = scalar_select %p196, %s19, 1
        %s198 = smul.addr %s197, 32
        %s199 = smul.addr %s198, 8
        %s200 = scalar_lea.vmem %s0, %s199
        %p201 = pneg %p40
        %p202 = pneg %p37
        %p203 = pneg %p61
        %p204 = pneg %p58
        %p205 = pneg %p82
        %p206 = pneg %p79
        %p207 = pneg %p103
        %p208 = pneg %p100
        %p209 = pneg %p124
        %p210 = pneg %p121
        %p211 = pneg %p150
        %p212 = pneg %p147
        %s213 = sand.u32 %s137, 1
        %s214 = scalar_lea.sflag [#allocation7], %s213
        %s215 = sand.u32 %s137, 1
        %s216 = smul.addr %s215, 16
        %s217 = scalar_lea.vmem [#allocation6], %s216
        %p218 = scmp.lt.s32.totalorder %s19, 1
        %s219 = scalar_select %p218, %s19, 1
        %s220 = smul.addr %s219, 32
        %s221 = smul.addr %s220, 8
        %s222 = scalar_lea.vmem %s0, %s221
        %vm224 = vcmask 31744
        %225 = vst.msk [vmem:[#allocation2] sm:$0xff] %vm224, 0.0
        %226 = vst.msk [vmem:[#allocation2 + $0x8] sm:$0xff] %vm224, 0.0
        %vm227 = vcmask 25600
        %228 = vst.msk [vmem:[#allocation2 + $0x10] sm:$0x3] %vm227, 0.0
        %s229 = scalar_lea.vmem [#allocation2], 408
        %230 = vst.msk [vmem:[%s229] sm:$0xff] %vm224, 0.0
        %231 = vst.msk [vmem:[%s229 + $0x8] sm:$0xff] %vm224, 0.0
        %232 = vst.msk [vmem:[%s229 + $0x10] sm:$0x3] %vm227, 0.0
        %vm233 = vcmask 24576
        %234 = vst.msk [vmem:[#allocation2] sm:$0x1] %vm233, 0.0
        %235 = vst.msk [vmem:[#allocation2 + $0x18] sm:$0x1] %vm233, 0.0
        %236 = vst.msk [vmem:[#allocation2 + $0x30] sm:$0x1] %vm233, 0.0
        %237 = vst.msk [vmem:[#allocation2 + $0x48] sm:$0x1] %vm233, 0.0
        %238 = vst.msk [vmem:[#allocation2 + $0x60] sm:$0x1] %vm233, 0.0
        %239 = vst.msk [vmem:[#allocation2 + $0x78] sm:$0x1] %vm233, 0.0
        %240 = vst.msk [vmem:[#allocation2 + $0x90] sm:$0x1] %vm233, 0.0
        %241 = vst.msk [vmem:[#allocation2 + $0xa8] sm:$0x1] %vm233, 0.0
        %242 = vst.msk [vmem:[#allocation2 + $0xc0] sm:$0x1] %vm233, 0.0
        %243 = vst.msk [vmem:[#allocation2 + $0xd8] sm:$0x1] %vm233, 0.0
        %244 = vst.msk [vmem:[#allocation2 + $0xf0] sm:$0x1] %vm233, 0.0
        %245 = vst.msk [vmem:[#allocation2 + $0x108] sm:$0x1] %vm233, 0.0
        %246 = vst.msk [vmem:[#allocation2 + $0x120] sm:$0x1] %vm233, 0.0
        %247 = vst.msk [vmem:[#allocation2 + $0x138] sm:$0x1] %vm233, 0.0
        %248 = vst.msk [vmem:[#allocation2 + $0x150] sm:$0x1] %vm233, 0.0
        %249 = vst.msk [vmem:[#allocation2 + $0x168] sm:$0x1] %vm233, 0.0
        %250 = vst.msk [vmem:[#allocation2 + $0x180] sm:$0x1] %vm233, 0.0
        %251 = vst.msk [vmem:[#allocation2 + $0x198] sm:$0x1] %vm233, 0.0
        %252 = vst.msk [vmem:[#allocation2 + $0x11] sm:$0x1] %vm233, 0.0
        %253 = vst.msk [vmem:[#allocation2 + $0x29] sm:$0x1] %vm233, 0.0
        %254 = vst.msk [vmem:[#allocation2 + $0x41] sm:$0x1] %vm233, 0.0
        %255 = vst.msk [vmem:[#allocation2 + $0x59] sm:$0x1] %vm233, 0.0
        %256 = vst.msk [vmem:[#allocation2 + $0x71] sm:$0x1] %vm233, 0.0
        %257 = vst.msk [vmem:[#allocation2 + $0x89] sm:$0x1] %vm233, 0.0
        %258 = vst.msk [vmem:[#allocation2 + $0xa1] sm:$0x1] %vm233, 0.0
        %259 = vst.msk [vmem:[#allocation2 + $0xb9] sm:$0x1] %vm233, 0.0
        %260 = vst.msk [vmem:[#allocation2 + $0xd1] sm:$0x1] %vm233, 0.0
        %261 = vst.msk [vmem:[#allocation2 + $0xe9] sm:$0x1] %vm233, 0.0
        %262 = vst.msk [vmem:[#allocation2 + $0x101] sm:$0x1] %vm233, 0.0
        %263 = vst.msk [vmem:[#allocation2 + $0x119] sm:$0x1] %vm233, 0.0
        %264 = vst.msk [vmem:[#allocation2 + $0x131] sm:$0x1] %vm233, 0.0
        %265 = vst.msk [vmem:[#allocation2 + $0x149] sm:$0x1] %vm233, 0.0
        %266 = vst.msk [vmem:[#allocation2 + $0x161] sm:$0x1] %vm233, 0.0
        %267 = vst.msk [vmem:[#allocation2 + $0x179] sm:$0x1] %vm233, 0.0
        %268 = vst.msk [vmem:[#allocation2 + $0x191] sm:$0x1] %vm233, 0.0
        %269 = vst.msk [vmem:[#allocation2 + $0x1a9] sm:$0x1] %vm233, 0.0
        %vm270 = vcmask 64512
        %271 = vst.msk [vmem:[#allocation3] sm:$0xff] %vm270, 0.0
        %272 = vst.msk [vmem:[#allocation3 + $0x8] sm:$0xff] %vm270, 0.0
        %vm273 = vcmask 58368
        %274 = vst.msk [vmem:[#allocation3 + $0x10] sm:$0x3] %vm273, 0.0
        %s275 = scalar_lea.vmem [#allocation3], 408
        %276 = vst.msk [vmem:[%s275] sm:$0xff] %vm270, 0.0
        %277 = vst.msk [vmem:[%s275 + $0x8] sm:$0xff] %vm270, 0.0
        %278 = vst.msk [vmem:[%s275 + $0x10] sm:$0x3] %vm273, 0.0
        %vm279 = vcmask 57344
        %280 = vst.msk [vmem:[#allocation3] sm:$0x1] %vm279, 0.0
        %281 = vst.msk [vmem:[#allocation3 + $0x18] sm:$0x1] %vm279, 0.0
        %282 = vst.msk [vmem:[#allocation3 + $0x30] sm:$0x1] %vm279, 0.0
        %283 = vst.msk [vmem:[#allocation3 + $0x48] sm:$0x1] %vm279, 0.0
        %284 = vst.msk [vmem:[#allocation3 + $0x60] sm:$0x1] %vm279, 0.0
        %285 = vst.msk [vmem:[#allocation3 + $0x78] sm:$0x1] %vm279, 0.0
        %286 = vst.msk [vmem:[#allocation3 + $0x90] sm:$0x1] %vm279, 0.0
        %287 = vst.msk [vmem:[#allocation3 + $0xa8] sm:$0x1] %vm279, 0.0
        %288 = vst.msk [vmem:[#allocation3 + $0xc0] sm:$0x1] %vm279, 0.0
        %289 = vst.msk [vmem:[#allocation3 + $0xd8] sm:$0x1] %vm279, 0.0
        %290 = vst.msk [vmem:[#allocation3 + $0xf0] sm:$0x1] %vm279, 0.0
        %291 = vst.msk [vmem:[#allocation3 + $0x108] sm:$0x1] %vm279, 0.0
        %292 = vst.msk [vmem:[#allocation3 + $0x120] sm:$0x1] %vm279, 0.0
        %293 = vst.msk [vmem:[#allocation3 + $0x138] sm:$0x1] %vm279, 0.0
        %294 = vst.msk [vmem:[#allocation3 + $0x150] sm:$0x1] %vm279, 0.0
        %295 = vst.msk [vmem:[#allocation3 + $0x168] sm:$0x1] %vm279, 0.0
        %296 = vst.msk [vmem:[#allocation3 + $0x180] sm:$0x1] %vm279, 0.0
        %297 = vst.msk [vmem:[#allocation3 + $0x198] sm:$0x1] %vm279, 0.0
        %298 = vst.msk [vmem:[#allocation3 + $0x11] sm:$0x1] %vm279, 0.0
        %299 = vst.msk [vmem:[#allocation3 + $0x29] sm:$0x1] %vm279, 0.0
        %300 = vst.msk [vmem:[#allocation3 + $0x41] sm:$0x1] %vm279, 0.0
        %301 = vst.msk [vmem:[#allocation3 + $0x59] sm:$0x1] %vm279, 0.0
        %302 = vst.msk [vmem:[#allocation3 + $0x71] sm:$0x1] %vm279, 0.0
        %303 = vst.msk [vmem:[#allocation3 + $0x89] sm:$0x1] %vm279, 0.0
        %304 = vst.msk [vmem:[#allocation3 + $0xa1] sm:$0x1] %vm279, 0.0
        %305 = vst.msk [vmem:[#allocation3 + $0xb9] sm:$0x1] %vm279, 0.0
        %306 = vst.msk [vmem:[#allocation3 + $0xd1] sm:$0x1] %vm279, 0.0
        %307 = vst.msk [vmem:[#allocation3 + $0xe9] sm:$0x1] %vm279, 0.0
        %308 = vst.msk [vmem:[#allocation3 + $0x101] sm:$0x1] %vm279, 0.0
        %309 = vst.msk [vmem:[#allocation3 + $0x119] sm:$0x1] %vm279, 0.0
        %310 = vst.msk [vmem:[#allocation3 + $0x131] sm:$0x1] %vm279, 0.0
        %311 = vst.msk [vmem:[#allocation3 + $0x149] sm:$0x1] %vm279, 0.0
        %312 = vst.msk [vmem:[#allocation3 + $0x161] sm:$0x1] %vm279, 0.0
        %313 = vst.msk [vmem:[#allocation3 + $0x179] sm:$0x1] %vm279, 0.0
        %314 = vst.msk [vmem:[#allocation3 + $0x191] sm:$0x1] %vm279, 0.0
        %315 = vst.msk [vmem:[#allocation3 + $0x1a9] sm:$0x1] %vm279, 0.0
        %v316 = vld [vmem:[%s222] sm:$0xff]
        %v317 = vld [vmem:[%s222 + $0x8] sm:$0xff]
        %v318 = vld [vmem:[%s222 + $0x10] sm:$0xff]
        %v319 = vld [vmem:[%s222 + $0x18] sm:$0xff]
        %v320 = vld [vmem:[%s222 + $0x20] sm:$0xff]
        %v321 = vld [vmem:[%s222 + $0x28] sm:$0xff]
        %v322 = vld [vmem:[%s222 + $0x30] sm:$0xff]
        %v323 = vld [vmem:[%s222 + $0x38] sm:$0xff]
        %v324 = vld [vmem:[%s222 + $0x40] sm:$0xff]
        %v325 = vld [vmem:[%s222 + $0x48] sm:$0xff]
        %v326 = vld [vmem:[%s222 + $0x50] sm:$0xff]
        %v327 = vld [vmem:[%s222 + $0x58] sm:$0xff]
        %v328 = vld [vmem:[%s222 + $0x60] sm:$0xff]
        %v329 = vld [vmem:[%s222 + $0x68] sm:$0xff]
        %v330 = vld [vmem:[%s222 + $0x70] sm:$0xff]
        %v331 = vld [vmem:[%s222 + $0x78] sm:$0xff]
        %v332 = vld [vmem:[%s222 + $0x80] sm:$0xff]
        %v333 = vld [vmem:[%s222 + $0x88] sm:$0xff]
        %v334 = vld [vmem:[%s222 + $0x90] sm:$0xff]
        %v335 = vld [vmem:[%s222 + $0x98] sm:$0xff]
        %v336 = vld [vmem:[%s222 + $0xa0] sm:$0xff]
        %v337 = vld [vmem:[%s222 + $0xa8] sm:$0xff]
        %v338 = vld [vmem:[%s222 + $0xb0] sm:$0xff]
        %v339 = vld [vmem:[%s222 + $0xb8] sm:$0xff]
        %v340 = vld [vmem:[%s222 + $0xc0] sm:$0xff]
        %v341 = vld [vmem:[%s222 + $0xc8] sm:$0xff]
        %v342 = vld [vmem:[%s222 + $0xd0] sm:$0xff]
        %v343 = vld [vmem:[%s222 + $0xd8] sm:$0xff]
        %v344 = vld [vmem:[%s222 + $0xe0] sm:$0xff]
        %v345 = vld [vmem:[%s222 + $0xe8] sm:$0xff]
        %v346 = vld [vmem:[%s222 + $0xf0] sm:$0xff]
        %v347 = vld [vmem:[%s222 + $0xf8] sm:$0xff]
        %s348 = scalar_lea.vmem [#allocation2], 24
        %349 = vst.msk [vmem:[%s348 + $0x1] sm:$0xff] %vm224, %v316
        %350 = vst.msk [vmem:[%s348 + $0x9] sm:$0xff] %vm224, %v317
        %351 = vst.msk [vmem:[%s348 + $0x19] sm:$0xff] %vm224, %v318
        %352 = vst.msk [vmem:[%s348 + $0x21] sm:$0xff] %vm224, %v319
        %353 = vst.msk [vmem:[%s348 + $0x31] sm:$0xff] %vm224, %v320
        %354 = vst.msk [vmem:[%s348 + $0x39] sm:$0xff] %vm224, %v321
        %355 = vst.msk [vmem:[%s348 + $0x49] sm:$0xff] %vm224, %v322
        %356 = vst.msk [vmem:[%s348 + $0x51] sm:$0xff] %vm224, %v323
        %357 = vst.msk [vmem:[%s348 + $0x61] sm:$0xff] %vm224, %v324
        %358 = vst.msk [vmem:[%s348 + $0x69] sm:$0xff] %vm224, %v325
        %359 = vst.msk [vmem:[%s348 + $0x79] sm:$0xff] %vm224, %v326
        %360 = vst.msk [vmem:[%s348 + $0x81] sm:$0xff] %vm224, %v327
        %361 = vst.msk [vmem:[%s348 + $0x91] sm:$0xff] %vm224, %v328
        %362 = vst.msk [vmem:[%s348 + $0x99] sm:$0xff] %vm224, %v329
        %363 = vst.msk [vmem:[%s348 + $0xa9] sm:$0xff] %vm224, %v330
        %364 = vst.msk [vmem:[%s348 + $0xb1] sm:$0xff] %vm224, %v331
        %365 = vst.msk [vmem:[%s348 + $0xc1] sm:$0xff] %vm224, %v332
        %366 = vst.msk [vmem:[%s348 + $0xc9] sm:$0xff] %vm224, %v333
        %367 = vst.msk [vmem:[%s348 + $0xd9] sm:$0xff] %vm224, %v334
        %368 = vst.msk [vmem:[%s348 + $0xe1] sm:$0xff] %vm224, %v335
        %369 = vst.msk [vmem:[%s348 + $0xf1] sm:$0xff] %vm224, %v336
        %370 = vst.msk [vmem:[%s348 + $0xf9] sm:$0xff] %vm224, %v337
        %371 = vst.msk [vmem:[%s348 + $0x109] sm:$0xff] %vm224, %v338
        %372 = vst.msk [vmem:[%s348 + $0x111] sm:$0xff] %vm224, %v339
        %373 = vst.msk [vmem:[%s348 + $0x121] sm:$0xff] %vm224, %v340
        %374 = vst.msk [vmem:[%s348 + $0x129] sm:$0xff] %vm224, %v341
        %375 = vst.msk [vmem:[%s348 + $0x139] sm:$0xff] %vm224, %v342
        %376 = vst.msk [vmem:[%s348 + $0x141] sm:$0xff] %vm224, %v343
        %377 = vst.msk [vmem:[%s348 + $0x151] sm:$0xff] %vm224, %v344
        %378 = vst.msk [vmem:[%s348 + $0x159] sm:$0xff] %vm224, %v345
        %379 = vst.msk [vmem:[%s348 + $0x169] sm:$0xff] %vm224, %v346
        %380 = vst.msk [vmem:[%s348 + $0x171] sm:$0xff] %vm224, %v347
        %v381 = vld [vmem:[#allocation2] sm:$0xff]
        %v382 = vld [vmem:[#allocation2 + $0x8] sm:$0xff]
        %v383 = vld [vmem:[#allocation2 + $0x18] sm:$0xff]
        %v384 = vld [vmem:[#allocation2 + $0x20] sm:$0xff]
        %v385 = vld [vmem:[#allocation2 + $0x30] sm:$0xff]
        %v386 = vld [vmem:[#allocation2 + $0x38] sm:$0xff]
        %v387 = vld [vmem:[#allocation2 + $0x48] sm:$0xff]
        %v388 = vld [vmem:[#allocation2 + $0x50] sm:$0xff]
        %v389 = vld [vmem:[#allocation2 + $0x60] sm:$0xff]
        %v390 = vld [vmem:[#allocation2 + $0x68] sm:$0xff]
        %v391 = vld [vmem:[#allocation2 + $0x78] sm:$0xff]
        %v392 = vld [vmem:[#allocation2 + $0x80] sm:$0xff]
        %v393 = vld [vmem:[#allocation2 + $0x90] sm:$0xff]
        %v394 = vld [vmem:[#allocation2 + $0x98] sm:$0xff]
        %v395 = vld [vmem:[#allocation2 + $0xa8] sm:$0xff]
        %v396 = vld [vmem:[#allocation2 + $0xb0] sm:$0xff]
        %v397 = vld [vmem:[#allocation2 + $0xc0] sm:$0xff]
        %v398 = vld [vmem:[#allocation2 + $0xc8] sm:$0xff]
        %v399 = vld [vmem:[#allocation2 + $0xd8] sm:$0xff]
        %v400 = vld [vmem:[#allocation2 + $0xe0] sm:$0xff]
        %v401 = vld [vmem:[#allocation2 + $0xf0] sm:$0xff]
        %v402 = vld [vmem:[#allocation2 + $0xf8] sm:$0xff]
        %v403 = vld [vmem:[#allocation2 + $0x108] sm:$0xff]
        %v404 = vld [vmem:[#allocation2 + $0x110] sm:$0xff]
        %v405 = vld [vmem:[#allocation2 + $0x120] sm:$0xff]
        %v406 = vld [vmem:[#allocation2 + $0x128] sm:$0xff]
        %v407 = vld [vmem:[#allocation2 + $0x138] sm:$0xff]
        %v408 = vld [vmem:[#allocation2 + $0x140] sm:$0xff]
        %v409 = vld [vmem:[#allocation2 + $0x150] sm:$0xff]
        %v410 = vld [vmem:[#allocation2 + $0x158] sm:$0xff]
        %v411 = vld [vmem:[#allocation2 + $0x168] sm:$0xff]
        %v412 = vld [vmem:[#allocation2 + $0x170] sm:$0xff]
        %v413 = vpack.c.bf16 %v381, %v381
        %v414 = vpack.c.bf16 %v382, %v382
        %v415 = vpack.c.bf16 %v383, %v383
        %v416 = vpack.c.bf16 %v384, %v384
        %v417 = vpack.c.bf16 %v385, %v385
        %v418 = vpack.c.bf16 %v386, %v386
        %v419 = vpack.c.bf16 %v387, %v387
        %v420 = vpack.c.bf16 %v388, %v388
        %v421 = vpack.c.bf16 %v389, %v389
        %v422 = vpack.c.bf16 %v390, %v390
        %v423 = vpack.c.bf16 %v391, %v391
        %v424 = vpack.c.bf16 %v392, %v392
        %v425 = vpack.c.bf16 %v393, %v393
        %v426 = vpack.c.bf16 %v394, %v394
        %v427 = vpack.c.bf16 %v395, %v395
        %v428 = vpack.c.bf16 %v396, %v396
        %v429 = vpack.c.bf16 %v397, %v397
        %v430 = vpack.c.bf16 %v398, %v398
        %v431 = vpack.c.bf16 %v399, %v399
        %v432 = vpack.c.bf16 %v400, %v400
        %v433 = vpack.c.bf16 %v401, %v401
        %v434 = vpack.c.bf16 %v402, %v402
        %v435 = vpack.c.bf16 %v403, %v403
        %v436 = vpack.c.bf16 %v404, %v404
        %v437 = vpack.c.bf16 %v405, %v405
        %v438 = vpack.c.bf16 %v406, %v406
        %v439 = vpack.c.bf16 %v407, %v407
        %v440 = vpack.c.bf16 %v408, %v408
        %v441 = vpack.c.bf16 %v409, %v409
        %v442 = vpack.c.bf16 %v410, %v410
        %v443 = vpack.c.bf16 %v411, %v411
        %v444 = vpack.c.bf16 %v412, %v412
        %vm445 = vcmask 27648
        %446 = vst.msk [vmem:[#allocation4] sm:$0xf] %vm445, %v413
        %447 = vst.msk [vmem:[#allocation4 + $0x4] sm:$0xf] %vm445, %v414
        %448 = vst.msk [vmem:[#allocation4 + $0x8] sm:$0xf] %vm445, %v415
        %449 = vst.msk [vmem:[#allocation4 + $0xc] sm:$0xf] %vm445, %v416
        %450 = vst.msk [vmem:[#allocation4 + $0x10] sm:$0xf] %vm445, %v417
        %451 = vst.msk [vmem:[#allocation4 + $0x14] sm:$0xf] %vm445, %v418
        %452 = vst.msk [vmem:[#allocation4 + $0x18] sm:$0xf] %vm445, %v419
        %453 = vst.msk [vmem:[#allocation4 + $0x1c] sm:$0xf] %vm445, %v420
        %454 = vst.msk [vmem:[#allocation4 + $0x20] sm:$0xf] %vm445, %v421
        %455 = vst.msk [vmem:[#allocation4 + $0x24] sm:$0xf] %vm445, %v422
        %456 = vst.msk [vmem:[#allocation4 + $0x28] sm:$0xf] %vm445, %v423
        %457 = vst.msk [vmem:[#allocation4 + $0x2c] sm:$0xf] %vm445, %v424
        %458 = vst.msk [vmem:[#allocation4 + $0x30] sm:$0xf] %vm445, %v425
        %459 = vst.msk [vmem:[#allocation4 + $0x34] sm:$0xf] %vm445, %v426
        %460 = vst.msk [vmem:[#allocation4 + $0x38] sm:$0xf] %vm445, %v427
        %461 = vst.msk [vmem:[#allocation4 + $0x3c] sm:$0xf] %vm445, %v428
        %462 = vst.msk [vmem:[#allocation4 + $0x40] sm:$0xf] %vm445, %v429
        %463 = vst.msk [vmem:[#allocation4 + $0x44] sm:$0xf] %vm445, %v430
        %464 = vst.msk [vmem:[#allocation4 + $0x48] sm:$0xf] %vm445, %v431
        %465 = vst.msk [vmem:[#allocation4 + $0x4c] sm:$0xf] %vm445, %v432
        %466 = vst.msk [vmem:[#allocation4 + $0x50] sm:$0xf] %vm445, %v433
        %467 = vst.msk [vmem:[#allocation4 + $0x54] sm:$0xf] %vm445, %v434
        %468 = vst.msk [vmem:[#allocation4 + $0x58] sm:$0xf] %vm445, %v435
        %469 = vst.msk [vmem:[#allocation4 + $0x5c] sm:$0xf] %vm445, %v436
        %470 = vst.msk [vmem:[#allocation4 + $0x60] sm:$0xf] %vm445, %v437
        %471 = vst.msk [vmem:[#allocation4 + $0x64] sm:$0xf] %vm445, %v438
        %472 = vst.msk [vmem:[#allocation4 + $0x68] sm:$0xf] %vm445, %v439
        %473 = vst.msk [vmem:[#allocation4 + $0x6c] sm:$0xf] %vm445, %v440
        %474 = vst.msk [vmem:[#allocation4 + $0x70] sm:$0xf] %vm445, %v441
        %475 = vst.msk [vmem:[#allocation4 + $0x74] sm:$0xf] %vm445, %v442
        %476 = vst.msk [vmem:[#allocation4 + $0x78] sm:$0xf] %vm445, %v443
        %477 = vst.msk [vmem:[#allocation4 + $0x7c] sm:$0xf] %vm445, %v444
        %v478 = vld [vmem:[#allocation2 + $0x1] sm:$0xff]
        %v479 = vld [vmem:[#allocation2 + $0x9] sm:$0xff]
        %v480 = vld [vmem:[#allocation2 + $0x19] sm:$0xff]
        %v481 = vld [vmem:[#allocation2 + $0x21] sm:$0xff]
        %v482 = vld [vmem:[#allocation2 + $0x31] sm:$0xff]
        %v483 = vld [vmem:[#allocation2 + $0x39] sm:$0xff]
        %v484 = vld [vmem:[#allocation2 + $0x49] sm:$0xff]
        %v485 = vld [vmem:[#allocation2 + $0x51] sm:$0xff]
        %v486 = vld [vmem:[#allocation2 + $0x61] sm:$0xff]
        %v487 = vld [vmem:[#allocation2 + $0x69] sm:$0xff]
        %v488 = vld [vmem:[#allocation2 + $0x79] sm:$0xff]
        %v489 = vld [vmem:[#allocation2 + $0x81] sm:$0xff]
        %v490 = vld [vmem:[#allocation2 + $0x91] sm:$0xff]
        %v491 = vld [vmem:[#allocation2 + $0x99] sm:$0xff]
        %v492 = vld [vmem:[#allocation2 + $0xa9] sm:$0xff]
        %v493 = vld [vmem:[#allocation2 + $0xb1] sm:$0xff]
        %v494 = vld [vmem:[#allocation2 + $0xc1] sm:$0xff]
        %v495 = vld [vmem:[#allocation2 + $0xc9] sm:$0xff]
        %v496 = vld [vmem:[#allocation2 + $0xd9] sm:$0xff]
        %v497 = vld [vmem:[#allocation2 + $0xe1] sm:$0xff]
        %v498 = vld [vmem:[#allocation2 + $0xf1] sm:$0xff]
        %v499 = vld [vmem:[#allocation2 + $0xf9] sm:$0xff]
        %v500 = vld [vmem:[#allocation2 + $0x109] sm:$0xff]
        %v501 = vld [vmem:[#allocation2 + $0x111] sm:$0xff]
        %v502 = vld [vmem:[#allocation2 + $0x121] sm:$0xff]
        %v503 = vld [vmem:[#allocation2 + $0x129] sm:$0xff]
        %v504 = vld [vmem:[#allocation2 + $0x139] sm:$0xff]
        %v505 = vld [vmem:[#allocation2 + $0x141] sm:$0xff]
        %v506 = vld [vmem:[#allocation2 + $0x151] sm:$0xff]
        %v507 = vld [vmem:[#allocation2 + $0x159] sm:$0xff]
        %v508 = vld [vmem:[#allocation2 + $0x169] sm:$0xff]
        %v509 = vld [vmem:[#allocation2 + $0x171] sm:$0xff]
        %v510 = vpack.c.bf16 %v478, %v478
        %v511 = vpack.c.bf16 %v479, %v479
        %v512 = vpack.c.bf16 %v480, %v480
        %v513 = vpack.c.bf16 %v481, %v481
        %v514 = vpack.c.bf16 %v482, %v482
        %v515 = vpack.c.bf16 %v483, %v483
        %v516 = vpack.c.bf16 %v484, %v484
        %v517 = vpack.c.bf16 %v485, %v485
        %v518 = vpack.c.bf16 %v486, %v486
        %v519 = vpack.c.bf16 %v487, %v487
        %v520 = vpack.c.bf16 %v488, %v488
        %v521 = vpack.c.bf16 %v489, %v489
        %v522 = vpack.c.bf16 %v490, %v490
        %v523 = vpack.c.bf16 %v491, %v491
        %v524 = vpack.c.bf16 %v492, %v492
        %v525 = vpack.c.bf16 %v493, %v493
        %v526 = vpack.c.bf16 %v494, %v494
        %v527 = vpack.c.bf16 %v495, %v495
        %v528 = vpack.c.bf16 %v496, %v496
        %v529 = vpack.c.bf16 %v497, %v497
        %v530 = vpack.c.bf16 %v498, %v498
        %v531 = vpack.c.bf16 %v499, %v499
        %v532 = vpack.c.bf16 %v500, %v500
        %v533 = vpack.c.bf16 %v501, %v501
        %v534 = vpack.c.bf16 %v502, %v502
        %v535 = vpack.c.bf16 %v503, %v503
        %v536 = vpack.c.bf16 %v504, %v504
        %v537 = vpack.c.bf16 %v505, %v505
        %v538 = vpack.c.bf16 %v506, %v506
        %v539 = vpack.c.bf16 %v507, %v507
        %v540 = vpack.c.bf16 %v508, %v508
        %v541 = vpack.c.bf16 %v509, %v509
        %574 = vrot.lane.b32.xlu0 %v510, 4
        %v575 = vpop.permute.xlu0 %574
        %576 = vrot.lane.b32.xlu0 %v511, 4
        %v577 = vpop.permute.xlu0 %576
        %578 = vrot.lane.b32.xlu0 %v512, 4
        %v579 = vpop.permute.xlu0 %578
        %580 = vrot.lane.b32.xlu0 %v513, 4
        %v581 = vpop.permute.xlu0 %580
        %582 = vrot.lane.b32.xlu0 %v514, 4
        %v583 = vpop.permute.xlu0 %582
        %584 = vrot.lane.b32.xlu0 %v515, 4
        %v585 = vpop.permute.xlu0 %584
        %586 = vrot.lane.b32.xlu0 %v516, 4
        %v587 = vpop.permute.xlu0 %586
        %588 = vrot.lane.b32.xlu0 %v517, 4
        %v589 = vpop.permute.xlu0 %588
        %590 = vrot.lane.b32.xlu0 %v518, 4
        %v591 = vpop.permute.xlu0 %590
        %592 = vrot.lane.b32.xlu0 %v519, 4
        %v593 = vpop.permute.xlu0 %592
        %594 = vrot.lane.b32.xlu0 %v520, 4
        %v595 = vpop.permute.xlu0 %594
        %596 = vrot.lane.b32.xlu0 %v521, 4
        %v597 = vpop.permute.xlu0 %596
        %598 = vrot.lane.b32.xlu0 %v522, 4
        %v599 = vpop.permute.xlu0 %598
        %600 = vrot.lane.b32.xlu0 %v523, 4
        %v601 = vpop.permute.xlu0 %600
        %602 = vrot.lane.b32.xlu0 %v524, 4
        %v603 = vpop.permute.xlu0 %602
        %604 = vrot.lane.b32.xlu0 %v525, 4
        %v605 = vpop.permute.xlu0 %604
        %606 = vrot.lane.b32.xlu0 %v526, 4
        %v607 = vpop.permute.xlu0 %606
        %608 = vrot.lane.b32.xlu0 %v527, 4
        %v609 = vpop.permute.xlu0 %608
        %610 = vrot.lane.b32.xlu0 %v528, 4
        %v611 = vpop.permute.xlu0 %610
        %612 = vrot.lane.b32.xlu0 %v529, 4
        %v613 = vpop.permute.xlu0 %612
        %614 = vrot.lane.b32.xlu0 %v530, 4
        %v615 = vpop.permute.xlu0 %614
        %616 = vrot.lane.b32.xlu0 %v531, 4
        %v617 = vpop.permute.xlu0 %616
        %618 = vrot.lane.b32.xlu0 %v532, 4
        %v619 = vpop.permute.xlu0 %618
        %620 = vrot.lane.b32.xlu0 %v533, 4
        %v621 = vpop.permute.xlu0 %620
        %622 = vrot.lane.b32.xlu0 %v534, 4
        %v623 = vpop.permute.xlu0 %622
        %624 = vrot.lane.b32.xlu0 %v535, 4
        %v625 = vpop.permute.xlu0 %624
        %626 = vrot.lane.b32.xlu0 %v536, 4
        %v627 = vpop.permute.xlu0 %626
        %628 = vrot.lane.b32.xlu0 %v537, 4
        %v629 = vpop.permute.xlu0 %628
        %630 = vrot.lane.b32.xlu0 %v538, 4
        %v631 = vpop.permute.xlu0 %630
        %632 = vrot.lane.b32.xlu0 %v539, 4
        %v633 = vpop.permute.xlu0 %632
        %634 = vrot.lane.b32.xlu0 %v540, 4
        %v635 = vpop.permute.xlu0 %634
        %636 = vrot.lane.b32.xlu0 %v541, 4
        %v637 = vpop.permute.xlu0 %636
        %vm670 = vcmask 60448
        %671 = vst.msk [vmem:[#allocation4] sm:$0xf] %vm670, %v575
        %672 = vst.msk [vmem:[#allocation4 + $0x4] sm:$0xf] %vm670, %v577
        %673 = vst.msk [vmem:[#allocation4 + $0x8] sm:$0xf] %vm670, %v579
        %674 = vst.msk [vmem:[#allocation4 + $0xc] sm:$0xf] %vm670, %v581
        %675 = vst.msk [vmem:[#allocation4 + $0x10] sm:$0xf] %vm670, %v583
        %676 = vst.msk [vmem:[#allocation4 + $0x14] sm:$0xf] %vm670, %v585
        %677 = vst.msk [vmem:[#allocation4 + $0x18] sm:$0xf] %vm670, %v587
        %678 = vst.msk [vmem:[#allocation4 + $0x1c] sm:$0xf] %vm670, %v589
        %679 = vst.msk [vmem:[#allocation4 + $0x20] sm:$0xf] %vm670, %v591
        %680 = vst.msk [vmem:[#allocation4 + $0x24] sm:$0xf] %vm670, %v593
        %681 = vst.msk [vmem:[#allocation4 + $0x28] sm:$0xf] %vm670, %v595
        %682 = vst.msk [vmem:[#allocation4 + $0x2c] sm:$0xf] %vm670, %v597
        %683 = vst.msk [vmem:[#allocation4 + $0x30] sm:$0xf] %vm670, %v599
        %684 = vst.msk [vmem:[#allocation4 + $0x34] sm:$0xf] %vm670, %v601
        %685 = vst.msk [vmem:[#allocation4 + $0x38] sm:$0xf] %vm670, %v603
        %686 = vst.msk [vmem:[#allocation4 + $0x3c] sm:$0xf] %vm670, %v605
        %687 = vst.msk [vmem:[#allocation4 + $0x40] sm:$0xf] %vm670, %v607
        %688 = vst.msk [vmem:[#allocation4 + $0x44] sm:$0xf] %vm670, %v609
        %689 = vst.msk [vmem:[#allocation4 + $0x48] sm:$0xf] %vm670, %v611
        %690 = vst.msk [vmem:[#allocation4 + $0x4c] sm:$0xf] %vm670, %v613
        %691 = vst.msk [vmem:[#allocation4 + $0x50] sm:$0xf] %vm670, %v615
        %692 = vst.msk [vmem:[#allocation4 + $0x54] sm:$0xf] %vm670, %v617
        %693 = vst.msk [vmem:[#allocation4 + $0x58] sm:$0xf] %vm670, %v619
        %694 = vst.msk [vmem:[#allocation4 + $0x5c] sm:$0xf] %vm670, %v621
        %695 = vst.msk [vmem:[#allocation4 + $0x60] sm:$0xf] %vm670, %v623
        %696 = vst.msk [vmem:[#allocation4 + $0x64] sm:$0xf] %vm670, %v625
        %697 = vst.msk [vmem:[#allocation4 + $0x68] sm:$0xf] %vm670, %v627
        %698 = vst.msk [vmem:[#allocation4 + $0x6c] sm:$0xf] %vm670, %v629
        %699 = vst.msk [vmem:[#allocation4 + $0x70] sm:$0xf] %vm670, %v631
        %700 = vst.msk [vmem:[#allocation4 + $0x74] sm:$0xf] %vm670, %v633
        %701 = vst.msk [vmem:[#allocation4 + $0x78] sm:$0xf] %vm670, %v635
        %702 = vst.msk [vmem:[#allocation4 + $0x7c] sm:$0xf] %vm670, %v637
        %v703 = vld [vmem:[#allocation2 + $0x2] sm:$0xff]
        %v704 = vld [vmem:[#allocation2 + $0xa] sm:$0xff]
        %v705 = vld [vmem:[#allocation2 + $0x1a] sm:$0xff]
        %v706 = vld [vmem:[#allocation2 + $0x22] sm:$0xff]
        %v707 = vld [vmem:[#allocation2 + $0x32] sm:$0xff]
        %v708 = vld [vmem:[#allocation2 + $0x3a] sm:$0xff]
        %v709 = vld [vmem:[#allocation2 + $0x4a] sm:$0xff]
        %v710 = vld [vmem:[#allocation2 + $0x52] sm:$0xff]
        %v711 = vld [vmem:[#allocation2 + $0x62] sm:$0xff]
        %v712 = vld [vmem:[#allocation2 + $0x6a] sm:$0xff]
        %v713 = vld [vmem:[#allocation2 + $0x7a] sm:$0xff]
        %v714 = vld [vmem:[#allocation2 + $0x82] sm:$0xff]
        %v715 = vld [vmem:[#allocation2 + $0x92] sm:$0xff]
        %v716 = vld [vmem:[#allocation2 + $0x9a] sm:$0xff]
        %v717 = vld [vmem:[#allocation2 + $0xaa] sm:$0xff]
        %v718 = vld [vmem:[#allocation2 + $0xb2] sm:$0xff]
        %v719 = vld [vmem:[#allocation2 + $0xc2] sm:$0xff]
        %v720 = vld [vmem:[#allocation2 + $0xca] sm:$0xff]
        %v721 = vld [vmem:[#allocation2 + $0xda] sm:$0xff]
        %v722 = vld [vmem:[#allocation2 + $0xe2] sm:$0xff]
        %v723 = vld [vmem:[#allocation2 + $0xf2] sm:$0xff]
        %v724 = vld [vmem:[#allocation2 + $0xfa] sm:$0xff]
        %v725 = vld [vmem:[#allocation2 + $0x10a] sm:$0xff]
        %v726 = vld [vmem:[#allocation2 + $0x112] sm:$0xff]
        %v727 = vld [vmem:[#allocation2 + $0x122] sm:$0xff]
        %v728 = vld [vmem:[#allocation2 + $0x12a] sm:$0xff]
        %v729 = vld [vmem:[#allocation2 + $0x13a] sm:$0xff]
        %v730 = vld [vmem:[#allocation2 + $0x142] sm:$0xff]
        %v731 = vld [vmem:[#allocation2 + $0x152] sm:$0xff]
        %v732 = vld [vmem:[#allocation2 + $0x15a] sm:$0xff]
        %v733 = vld [vmem:[#allocation2 + $0x16a] sm:$0xff]
        %v734 = vld [vmem:[#allocation2 + $0x172] sm:$0xff]
        %v735 = vpack.c.bf16 %v703, %v703
        %v736 = vpack.c.bf16 %v704, %v704
        %v737 = vpack.c.bf16 %v705, %v705
        %v738 = vpack.c.bf16 %v706, %v706
        %v739 = vpack.c.bf16 %v707, %v707
        %v740 = vpack.c.bf16 %v708, %v708
        %v741 = vpack.c.bf16 %v709, %v709
        %v742 = vpack.c.bf16 %v710, %v710
        %v743 = vpack.c.bf16 %v711, %v711
        %v744 = vpack.c.bf16 %v712, %v712
        %v745 = vpack.c.bf16 %v713, %v713
        %v746 = vpack.c.bf16 %v714, %v714
        %v747 = vpack.c.bf16 %v715, %v715
        %v748 = vpack.c.bf16 %v716, %v716
        %v749 = vpack.c.bf16 %v717, %v717
        %v750 = vpack.c.bf16 %v718, %v718
        %v751 = vpack.c.bf16 %v719, %v719
        %v752 = vpack.c.bf16 %v720, %v720
        %v753 = vpack.c.bf16 %v721, %v721
        %v754 = vpack.c.bf16 %v722, %v722
        %v755 = vpack.c.bf16 %v723, %v723
        %v756 = vpack.c.bf16 %v724, %v724
        %v757 = vpack.c.bf16 %v725, %v725
        %v758 = vpack.c.bf16 %v726, %v726
        %v759 = vpack.c.bf16 %v727, %v727
        %v760 = vpack.c.bf16 %v728, %v728
        %v761 = vpack.c.bf16 %v729, %v729
        %v762 = vpack.c.bf16 %v730, %v730
        %v763 = vpack.c.bf16 %v731, %v731
        %v764 = vpack.c.bf16 %v732, %v732
        %v765 = vpack.c.bf16 %v733, %v733
        %v766 = vpack.c.bf16 %v734, %v734
        %799 = vrot.lane.b32.xlu0 %v735, 8
        %v800 = vpop.permute.xlu0 %799
        %801 = vrot.lane.b32.xlu0 %v736, 8
        %v802 = vpop.permute.xlu0 %801
        %803 = vrot.lane.b32.xlu0 %v737, 8
        %v804 = vpop.permute.xlu0 %803
        %805 = vrot.lane.b32.xlu0 %v738, 8
        %v806 = vpop.permute.xlu0 %805
        %807 = vrot.lane.b32.xlu0 %v739, 8
        %v808 = vpop.permute.xlu0 %807
        %809 = vrot.lane.b32.xlu0 %v740, 8
        %v810 = vpop.permute.xlu0 %809
        %811 = vrot.lane.b32.xlu0 %v741, 8
        %v812 = vpop.permute.xlu0 %811
        %813 = vrot.lane.b32.xlu0 %v742, 8
        %v814 = vpop.permute.xlu0 %813
        %815 = vrot.lane.b32.xlu0 %v743, 8
        %v816 = vpop.permute.xlu0 %815
        %817 = vrot.lane.b32.xlu0 %v744, 8
        %v818 = vpop.permute.xlu0 %817
        %819 = vrot.lane.b32.xlu0 %v745, 8
        %v820 = vpop.permute.xlu0 %819
        %821 = vrot.lane.b32.xlu0 %v746, 8
        %v822 = vpop.permute.xlu0 %821
        %823 = vrot.lane.b32.xlu0 %v747, 8
        %v824 = vpop.permute.xlu0 %823
        %825 = vrot.lane.b32.xlu0 %v748, 8
        %v826 = vpop.permute.xlu0 %825
        %827 = vrot.lane.b32.xlu0 %v749, 8
        %v828 = vpop.permute.xlu0 %827
        %829 = vrot.lane.b32.xlu0 %v750, 8
        %v830 = vpop.permute.xlu0 %829
        %831 = vrot.lane.b32.xlu0 %v751, 8
        %v832 = vpop.permute.xlu0 %831
        %833 = vrot.lane.b32.xlu0 %v752, 8
        %v834 = vpop.permute.xlu0 %833
        %835 = vrot.lane.b32.xlu0 %v753, 8
        %v836 = vpop.permute.xlu0 %835
        %837 = vrot.lane.b32.xlu0 %v754, 8
        %v838 = vpop.permute.xlu0 %837
        %839 = vrot.lane.b32.xlu0 %v755, 8
        %v840 = vpop.permute.xlu0 %839
        %841 = vrot.lane.b32.xlu0 %v756, 8
        %v842 = vpop.permute.xlu0 %841
        %843 = vrot.lane.b32.xlu0 %v757, 8
        %v844 = vpop.permute.xlu0 %843
        %845 = vrot.lane.b32.xlu0 %v758, 8
        %v846 = vpop.permute.xlu0 %845
        %847 = vrot.lane.b32.xlu0 %v759, 8
        %v848 = vpop.permute.xlu0 %847
        %849 = vrot.lane.b32.xlu0 %v760, 8
        %v850 = vpop.permute.xlu0 %849
        %851 = vrot.lane.b32.xlu0 %v761, 8
        %v852 = vpop.permute.xlu0 %851
        %853 = vrot.lane.b32.xlu0 %v762, 8
        %v854 = vpop.permute.xlu0 %853
        %855 = vrot.lane.b32.xlu0 %v763, 8
        %v856 = vpop.permute.xlu0 %855
        %857 = vrot.lane.b32.xlu0 %v764, 8
        %v858 = vpop.permute.xlu0 %857
        %859 = vrot.lane.b32.xlu0 %v765, 8
        %v860 = vpop.permute.xlu0 %859
        %861 = vrot.lane.b32.xlu0 %v766, 8
        %v862 = vpop.permute.xlu0 %861
        %vm895 = vcmask 93248
        %896 = vst.msk [vmem:[#allocation4] sm:$0xf] %vm895, %v800
        %897 = vst.msk [vmem:[#allocation4 + $0x4] sm:$0xf] %vm895, %v802
        %898 = vst.msk [vmem:[#allocation4 + $0x8] sm:$0xf] %vm895, %v804
        %899 = vst.msk [vmem:[#allocation4 + $0xc] sm:$0xf] %vm895, %v806
        %900 = vst.msk [vmem:[#allocation4 + $0x10] sm:$0xf] %vm895, %v808
        %901 = vst.msk [vmem:[#allocation4 + $0x14] sm:$0xf] %vm895, %v810
        %902 = vst.msk [vmem:[#allocation4 + $0x18] sm:$0xf] %vm895, %v812
        %903 = vst.msk [vmem:[#allocation4 + $0x1c] sm:$0xf] %vm895, %v814
        %904 = vst.msk [vmem:[#allocation4 + $0x20] sm:$0xf] %vm895, %v816
        %905 = vst.msk [vmem:[#allocation4 + $0x24] sm:$0xf] %vm895, %v818
        %906 = vst.msk [vmem:[#allocation4 + $0x28] sm:$0xf] %vm895, %v820
        %907 = vst.msk [vmem:[#allocation4 + $0x2c] sm:$0xf] %vm895, %v822
        %908 = vst.msk [vmem:[#allocation4 + $0x30] sm:$0xf] %vm895, %v824
        %909 = vst.msk [vmem:[#allocation4 + $0x34] sm:$0xf] %vm895, %v826
        %910 = vst.msk [vmem:[#allocation4 + $0x38] sm:$0xf] %vm895, %v828
        %911 = vst.msk [vmem:[#allocation4 + $0x3c] sm:$0xf] %vm895, %v830
        %912 = vst.msk [vmem:[#allocation4 + $0x40] sm:$0xf] %vm895, %v832
        %913 = vst.msk [vmem:[#allocation4 + $0x44] sm:$0xf] %vm895, %v834
        %914 = vst.msk [vmem:[#allocation4 + $0x48] sm:$0xf] %vm895, %v836
        %915 = vst.msk [vmem:[#allocation4 + $0x4c] sm:$0xf] %vm895, %v838
        %916 = vst.msk [vmem:[#allocation4 + $0x50] sm:$0xf] %vm895, %v840
        %917 = vst.msk [vmem:[#allocation4 + $0x54] sm:$0xf] %vm895, %v842
        %918 = vst.msk [vmem:[#allocation4 + $0x58] sm:$0xf] %vm895, %v844
        %919 = vst.msk [vmem:[#allocation4 + $0x5c] sm:$0xf] %vm895, %v846
        %920 = vst.msk [vmem:[#allocation4 + $0x60] sm:$0xf] %vm895, %v848
        %921 = vst.msk [vmem:[#allocation4 + $0x64] sm:$0xf] %vm895, %v850
        %922 = vst.msk [vmem:[#allocation4 + $0x68] sm:$0xf] %vm895, %v852
        %923 = vst.msk [vmem:[#allocation4 + $0x6c] sm:$0xf] %vm895, %v854
        %924 = vst.msk [vmem:[#allocation4 + $0x70] sm:$0xf] %vm895, %v856
        %925 = vst.msk [vmem:[#allocation4 + $0x74] sm:$0xf] %vm895, %v858
        %926 = vst.msk [vmem:[#allocation4 + $0x78] sm:$0xf] %vm895, %v860
        %927 = vst.msk [vmem:[#allocation4 + $0x7c] sm:$0xf] %vm895, %v862
        %v928 = vld [vmem:[%s348] sm:$0xff]
        %v929 = vld [vmem:[%s348 + $0x8] sm:$0xff]
        %v930 = vld [vmem:[%s348 + $0x18] sm:$0xff]
        %v931 = vld [vmem:[%s348 + $0x20] sm:$0xff]
        %v932 = vld [vmem:[%s348 + $0x30] sm:$0xff]
        %v933 = vld [vmem:[%s348 + $0x38] sm:$0xff]
        %v934 = vld [vmem:[%s348 + $0x48] sm:$0xff]
        %v935 = vld [vmem:[%s348 + $0x50] sm:$0xff]
        %v936 = vld [vmem:[%s348 + $0x60] sm:$0xff]
        %v937 = vld [vmem:[%s348 + $0x68] sm:$0xff]
        %v938 = vld [vmem:[%s348 + $0x78] sm:$0xff]
        %v939 = vld [vmem:[%s348 + $0x80] sm:$0xff]
        %v940 = vld [vmem:[%s348 + $0x90] sm:$0xff]
        %v941 = vld [vmem:[%s348 + $0x98] sm:$0xff]
        %v942 = vld [vmem:[%s348 + $0xa8] sm:$0xff]
        %v943 = vld [vmem:[%s348 + $0xb0] sm:$0xff]
        %v944 = vld [vmem:[%s348 + $0xc0] sm:$0xff]
        %v945 = vld [vmem:[%s348 + $0xc8] sm:$0xff]
        %v946 = vld [vmem:[%s348 + $0xd8] sm:$0xff]
        %v947 = vld [vmem:[%s348 + $0xe0] sm:$0xff]
        %v948 = vld [vmem:[%s348 + $0xf0] sm:$0xff]
        %v949 = vld [vmem:[%s348 + $0xf8] sm:$0xff]
        %v950 = vld [vmem:[%s348 + $0x108] sm:$0xff]
        %v951 = vld [vmem:[%s348 + $0x110] sm:$0xff]
        %v952 = vld [vmem:[%s348 + $0x120] sm:$0xff]
        %v953 = vld [vmem:[%s348 + $0x128] sm:$0xff]
        %v954 = vld [vmem:[%s348 + $0x138] sm:$0xff]
        %v955 = vld [vmem:[%s348 + $0x140] sm:$0xff]
        %v956 = vld [vmem:[%s348 + $0x150] sm:$0xff]
        %v957 = vld [vmem:[%s348 + $0x158] sm:$0xff]
        %v958 = vld [vmem:[%s348 + $0x168] sm:$0xff]
        %v959 = vld [vmem:[%s348 + $0x170] sm:$0xff]
        %v960 = vpack.c.bf16 %v928, %v928
        %v961 = vpack.c.bf16 %v929, %v929
        %v962 = vpack.c.bf16 %v930, %v930
        %v963 = vpack.c.bf16 %v931, %v931
        %v964 = vpack.c.bf16 %v932, %v932
        %v965 = vpack.c.bf16 %v933, %v933
        %v966 = vpack.c.bf16 %v934, %v934
        %v967 = vpack.c.bf16 %v935, %v935
        %v968 = vpack.c.bf16 %v936, %v936
        %v969 = vpack.c.bf16 %v937, %v937
        %v970 = vpack.c.bf16 %v938, %v938
        %v971 = vpack.c.bf16 %v939, %v939
        %v972 = vpack.c.bf16 %v940, %v940
        %v973 = vpack.c.bf16 %v941, %v941
        %v974 = vpack.c.bf16 %v942, %v942
        %v975 = vpack.c.bf16 %v943, %v943
        %v976 = vpack.c.bf16 %v944, %v944
        %v977 = vpack.c.bf16 %v945, %v945
        %v978 = vpack.c.bf16 %v946, %v946
        %v979 = vpack.c.bf16 %v947, %v947
        %v980 = vpack.c.bf16 %v948, %v948
        %v981 = vpack.c.bf16 %v949, %v949
        %v982 = vpack.c.bf16 %v950, %v950
        %v983 = vpack.c.bf16 %v951, %v951
        %v984 = vpack.c.bf16 %v952, %v952
        %v985 = vpack.c.bf16 %v953, %v953
        %v986 = vpack.c.bf16 %v954, %v954
        %v987 = vpack.c.bf16 %v955, %v955
        %v988 = vpack.c.bf16 %v956, %v956
        %v989 = vpack.c.bf16 %v957, %v957
        %v990 = vpack.c.bf16 %v958, %v958
        %v991 = vpack.c.bf16 %v959, %v959
        %1024 = vrot.lane.b32.xlu0 %v960, 12
        %v1025 = vpop.permute.xlu0 %1024
        %1026 = vrot.lane.b32.xlu0 %v961, 12
        %v1027 = vpop.permute.xlu0 %1026
        %1028 = vrot.lane.b32.xlu0 %v962, 12
        %v1029 = vpop.permute.xlu0 %1028
        %1030 = vrot.lane.b32.xlu0 %v963, 12
        %v1031 = vpop.permute.xlu0 %1030
        %1032 = vrot.lane.b32.xlu0 %v964, 12
        %v1033 = vpop.permute.xlu0 %1032
        %1034 = vrot.lane.b32.xlu0 %v965, 12
        %v1035 = vpop.permute.xlu0 %1034
        %1036 = vrot.lane.b32.xlu0 %v966, 12
        %v1037 = vpop.permute.xlu0 %1036
        %1038 = vrot.lane.b32.xlu0 %v967, 12
        %v1039 = vpop.permute.xlu0 %1038
        %1040 = vrot.lane.b32.xlu0 %v968, 12
        %v1041 = vpop.permute.xlu0 %1040
        %1042 = vrot.lane.b32.xlu0 %v969, 12
        %v1043 = vpop.permute.xlu0 %1042
        %1044 = vrot.lane.b32.xlu0 %v970, 12
        %v1045 = vpop.permute.xlu0 %1044
        %1046 = vrot.lane.b32.xlu0 %v971, 12
        %v1047 = vpop.permute.xlu0 %1046
        %1048 = vrot.lane.b32.xlu0 %v972, 12
        %v1049 = vpop.permute.xlu0 %1048
        %1050 = vrot.lane.b32.xlu0 %v973, 12
        %v1051 = vpop.permute.xlu0 %1050
        %1052 = vrot.lane.b32.xlu0 %v974, 12
        %v1053 = vpop.permute.xlu0 %1052
        %1054 = vrot.lane.b32.xlu0 %v975, 12
        %v1055 = vpop.permute.xlu0 %1054
        %1056 = vrot.lane.b32.xlu0 %v976, 12
        %v1057 = vpop.permute.xlu0 %1056
        %1058 = vrot.lane.b32.xlu0 %v977, 12
        %v1059 = vpop.permute.xlu0 %1058
        %1060 = vrot.lane.b32.xlu0 %v978, 12
        %v1061 = vpop.permute.xlu0 %1060
        %1062 = vrot.lane.b32.xlu0 %v979, 12
        %v1063 = vpop.permute.xlu0 %1062
        %1064 = vrot.lane.b32.xlu0 %v980, 12
        %v1065 = vpop.permute.xlu0 %1064
        %1066 = vrot.lane.b32.xlu0 %v981, 12
        %v1067 = vpop.permute.xlu0 %1066
        %1068 = vrot.lane.b32.xlu0 %v982, 12
        %v1069 = vpop.permute.xlu0 %1068
        %1070 = vrot.lane.b32.xlu0 %v983, 12
        %v1071 = vpop.permute.xlu0 %1070
        %1072 = vrot.lane.b32.xlu0 %v984, 12
        %v1073 = vpop.permute.xlu0 %1072
        %1074 = vrot.lane.b32.xlu0 %v985, 12
        %v1075 = vpop.permute.xlu0 %1074
        %1076 = vrot.lane.b32.xlu0 %v986, 12
        %v1077 = vpop.permute.xlu0 %1076
        %1078 = vrot.lane.b32.xlu0 %v987, 12
        %v1079 = vpop.permute.xlu0 %1078
        %1080 = vrot.lane.b32.xlu0 %v988, 12
        %v1081 = vpop.permute.xlu0 %1080
        %1082 = vrot.lane.b32.xlu0 %v989, 12
        %v1083 = vpop.permute.xlu0 %1082
        %1084 = vrot.lane.b32.xlu0 %v990, 12
        %v1085 = vpop.permute.xlu0 %1084
        %1086 = vrot.lane.b32.xlu0 %v991, 12
        %v1087 = vpop.permute.xlu0 %1086
        %vm1120 = vcmask 126048
        %1121 = vst.msk [vmem:[#allocation4] sm:$0xf] %vm1120, %v1025
        %1122 = vst.msk [vmem:[#allocation4 + $0x4] sm:$0xf] %vm1120, %v1027
        %1123 = vst.msk [vmem:[#allocation4 + $0x8] sm:$0xf] %vm1120, %v1029
        %1124 = vst.msk [vmem:[#allocation4 + $0xc] sm:$0xf] %vm1120, %v1031
        %1125 = vst.msk [vmem:[#allocation4 + $0x10] sm:$0xf] %vm1120, %v1033
        %1126 = vst.msk [vmem:[#allocation4 + $0x14] sm:$0xf] %vm1120, %v1035
        %1127 = vst.msk [vmem:[#allocation4 + $0x18] sm:$0xf] %vm1120, %v1037
        %1128 = vst.msk [vmem:[#allocation4 + $0x1c] sm:$0xf] %vm1120, %v1039
        %1129 = vst.msk [vmem:[#allocation4 + $0x20] sm:$0xf] %vm1120, %v1041
        %1130 = vst.msk [vmem:[#allocation4 + $0x24] sm:$0xf] %vm1120, %v1043
        %1131 = vst.msk [vmem:[#allocation4 + $0x28] sm:$0xf] %vm1120, %v1045
        %1132 = vst.msk [vmem:[#allocation4 + $0x2c] sm:$0xf] %vm1120, %v1047
        %1133 = vst.msk [vmem:[#allocation4 + $0x30] sm:$0xf] %vm1120, %v1049
        %1134 = vst.msk [vmem:[#allocation4 + $0x34] sm:$0xf] %vm1120, %v1051
        %1135 = vst.msk [vmem:[#allocation4 + $0x38] sm:$0xf] %vm1120, %v1053
        %1136 = vst.msk [vmem:[#allocation4 + $0x3c] sm:$0xf] %vm1120, %v1055
        %1137 = vst.msk [vmem:[#allocation4 + $0x40] sm:$0xf] %vm1120, %v1057
        %1138 = vst.msk [vmem:[#allocation4 + $0x44] sm:$0xf] %vm1120, %v1059
        %1139 = vst.msk [vmem:[#allocation4 + $0x48] sm:$0xf] %vm1120, %v1061
        %1140 = vst.msk [vmem:[#allocation4 + $0x4c] sm:$0xf] %vm1120, %v1063
        %1141 = vst.msk [vmem:[#allocation4 + $0x50] sm:$0xf] %vm1120, %v1065
        %1142 = vst.msk [vmem:[#allocation4 + $0x54] sm:$0xf] %vm1120, %v1067
        %1143 = vst.msk [vmem:[#allocation4 + $0x58] sm:$0xf] %vm1120, %v1069
        %1144 = vst.msk [vmem:[#allocation4 + $0x5c] sm:$0xf] %vm1120, %v1071
        %1145 = vst.msk [vmem:[#allocation4 + $0x60] sm:$0xf] %vm1120, %v1073
        %1146 = vst.msk [vmem:[#allocation4 + $0x64] sm:$0xf] %vm1120, %v1075
        %1147 = vst.msk [vmem:[#allocation4 + $0x68] sm:$0xf] %vm1120, %v1077
        %1148 = vst.msk [vmem:[#allocation4 + $0x6c] sm:$0xf] %vm1120, %v1079
        %1149 = vst.msk [vmem:[#allocation4 + $0x70] sm:$0xf] %vm1120, %v1081
        %1150 = vst.msk [vmem:[#allocation4 + $0x74] sm:$0xf] %vm1120, %v1083
        %1151 = vst.msk [vmem:[#allocation4 + $0x78] sm:$0xf] %vm1120, %v1085
        %1152 = vst.msk [vmem:[#allocation4 + $0x7c] sm:$0xf] %vm1120, %v1087
        %v1153 = vld [vmem:[%s348 + $0x1] sm:$0xff]
        %v1154 = vld [vmem:[%s348 + $0x9] sm:$0xff]
        %v1155 = vld [vmem:[%s348 + $0x19] sm:$0xff]
        %v1156 = vld [vmem:[%s348 + $0x21] sm:$0xff]
        %v1157 = vld [vmem:[%s348 + $0x31] sm:$0xff]
        %v1158 = vld [vmem:[%s348 + $0x39] sm:$0xff]
        %v1159 = vld [vmem:[%s348 + $0x49] sm:$0xff]
        %v1160 = vld [vmem:[%s348 + $0x51] sm:$0xff]
        %v1161 = vld [vmem:[%s348 + $0x61] sm:$0xff]
        %v1162 = vld [vmem:[%s348 + $0x69] sm:$0xff]
        %v1163 = vld [vmem:[%s348 + $0x79] sm:$0xff]
        %v1164 = vld [vmem:[%s348 + $0x81] sm:$0xff]
        %v1165 = vld [vmem:[%s348 + $0x91] sm:$0xff]
        %v1166 = vld [vmem:[%s348 + $0x99] sm:$0xff]
        %v1167 = vld [vmem:[%s348 + $0xa9] sm:$0xff]
        %v1168 = vld [vmem:[%s348 + $0xb1] sm:$0xff]
        %v1169 = vld [vmem:[%s348 + $0xc1] sm:$0xff]
        %v1170 = vld [vmem:[%s348 + $0xc9] sm:$0xff]
        %v1171 = vld [vmem:[%s348 + $0xd9] sm:$0xff]
        %v1172 = vld [vmem:[%s348 + $0xe1] sm:$0xff]
        %v1173 = vld [vmem:[%s348 + $0xf1] sm:$0xff]
        %v1174 = vld [vmem:[%s348 + $0xf9] sm:$0xff]
        %v1175 = vld [vmem:[%s348 + $0x109] sm:$0xff]
        %v1176 = vld [vmem:[%s348 + $0x111] sm:$0xff]
        %v1177 = vld [vmem:[%s348 + $0x121] sm:$0xff]
        %v1178 = vld [vmem:[%s348 + $0x129] sm:$0xff]
        %v1179 = vld [vmem:[%s348 + $0x139] sm:$0xff]
        %v1180 = vld [vmem:[%s348 + $0x141] sm:$0xff]
        %v1181 = vld [vmem:[%s348 + $0x151] sm:$0xff]
        %v1182 = vld [vmem:[%s348 + $0x159] sm:$0xff]
        %v1183 = vld [vmem:[%s348 + $0x169] sm:$0xff]
        %v1184 = vld [vmem:[%s348 + $0x171] sm:$0xff]
        %v1185 = vpack.c.bf16 %v1153, %v1153
        %v1186 = vpack.c.bf16 %v1154, %v1154
        %v1187 = vpack.c.bf16 %v1155, %v1155
        %v1188 = vpack.c.bf16 %v1156, %v1156
        %v1189 = vpack.c.bf16 %v1157, %v1157
        %v1190 = vpack.c.bf16 %v1158, %v1158
        %v1191 = vpack.c.bf16 %v1159, %v1159
        %v1192 = vpack.c.bf16 %v1160, %v1160
        %v1193 = vpack.c.bf16 %v1161, %v1161
        %v1194 = vpack.c.bf16 %v1162, %v1162
        %v1195 = vpack.c.bf16 %v1163, %v1163
        %v1196 = vpack.c.bf16 %v1164, %v1164
        %v1197 = vpack.c.bf16 %v1165, %v1165
        %v1198 = vpack.c.bf16 %v1166, %v1166
        %v1199 = vpack.c.bf16 %v1167, %v1167
        %v1200 = vpack.c.bf16 %v1168, %v1168
        %v1201 = vpack.c.bf16 %v1169, %v1169
        %v1202 = vpack.c.bf16 %v1170, %v1170
        %v1203 = vpack.c.bf16 %v1171, %v1171
        %v1204 = vpack.c.bf16 %v1172, %v1172
        %v1205 = vpack.c.bf16 %v1173, %v1173
        %v1206 = vpack.c.bf16 %v1174, %v1174
        %v1207 = vpack.c.bf16 %v1175, %v1175
        %v1208 = vpack.c.bf16 %v1176, %v1176
        %v1209 = vpack.c.bf16 %v1177, %v1177
        %v1210 = vpack.c.bf16 %v1178, %v1178
        %v1211 = vpack.c.bf16 %v1179, %v1179
        %v1212 = vpack.c.bf16 %v1180, %v1180
        %v1213 = vpack.c.bf16 %v1181, %v1181
        %v1214 = vpack.c.bf16 %v1182, %v1182
        %v1215 = vpack.c.bf16 %v1183, %v1183
        %v1216 = vpack.c.bf16 %v1184, %v1184
        %1249 = vrot.lane.b32.xlu0 %v1185, 16
        %v1250 = vpop.permute.xlu0 %1249
        %1251 = vrot.lane.b32.xlu0 %v1186, 16
        %v1252 = vpop.permute.xlu0 %1251
        %1253 = vrot.lane.b32.xlu0 %v1187, 16
        %v1254 = vpop.permute.xlu0 %1253
        %1255 = vrot.lane.b32.xlu0 %v1188, 16
        %v1256 = vpop.permute.xlu0 %1255
        %1257 = vrot.lane.b32.xlu0 %v1189, 16
        %v1258 = vpop.permute.xlu0 %1257
        %1259 = vrot.lane.b32.xlu0 %v1190, 16
        %v1260 = vpop.permute.xlu0 %1259
        %1261 = vrot.lane.b32.xlu0 %v1191, 16
        %v1262 = vpop.permute.xlu0 %1261
        %1263 = vrot.lane.b32.xlu0 %v1192, 16
        %v1264 = vpop.permute.xlu0 %1263
        %1265 = vrot.lane.b32.xlu0 %v1193, 16
        %v1266 = vpop.permute.xlu0 %1265
        %1267 = vrot.lane.b32.xlu0 %v1194, 16
        %v1268 = vpop.permute.xlu0 %1267
        %1269 = vrot.lane.b32.xlu0 %v1195, 16
        %v1270 = vpop.permute.xlu0 %1269
        %1271 = vrot.lane.b32.xlu0 %v1196, 16
        %v1272 = vpop.permute.xlu0 %1271
        %1273 = vrot.lane.b32.xlu0 %v1197, 16
        %v1274 = vpop.permute.xlu0 %1273
        %1275 = vrot.lane.b32.xlu0 %v1198, 16
        %v1276 = vpop.permute.xlu0 %1275
        %1277 = vrot.lane.b32.xlu0 %v1199, 16
        %v1278 = vpop.permute.xlu0 %1277
        %1279 = vrot.lane.b32.xlu0 %v1200, 16
        %v1280 = vpop.permute.xlu0 %1279
        %1281 = vrot.lane.b32.xlu0 %v1201, 16
        %v1282 = vpop.permute.xlu0 %1281
        %1283 = vrot.lane.b32.xlu0 %v1202, 16
        %v1284 = vpop.permute.xlu0 %1283
        %1285 = vrot.lane.b32.xlu0 %v1203, 16
        %v1286 = vpop.permute.xlu0 %1285
        %1287 = vrot.lane.b32.xlu0 %v1204, 16
        %v1288 = vpop.permute.xlu0 %1287
        %1289 = vrot.lane.b32.xlu0 %v1205, 16
        %v1290 = vpop.permute.xlu0 %1289
        %1291 = vrot.lane.b32.xlu0 %v1206, 16
        %v1292 = vpop.permute.xlu0 %1291
        %1293 = vrot.lane.b32.xlu0 %v1207, 16
        %v1294 = vpop.permute.xlu0 %1293
        %1295 = vrot.lane.b32.xlu0 %v1208, 16
        %v1296 = vpop.permute.xlu0 %1295
        %1297 = vrot.lane.b32.xlu0 %v1209, 16
        %v1298 = vpop.permute.xlu0 %1297
        %1299 = vrot.lane.b32.xlu0 %v1210, 16
        %v1300 = vpop.permute.xlu0 %1299
        %1301 = vrot.lane.b32.xlu0 %v1211, 16
        %v1302 = vpop.permute.xlu0 %1301
        %1303 = vrot.lane.b32.xlu0 %v1212, 16
        %v1304 = vpop.permute.xlu0 %1303
        %1305 = vrot.lane.b32.xlu0 %v1213, 16
        %v1306 = vpop.permute.xlu0 %1305
        %1307 = vrot.lane.b32.xlu0 %v1214, 16
        %v1308 = vpop.permute.xlu0 %1307
        %1309 = vrot.lane.b32.xlu0 %v1215, 16
        %v1310 = vpop.permute.xlu0 %1309
        %1311 = vrot.lane.b32.xlu0 %v1216, 16
        %v1312 = vpop.permute.xlu0 %1311
        %vm1345 = vcmask 158848
        %1346 = vst.msk [vmem:[#allocation4] sm:$0xf] %vm1345, %v1250
        %1347 = vst.msk [vmem:[#allocation4 + $0x4] sm:$0xf] %vm1345, %v1252
        %1348 = vst.msk [vmem:[#allocation4 + $0x8] sm:$0xf] %vm1345, %v1254
        %1349 = vst.msk [vmem:[#allocation4 + $0xc] sm:$0xf] %vm1345, %v1256
        %1350 = vst.msk [vmem:[#allocation4 + $0x10] sm:$0xf] %vm1345, %v1258
        %1351 = vst.msk [vmem:[#allocation4 + $0x14] sm:$0xf] %vm1345, %v1260
        %1352 = vst.msk [vmem:[#allocation4 + $0x18] sm:$0xf] %vm1345, %v1262
        %1353 = vst.msk [vmem:[#allocation4 + $0x1c] sm:$0xf] %vm1345, %v1264
        %1354 = vst.msk [vmem:[#allocation4 + $0x20] sm:$0xf] %vm1345, %v1266
        %1355 = vst.msk [vmem:[#allocation4 + $0x24] sm:$0xf] %vm1345, %v1268
        %1356 = vst.msk [vmem:[#allocation4 + $0x28] sm:$0xf] %vm1345, %v1270
        %1357 = vst.msk [vmem:[#allocation4 + $0x2c] sm:$0xf] %vm1345, %v1272
        %1358 = vst.msk [vmem:[#allocation4 + $0x30] sm:$0xf] %vm1345, %v1274
        %1359 = vst.msk [vmem:[#allocation4 + $0x34] sm:$0xf] %vm1345, %v1276
        %1360 = vst.msk [vmem:[#allocation4 + $0x38] sm:$0xf] %vm1345, %v1278
        %1361 = vst.msk [vmem:[#allocation4 + $0x3c] sm:$0xf] %vm1345, %v1280
        %1362 = vst.msk [vmem:[#allocation4 + $0x40] sm:$0xf] %vm1345, %v1282
        %1363 = vst.msk [vmem:[#allocation4 + $0x44] sm:$0xf] %vm1345, %v1284
        %1364 = vst.msk [vmem:[#allocation4 + $0x48] sm:$0xf] %vm1345, %v1286
        %1365 = vst.msk [vmem:[#allocation4 + $0x4c] sm:$0xf] %vm1345, %v1288
        %1366 = vst.msk [vmem:[#allocation4 + $0x50] sm:$0xf] %vm1345, %v1290
        %1367 = vst.msk [vmem:[#allocation4 + $0x54] sm:$0xf] %vm1345, %v1292
        %1368 = vst.msk [vmem:[#allocation4 + $0x58] sm:$0xf] %vm1345, %v1294
        %1369 = vst.msk [vmem:[#allocation4 + $0x5c] sm:$0xf] %vm1345, %v1296
        %1370 = vst.msk [vmem:[#allocation4 + $0x60] sm:$0xf] %vm1345, %v1298
        %1371 = vst.msk [vmem:[#allocation4 + $0x64] sm:$0xf] %vm1345, %v1300
        %1372 = vst.msk [vmem:[#allocation4 + $0x68] sm:$0xf] %vm1345, %v1302
        %1373 = vst.msk [vmem:[#allocation4 + $0x6c] sm:$0xf] %vm1345, %v1304
        %1374 = vst.msk [vmem:[#allocation4 + $0x70] sm:$0xf] %vm1345, %v1306
        %1375 = vst.msk [vmem:[#allocation4 + $0x74] sm:$0xf] %vm1345, %v1308
        %1376 = vst.msk [vmem:[#allocation4 + $0x78] sm:$0xf] %vm1345, %v1310
        %1377 = vst.msk [vmem:[#allocation4 + $0x7c] sm:$0xf] %vm1345, %v1312
        %v1378 = vld [vmem:[%s348 + $0x2] sm:$0xff]
        %v1379 = vld [vmem:[%s348 + $0xa] sm:$0xff]
        %v1380 = vld [vmem:[%s348 + $0x1a] sm:$0xff]
        %v1381 = vld [vmem:[%s348 + $0x22] sm:$0xff]
        %v1382 = vld [vmem:[%s348 + $0x32] sm:$0xff]
        %v1383 = vld [vmem:[%s348 + $0x3a] sm:$0xff]
        %v1384 = vld [vmem:[%s348 + $0x4a] sm:$0xff]
        %v1385 = vld [vmem:[%s348 + $0x52] sm:$0xff]
        %v1386 = vld [vmem:[%s348 + $0x62] sm:$0xff]
        %v1387 = vld [vmem:[%s348 + $0x6a] sm:$0xff]
        %v1388 = vld [vmem:[%s348 + $0x7a] sm:$0xff]
        %v1389 = vld [vmem:[%s348 + $0x82] sm:$0xff]
        %v1390 = vld [vmem:[%s348 + $0x92] sm:$0xff]
        %v1391 = vld [vmem:[%s348 + $0x9a] sm:$0xff]
        %v1392 = vld [vmem:[%s348 + $0xaa] sm:$0xff]
        %v1393 = vld [vmem:[%s348 + $0xb2] sm:$0xff]
        %v1394 = vld [vmem:[%s348 + $0xc2] sm:$0xff]
        %v1395 = vld [vmem:[%s348 + $0xca] sm:$0xff]
        %v1396 = vld [vmem:[%s348 + $0xda] sm:$0xff]
        %v1397 = vld [vmem:[%s348 + $0xe2] sm:$0xff]
        %v1398 = vld [vmem:[%s348 + $0xf2] sm:$0xff]
        %v1399 = vld [vmem:[%s348 + $0xfa] sm:$0xff]
        %v1400 = vld [vmem:[%s348 + $0x10a] sm:$0xff]
        %v1401 = vld [vmem:[%s348 + $0x112] sm:$0xff]
        %v1402 = vld [vmem:[%s348 + $0x122] sm:$0xff]
        %v1403 = vld [vmem:[%s348 + $0x12a] sm:$0xff]
        %v1404 = vld [vmem:[%s348 + $0x13a] sm:$0xff]
        %v1405 = vld [vmem:[%s348 + $0x142] sm:$0xff]
        %v1406 = vld [vmem:[%s348 + $0x152] sm:$0xff]
        %v1407 = vld [vmem:[%s348 + $0x15a] sm:$0xff]
        %v1408 = vld [vmem:[%s348 + $0x16a] sm:$0xff]
        %v1409 = vld [vmem:[%s348 + $0x172] sm:$0xff]
        %v1410 = vpack.c.bf16 %v1378, %v1378
        %v1411 = vpack.c.bf16 %v1379, %v1379
        %v1412 = vpack.c.bf16 %v1380, %v1380
        %v1413 = vpack.c.bf16 %v1381, %v1381
        %v1414 = vpack.c.bf16 %v1382, %v1382
        %v1415 = vpack.c.bf16 %v1383, %v1383
        %v1416 = vpack.c.bf16 %v1384, %v1384
        %v1417 = vpack.c.bf16 %v1385, %v1385
        %v1418 = vpack.c.bf16 %v1386, %v1386
        %v1419 = vpack.c.bf16 %v1387, %v1387
        %v1420 = vpack.c.bf16 %v1388, %v1388
        %v1421 = vpack.c.bf16 %v1389, %v1389
        %v1422 = vpack.c.bf16 %v1390, %v1390
        %v1423 = vpack.c.bf16 %v1391, %v1391
        %v1424 = vpack.c.bf16 %v1392, %v1392
        %v1425 = vpack.c.bf16 %v1393, %v1393
        %v1426 = vpack.c.bf16 %v1394, %v1394
        %v1427 = vpack.c.bf16 %v1395, %v1395
        %v1428 = vpack.c.bf16 %v1396, %v1396
        %v1429 = vpack.c.bf16 %v1397, %v1397
        %v1430 = vpack.c.bf16 %v1398, %v1398
        %v1431 = vpack.c.bf16 %v1399, %v1399
        %v1432 = vpack.c.bf16 %v1400, %v1400
        %v1433 = vpack.c.bf16 %v1401, %v1401
        %v1434 = vpack.c.bf16 %v1402, %v1402
        %v1435 = vpack.c.bf16 %v1403, %v1403
        %v1436 = vpack.c.bf16 %v1404, %v1404
        %v1437 = vpack.c.bf16 %v1405, %v1405
        %v1438 = vpack.c.bf16 %v1406, %v1406
        %v1439 = vpack.c.bf16 %v1407, %v1407
        %v1440 = vpack.c.bf16 %v1408, %v1408
        %v1441 = vpack.c.bf16 %v1409, %v1409
        %1474 = vrot.lane.b32.xlu0 %v1410, 20
        %v1475 = vpop.permute.xlu0 %1474
        %1476 = vrot.lane.b32.xlu0 %v1411, 20
        %v1477 = vpop.permute.xlu0 %1476
        %1478 = vrot.lane.b32.xlu0 %v1412, 20
        %v1479 = vpop.permute.xlu0 %1478
        %1480 = vrot.lane.b32.xlu0 %v1413, 20
        %v1481 = vpop.permute.xlu0 %1480
        %1482 = vrot.lane.b32.xlu0 %v1414, 20
        %v1483 = vpop.permute.xlu0 %1482
        %1484 = vrot.lane.b32.xlu0 %v1415, 20
        %v1485 = vpop.permute.xlu0 %1484
        %1486 = vrot.lane.b32.xlu0 %v1416, 20
        %v1487 = vpop.permute.xlu0 %1486
        %1488 = vrot.lane.b32.xlu0 %v1417, 20
        %v1489 = vpop.permute.xlu0 %1488
        %1490 = vrot.lane.b32.xlu0 %v1418, 20
        %v1491 = vpop.permute.xlu0 %1490
        %1492 = vrot.lane.b32.xlu0 %v1419, 20
        %v1493 = vpop.permute.xlu0 %1492
        %1494 = vrot.lane.b32.xlu0 %v1420, 20
        %v1495 = vpop.permute.xlu0 %1494
        %1496 = vrot.lane.b32.xlu0 %v1421, 20
        %v1497 = vpop.permute.xlu0 %1496
        %1498 = vrot.lane.b32.xlu0 %v1422, 20
        %v1499 = vpop.permute.xlu0 %1498
        %1500 = vrot.lane.b32.xlu0 %v1423, 20
        %v1501 = vpop.permute.xlu0 %1500
        %1502 = vrot.lane.b32.xlu0 %v1424, 20
        %v1503 = vpop.permute.xlu0 %1502
        %1504 = vrot.lane.b32.xlu0 %v1425, 20
        %v1505 = vpop.permute.xlu0 %1504
        %1506 = vrot.lane.b32.xlu0 %v1426, 20
        %v1507 = vpop.permute.xlu0 %1506
        %1508 = vrot.lane.b32.xlu0 %v1427, 20
        %v1509 = vpop.permute.xlu0 %1508
        %1510 = vrot.lane.b32.xlu0 %v1428, 20
        %v1511 = vpop.permute.xlu0 %1510
        %1512 = vrot.lane.b32.xlu0 %v1429, 20
        %v1513 = vpop.permute.xlu0 %1512
        %1514 = vrot.lane.b32.xlu0 %v1430, 20
        %v1515 = vpop.permute.xlu0 %1514
        %1516 = vrot.lane.b32.xlu0 %v1431, 20
        %v1517 = vpop.permute.xlu0 %1516
        %1518 = vrot.lane.b32.xlu0 %v1432, 20
        %v1519 = vpop.permute.xlu0 %1518
        %1520 = vrot.lane.b32.xlu0 %v1433, 20
        %v1521 = vpop.permute.xlu0 %1520
        %1522 = vrot.lane.b32.xlu0 %v1434, 20
        %v1523 = vpop.permute.xlu0 %1522
        %1524 = vrot.lane.b32.xlu0 %v1435, 20
        %v1525 = vpop.permute.xlu0 %1524
        %1526 = vrot.lane.b32.xlu0 %v1436, 20
        %v1527 = vpop.permute.xlu0 %1526
        %1528 = vrot.lane.b32.xlu0 %v1437, 20
        %v1529 = vpop.permute.xlu0 %1528
        %1530 = vrot.lane.b32.xlu0 %v1438, 20
        %v1531 = vpop.permute.xlu0 %1530
        %1532 = vrot.lane.b32.xlu0 %v1439, 20
        %v1533 = vpop.permute.xlu0 %1532
        %1534 = vrot.lane.b32.xlu0 %v1440, 20
        %v1535 = vpop.permute.xlu0 %1534
        %1536 = vrot.lane.b32.xlu0 %v1441, 20
        %v1537 = vpop.permute.xlu0 %1536
        %vm1570 = vcmask 191648
        %1571 = vst.msk [vmem:[#allocation4] sm:$0xf] %vm1570, %v1475
        %1572 = vst.msk [vmem:[#allocation4 + $0x4] sm:$0xf] %vm1570, %v1477
        %1573 = vst.msk [vmem:[#allocation4 + $0x8] sm:$0xf] %vm1570, %v1479
        %1574 = vst.msk [vmem:[#allocation4 + $0xc] sm:$0xf] %vm1570, %v1481
        %1575 = vst.msk [vmem:[#allocation4 + $0x10] sm:$0xf] %vm1570, %v1483
        %1576 = vst.msk [vmem:[#allocation4 + $0x14] sm:$0xf] %vm1570, %v1485
        %1577 = vst.msk [vmem:[#allocation4 + $0x18] sm:$0xf] %vm1570, %v1487
        %1578 = vst.msk [vmem:[#allocation4 + $0x1c] sm:$0xf] %vm1570, %v1489
        %1579 = vst.msk [vmem:[#allocation4 + $0x20] sm:$0xf] %vm1570, %v1491
        %1580 = vst.msk [vmem:[#allocation4 + $0x24] sm:$0xf] %vm1570, %v1493
        %1581 = vst.msk [vmem:[#allocation4 + $0x28] sm:$0xf] %vm1570, %v1495
        %1582 = vst.msk [vmem:[#allocation4 + $0x2c] sm:$0xf] %vm1570, %v1497
        %1583 = vst.msk [vmem:[#allocation4 + $0x30] sm:$0xf] %vm1570, %v1499
        %1584 = vst.msk [vmem:[#allocation4 + $0x34] sm:$0xf] %vm1570, %v1501
        %1585 = vst.msk [vmem:[#allocation4 + $0x38] sm:$0xf] %vm1570, %v1503
        %1586 = vst.msk [vmem:[#allocation4 + $0x3c] sm:$0xf] %vm1570, %v1505
        %1587 = vst.msk [vmem:[#allocation4 + $0x40] sm:$0xf] %vm1570, %v1507
        %1588 = vst.msk [vmem:[#allocation4 + $0x44] sm:$0xf] %vm1570, %v1509
        %1589 = vst.msk [vmem:[#allocation4 + $0x48] sm:$0xf] %vm1570, %v1511
        %1590 = vst.msk [vmem:[#allocation4 + $0x4c] sm:$0xf] %vm1570, %v1513
        %1591 = vst.msk [vmem:[#allocation4 + $0x50] sm:$0xf] %vm1570, %v1515
        %1592 = vst.msk [vmem:[#allocation4 + $0x54] sm:$0xf] %vm1570, %v1517
        %1593 = vst.msk [vmem:[#allocation4 + $0x58] sm:$0xf] %vm1570, %v1519
        %1594 = vst.msk [vmem:[#allocation4 + $0x5c] sm:$0xf] %vm1570, %v1521
        %1595 = vst.msk [vmem:[#allocation4 + $0x60] sm:$0xf] %vm1570, %v1523
        %1596 = vst.msk [vmem:[#allocation4 + $0x64] sm:$0xf] %vm1570, %v1525
        %1597 = vst.msk [vmem:[#allocation4 + $0x68] sm:$0xf] %vm1570, %v1527
        %1598 = vst.msk [vmem:[#allocation4 + $0x6c] sm:$0xf] %vm1570, %v1529
        %1599 = vst.msk [vmem:[#allocation4 + $0x70] sm:$0xf] %vm1570, %v1531
        %1600 = vst.msk [vmem:[#allocation4 + $0x74] sm:$0xf] %vm1570, %v1533
        %1601 = vst.msk [vmem:[#allocation4 + $0x78] sm:$0xf] %vm1570, %v1535
        %1602 = vst.msk [vmem:[#allocation4 + $0x7c] sm:$0xf] %vm1570, %v1537
        %s1603 = scalar_lea.vmem [#allocation2], 48
        %v1604 = vld [vmem:[%s1603] sm:$0xff]
        %v1605 = vld [vmem:[%s1603 + $0x8] sm:$0xff]
        %v1606 = vld [vmem:[%s1603 + $0x18] sm:$0xff]
        %v1607 = vld [vmem:[%s1603 + $0x20] sm:$0xff]
        %v1608 = vld [vmem:[%s1603 + $0x30] sm:$0xff]
        %v1609 = vld [vmem:[%s1603 + $0x38] sm:$0xff]
        %v1610 = vld [vmem:[%s1603 + $0x48] sm:$0xff]
        %v1611 = vld [vmem:[%s1603 + $0x50] sm:$0xff]
        %v1612 = vld [vmem:[%s1603 + $0x60] sm:$0xff]
        %v1613 = vld [vmem:[%s1603 + $0x68] sm:$0xff]
        %v1614 = vld [vmem:[%s1603 + $0x78] sm:$0xff]
        %v1615 = vld [vmem:[%s1603 + $0x80] sm:$0xff]
        %v1616 = vld [vmem:[%s1603 + $0x90] sm:$0xff]
        %v1617 = vld [vmem:[%s1603 + $0x98] sm:$0xff]
        %v1618 = vld [vmem:[%s1603 + $0xa8] sm:$0xff]
        %v1619 = vld [vmem:[%s1603 + $0xb0] sm:$0xff]
        %v1620 = vld [vmem:[%s1603 + $0xc0] sm:$0xff]
        %v1621 = vld [vmem:[%s1603 + $0xc8] sm:$0xff]
        %v1622 = vld [vmem:[%s1603 + $0xd8] sm:$0xff]
        %v1623 = vld [vmem:[%s1603 + $0xe0] sm:$0xff]
        %v1624 = vld [vmem:[%s1603 + $0xf0] sm:$0xff]
        %v1625 = vld [vmem:[%s1603 + $0xf8] sm:$0xff]
        %v1626 = vld [vmem:[%s1603 + $0x108] sm:$0xff]
        %v1627 = vld [vmem:[%s1603 + $0x110] sm:$0xff]
        %v1628 = vld [vmem:[%s1603 + $0x120] sm:$0xff]
        %v1629 = vld [vmem:[%s1603 + $0x128] sm:$0xff]
        %v1630 = vld [vmem:[%s1603 + $0x138] sm:$0xff]
        %v1631 = vld [vmem:[%s1603 + $0x140] sm:$0xff]
        %v1632 = vld [vmem:[%s1603 + $0x150] sm:$0xff]
        %v1633 = vld [vmem:[%s1603 + $0x158] sm:$0xff]
        %v1634 = vld [vmem:[%s1603 + $0x168] sm:$0xff]
        %v1635 = vld [vmem:[%s1603 + $0x170] sm:$0xff]
        %v1636 = vpack.c.bf16 %v1604, %v1604
        %v1637 = vpack.c.bf16 %v1605, %v1605
        %v1638 = vpack.c.bf16 %v1606, %v1606
        %v1639 = vpack.c.bf16 %v1607, %v1607
        %v1640 = vpack.c.bf16 %v1608, %v1608
        %v1641 = vpack.c.bf16 %v1609, %v1609
        %v1642 = vpack.c.bf16 %v1610, %v1610
        %v1643 = vpack.c.bf16 %v1611, %v1611
        %v1644 = vpack.c.bf16 %v1612, %v1612
        %v1645 = vpack.c.bf16 %v1613, %v1613
        %v1646 = vpack.c.bf16 %v1614, %v1614
        %v1647 = vpack.c.bf16 %v1615, %v1615
        %v1648 = vpack.c.bf16 %v1616, %v1616
        %v1649 = vpack.c.bf16 %v1617, %v1617
        %v1650 = vpack.c.bf16 %v1618, %v1618
        %v1651 = vpack.c.bf16 %v1619, %v1619
        %v1652 = vpack.c.bf16 %v1620, %v1620
        %v1653 = vpack.c.bf16 %v1621, %v1621
        %v1654 = vpack.c.bf16 %v1622, %v1622
        %v1655 = vpack.c.bf16 %v1623, %v1623
        %v1656 = vpack.c.bf16 %v1624, %v1624
        %v1657 = vpack.c.bf16 %v1625, %v1625
        %v1658 = vpack.c.bf16 %v1626, %v1626
        %v1659 = vpack.c.bf16 %v1627, %v1627
        %v1660 = vpack.c.bf16 %v1628, %v1628
        %v1661 = vpack.c.bf16 %v1629, %v1629
        %v1662 = vpack.c.bf16 %v1630, %v1630
        %v1663 = vpack.c.bf16 %v1631, %v1631
        %v1664 = vpack.c.bf16 %v1632, %v1632
        %v1665 = vpack.c.bf16 %v1633, %v1633
        %v1666 = vpack.c.bf16 %v1634, %v1634
        %v1667 = vpack.c.bf16 %v1635, %v1635
        %1700 = vrot.lane.b32.xlu0 %v1636, 24
        %v1701 = vpop.permute.xlu0 %1700
        %1702 = vrot.lane.b32.xlu0 %v1637, 24
        %v1703 = vpop.permute.xlu0 %1702
        %1704 = vrot.lane.b32.xlu0 %v1638, 24
        %v1705 = vpop.permute.xlu0 %1704
        %1706 = vrot.lane.b32.xlu0 %v1639, 24
        %v1707 = vpop.permute.xlu0 %1706
        %1708 = vrot.lane.b32.xlu0 %v1640, 24
        %v1709 = vpop.permute.xlu0 %1708
        %1710 = vrot.lane.b32.xlu0 %v1641, 24
        %v1711 = vpop.permute.xlu0 %1710
        %1712 = vrot.lane.b32.xlu0 %v1642, 24
        %v1713 = vpop.permute.xlu0 %1712
        %1714 = vrot.lane.b32.xlu0 %v1643, 24
        %v1715 = vpop.permute.xlu0 %1714
        %1716 = vrot.lane.b32.xlu0 %v1644, 24
        %v1717 = vpop.permute.xlu0 %1716
        %1718 = vrot.lane.b32.xlu0 %v1645, 24
        %v1719 = vpop.permute.xlu0 %1718
        %1720 = vrot.lane.b32.xlu0 %v1646, 24
        %v1721 = vpop.permute.xlu0 %1720
        %1722 = vrot.lane.b32.xlu0 %v1647, 24
        %v1723 = vpop.permute.xlu0 %1722
        %1724 = vrot.lane.b32.xlu0 %v1648, 24
        %v1725 = vpop.permute.xlu0 %1724
        %1726 = vrot.lane.b32.xlu0 %v1649, 24
        %v1727 = vpop.permute.xlu0 %1726
        %1728 = vrot.lane.b32.xlu0 %v1650, 24
        %v1729 = vpop.permute.xlu0 %1728
        %1730 = vrot.lane.b32.xlu0 %v1651, 24
        %v1731 = vpop.permute.xlu0 %1730
        %1732 = vrot.lane.b32.xlu0 %v1652, 24
        %v1733 = vpop.permute.xlu0 %1732
        %1734 = vrot.lane.b32.xlu0 %v1653, 24
        %v1735 = vpop.permute.xlu0 %1734
        %1736 = vrot.lane.b32.xlu0 %v1654, 24
        %v1737 = vpop.permute.xlu0 %1736
        %1738 = vrot.lane.b32.xlu0 %v1655, 24
        %v1739 = vpop.permute.xlu0 %1738
        %1740 = vrot.lane.b32.xlu0 %v1656, 24
        %v1741 = vpop.permute.xlu0 %1740
        %1742 = vrot.lane.b32.xlu0 %v1657, 24
        %v1743 = vpop.permute.xlu0 %1742
        %1744 = vrot.lane.b32.xlu0 %v1658, 24
        %v1745 = vpop.permute.xlu0 %1744
        %1746 = vrot.lane.b32.xlu0 %v1659, 24
        %v1747 = vpop.permute.xlu0 %1746
        %1748 = vrot.lane.b32.xlu0 %v1660, 24
        %v1749 = vpop.permute.xlu0 %1748
        %1750 = vrot.lane.b32.xlu0 %v1661, 24
        %v1751 = vpop.permute.xlu0 %1750
        %1752 = vrot.lane.b32.xlu0 %v1662, 24
        %v1753 = vpop.permute.xlu0 %1752
        %1754 = vrot.lane.b32.xlu0 %v1663, 24
        %v1755 = vpop.permute.xlu0 %1754
        %1756 = vrot.lane.b32.xlu0 %v1664, 24
        %v1757 = vpop.permute.xlu0 %1756
        %1758 = vrot.lane.b32.xlu0 %v1665, 24
        %v1759 = vpop.permute.xlu0 %1758
        %1760 = vrot.lane.b32.xlu0 %v1666, 24
        %v1761 = vpop.permute.xlu0 %1760
        %1762 = vrot.lane.b32.xlu0 %v1667, 24
        %v1763 = vpop.permute.xlu0 %1762
        %vm1796 = vcmask 224448
        %1797 = vst.msk [vmem:[#allocation4] sm:$0xf] %vm1796, %v1701
        %1798 = vst.msk [vmem:[#allocation4 + $0x4] sm:$0xf] %vm1796, %v1703
        %1799 = vst.msk [vmem:[#allocation4 + $0x8] sm:$0xf] %vm1796, %v1705
        %1800 = vst.msk [vmem:[#allocation4 + $0xc] sm:$0xf] %vm1796, %v1707
        %1801 = vst.msk [vmem:[#allocation4 + $0x10] sm:$0xf] %vm1796, %v1709
        %1802 = vst.msk [vmem:[#allocation4 + $0x14] sm:$0xf] %vm1796, %v1711
        %1803 = vst.msk [vmem:[#allocation4 + $0x18] sm:$0xf] %vm1796, %v1713
        %1804 = vst.msk [vmem:[#allocation4 + $0x1c] sm:$0xf] %vm1796, %v1715
        %1805 = vst.msk [vmem:[#allocation4 + $0x20] sm:$0xf] %vm1796, %v1717
        %1806 = vst.msk [vmem:[#allocation4 + $0x24] sm:$0xf] %vm1796, %v1719
        %1807 = vst.msk [vmem:[#allocation4 + $0x28] sm:$0xf] %vm1796, %v1721
        %1808 = vst.msk [vmem:[#allocation4 + $0x2c] sm:$0xf] %vm1796, %v1723
        %1809 = vst.msk [vmem:[#allocation4 + $0x30] sm:$0xf] %vm1796, %v1725
        %1810 = vst.msk [vmem:[#allocation4 + $0x34] sm:$0xf] %vm1796, %v1727
        %1811 = vst.msk [vmem:[#allocation4 + $0x38] sm:$0xf] %vm1796, %v1729
        %1812 = vst.msk [vmem:[#allocation4 + $0x3c] sm:$0xf] %vm1796, %v1731
        %1813 = vst.msk [vmem:[#allocation4 + $0x40] sm:$0xf] %vm1796, %v1733
        %1814 = vst.msk [vmem:[#allocation4 + $0x44] sm:$0xf] %vm1796, %v1735
        %1815 = vst.msk [vmem:[#allocation4 + $0x48] sm:$0xf] %vm1796, %v1737
        %1816 = vst.msk [vmem:[#allocation4 + $0x4c] sm:$0xf] %vm1796, %v1739
        %1817 = vst.msk [vmem:[#allocation4 + $0x50] sm:$0xf] %vm1796, %v1741
        %1818 = vst.msk [vmem:[#allocation4 + $0x54] sm:$0xf] %vm1796, %v1743
        %1819 = vst.msk [vmem:[#allocation4 + $0x58] sm:$0xf] %vm1796, %v1745
        %1820 = vst.msk [vmem:[#allocation4 + $0x5c] sm:$0xf] %vm1796, %v1747
        %1821 = vst.msk [vmem:[#allocation4 + $0x60] sm:$0xf] %vm1796, %v1749
        %1822 = vst.msk [vmem:[#allocation4 + $0x64] sm:$0xf] %vm1796, %v1751
        %1823 = vst.msk [vmem:[#allocation4 + $0x68] sm:$0xf] %vm1796, %v1753
        %1824 = vst.msk [vmem:[#allocation4 + $0x6c] sm:$0xf] %vm1796, %v1755
        %1825 = vst.msk [vmem:[#allocation4 + $0x70] sm:$0xf] %vm1796, %v1757
        %1826 = vst.msk [vmem:[#allocation4 + $0x74] sm:$0xf] %vm1796, %v1759
        %1827 = vst.msk [vmem:[#allocation4 + $0x78] sm:$0xf] %vm1796, %v1761
        %1828 = vst.msk [vmem:[#allocation4 + $0x7c] sm:$0xf] %vm1796, %v1763
        %v1829 = vld [vmem:[%s1603 + $0x1] sm:$0xff]
        %v1830 = vld [vmem:[%s1603 + $0x9] sm:$0xff]
        %v1831 = vld [vmem:[%s1603 + $0x19] sm:$0xff]
        %v1832 = vld [vmem:[%s1603 + $0x21] sm:$0xff]
        %v1833 = vld [vmem:[%s1603 + $0x31] sm:$0xff]
        %v1834 = vld [vmem:[%s1603 + $0x39] sm:$0xff]
        %v1835 = vld [vmem:[%s1603 + $0x49] sm:$0xff]
        %v1836 = vld [vmem:[%s1603 + $0x51] sm:$0xff]
        %v1837 = vld [vmem:[%s1603 + $0x61] sm:$0xff]
        %v1838 = vld [vmem:[%s1603 + $0x69] sm:$0xff]
        %v1839 = vld [vmem:[%s1603 + $0x79] sm:$0xff]
        %v1840 = vld [vmem:[%s1603 + $0x81] sm:$0xff]
        %v1841 = vld [vmem:[%s1603 + $0x91] sm:$0xff]
        %v1842 = vld [vmem:[%s1603 + $0x99] sm:$0xff]
        %v1843 = vld [vmem:[%s1603 + $0xa9] sm:$0xff]
        %v1844 = vld [vmem:[%s1603 + $0xb1] sm:$0xff]
        %v1845 = vld [vmem:[%s1603 + $0xc1] sm:$0xff]
        %v1846 = vld [vmem:[%s1603 + $0xc9] sm:$0xff]
        %v1847 = vld [vmem:[%s1603 + $0xd9] sm:$0xff]
        %v1848 = vld [vmem:[%s1603 + $0xe1] sm:$0xff]
        %v1849 = vld [vmem:[%s1603 + $0xf1] sm:$0xff]
        %v1850 = vld [vmem:[%s1603 + $0xf9] sm:$0xff]
        %v1851 = vld [vmem:[%s1603 + $0x109] sm:$0xff]
        %v1852 = vld [vmem:[%s1603 + $0x111] sm:$0xff]
        %v1853 = vld [vmem:[%s1603 + $0x121] sm:$0xff]
        %v1854 = vld [vmem:[%s1603 + $0x129] sm:$0xff]
        %v1855 = vld [vmem:[%s1603 + $0x139] sm:$0xff]
        %v1856 = vld [vmem:[%s1603 + $0x141] sm:$0xff]
        %v1857 = vld [vmem:[%s1603 + $0x151] sm:$0xff]
        %v1858 = vld [vmem:[%s1603 + $0x159] sm:$0xff]
        %v1859 = vld [vmem:[%s1603 + $0x169] sm:$0xff]
        %v1860 = vld [vmem:[%s1603 + $0x171] sm:$0xff]
        %v1861 = vpack.c.bf16 %v1829, %v1829
        %v1862 = vpack.c.bf16 %v1830, %v1830
        %v1863 = vpack.c.bf16 %v1831, %v1831
        %v1864 = vpack.c.bf16 %v1832, %v1832
        %v1865 = vpack.c.bf16 %v1833, %v1833
        %v1866 = vpack.c.bf16 %v1834, %v1834
        %v1867 = vpack.c.bf16 %v1835, %v1835
        %v1868 = vpack.c.bf16 %v1836, %v1836
        %v1869 = vpack.c.bf16 %v1837, %v1837
        %v1870 = vpack.c.bf16 %v1838, %v1838
        %v1871 = vpack.c.bf16 %v1839, %v1839
        %v1872 = vpack.c.bf16 %v1840, %v1840
        %v1873 = vpack.c.bf16 %v1841, %v1841
        %v1874 = vpack.c.bf16 %v1842, %v1842
        %v1875 = vpack.c.bf16 %v1843, %v1843
        %v1876 = vpack.c.bf16 %v1844, %v1844
        %v1877 = vpack.c.bf16 %v1845, %v1845
        %v1878 = vpack.c.bf16 %v1846, %v1846
        %v1879 = vpack.c.bf16 %v1847, %v1847
        %v1880 = vpack.c.bf16 %v1848, %v1848
        %v1881 = vpack.c.bf16 %v1849, %v1849
        %v1882 = vpack.c.bf16 %v1850, %v1850
        %v1883 = vpack.c.bf16 %v1851, %v1851
        %v1884 = vpack.c.bf16 %v1852, %v1852
        %v1885 = vpack.c.bf16 %v1853, %v1853
        %v1886 = vpack.c.bf16 %v1854, %v1854
        %v1887 = vpack.c.bf16 %v1855, %v1855
        %v1888 = vpack.c.bf16 %v1856, %v1856
        %v1889 = vpack.c.bf16 %v1857, %v1857
        %v1890 = vpack.c.bf16 %v1858, %v1858
        %v1891 = vpack.c.bf16 %v1859, %v1859
        %v1892 = vpack.c.bf16 %v1860, %v1860
        %1925 = vrot.lane.b32.xlu0 %v1861, 28
        %v1926 = vpop.permute.xlu0 %1925
        %1927 = vrot.lane.b32.xlu0 %v1862, 28
        %v1928 = vpop.permute.xlu0 %1927
        %1929 = vrot.lane.b32.xlu0 %v1863, 28
        %v1930 = vpop.permute.xlu0 %1929
        %1931 = vrot.lane.b32.xlu0 %v1864, 28
        %v1932 = vpop.permute.xlu0 %1931
        %1933 = vrot.lane.b32.xlu0 %v1865, 28
        %v1934 = vpop.permute.xlu0 %1933
        %1935 = vrot.lane.b32.xlu0 %v1866, 28
        %v1936 = vpop.permute.xlu0 %1935
        %1937 = vrot.lane.b32.xlu0 %v1867, 28
        %v1938 = vpop.permute.xlu0 %1937
        %1939 = vrot.lane.b32.xlu0 %v1868, 28
        %v1940 = vpop.permute.xlu0 %1939
        %1941 = vrot.lane.b32.xlu0 %v1869, 28
        %v1942 = vpop.permute.xlu0 %1941
        %1943 = vrot.lane.b32.xlu0 %v1870, 28
        %v1944 = vpop.permute.xlu0 %1943
        %1945 = vrot.lane.b32.xlu0 %v1871, 28
        %v1946 = vpop.permute.xlu0 %1945
        %1947 = vrot.lane.b32.xlu0 %v1872, 28
        %v1948 = vpop.permute.xlu0 %1947
        %1949 = vrot.lane.b32.xlu0 %v1873, 28
        %v1950 = vpop.permute.xlu0 %1949
        %1951 = vrot.lane.b32.xlu0 %v1874, 28
        %v1952 = vpop.permute.xlu0 %1951
        %1953 = vrot.lane.b32.xlu0 %v1875, 28
        %v1954 = vpop.permute.xlu0 %1953
        %1955 = vrot.lane.b32.xlu0 %v1876, 28
        %v1956 = vpop.permute.xlu0 %1955
        %1957 = vrot.lane.b32.xlu0 %v1877, 28
        %v1958 = vpop.permute.xlu0 %1957
        %1959 = vrot.lane.b32.xlu0 %v1878, 28
        %v1960 = vpop.permute.xlu0 %1959
        %1961 = vrot.lane.b32.xlu0 %v1879, 28
        %v1962 = vpop.permute.xlu0 %1961
        %1963 = vrot.lane.b32.xlu0 %v1880, 28
        %v1964 = vpop.permute.xlu0 %1963
        %1965 = vrot.lane.b32.xlu0 %v1881, 28
        %v1966 = vpop.permute.xlu0 %1965
        %1967 = vrot.lane.b32.xlu0 %v1882, 28
        %v1968 = vpop.permute.xlu0 %1967
        %1969 = vrot.lane.b32.xlu0 %v1883, 28
        %v1970 = vpop.permute.xlu0 %1969
        %1971 = vrot.lane.b32.xlu0 %v1884, 28
        %v1972 = vpop.permute.xlu0 %1971
        %1973 = vrot.lane.b32.xlu0 %v1885, 28
        %v1974 = vpop.permute.xlu0 %1973
        %1975 = vrot.lane.b32.xlu0 %v1886, 28
        %v1976 = vpop.permute.xlu0 %1975
        %1977 = vrot.lane.b32.xlu0 %v1887, 28
        %v1978 = vpop.permute.xlu0 %1977
        %1979 = vrot.lane.b32.xlu0 %v1888, 28
        %v1980 = vpop.permute.xlu0 %1979
        %1981 = vrot.lane.b32.xlu0 %v1889, 28
        %v1982 = vpop.permute.xlu0 %1981
        %1983 = vrot.lane.b32.xlu0 %v1890, 28
        %v1984 = vpop.permute.xlu0 %1983
        %1985 = vrot.lane.b32.xlu0 %v1891, 28
        %v1986 = vpop.permute.xlu0 %1985
        %1987 = vrot.lane.b32.xlu0 %v1892, 28
        %v1988 = vpop.permute.xlu0 %1987
        %vm2021 = vcmask 257248
        %2022 = vst.msk [vmem:[#allocation4] sm:$0xf] %vm2021, %v1926
        %2023 = vst.msk [vmem:[#allocation4 + $0x4] sm:$0xf] %vm2021, %v1928
        %2024 = vst.msk [vmem:[#allocation4 + $0x8] sm:$0xf] %vm2021, %v1930
        %2025 = vst.msk [vmem:[#allocation4 + $0xc] sm:$0xf] %vm2021, %v1932
        %2026 = vst.msk [vmem:[#allocation4 + $0x10] sm:$0xf] %vm2021, %v1934
        %2027 = vst.msk [vmem:[#allocation4 + $0x14] sm:$0xf] %vm2021, %v1936
        %2028 = vst.msk [vmem:[#allocation4 + $0x18] sm:$0xf] %vm2021, %v1938
        %2029 = vst.msk [vmem:[#allocation4 + $0x1c] sm:$0xf] %vm2021, %v1940
        %2030 = vst.msk [vmem:[#allocation4 + $0x20] sm:$0xf] %vm2021, %v1942
        %2031 = vst.msk [vmem:[#allocation4 + $0x24] sm:$0xf] %vm2021, %v1944
        %2032 = vst.msk [vmem:[#allocation4 + $0x28] sm:$0xf] %vm2021, %v1946
        %2033 = vst.msk [vmem:[#allocation4 + $0x2c] sm:$0xf] %vm2021, %v1948
        %2034 = vst.msk [vmem:[#allocation4 + $0x30] sm:$0xf] %vm2021, %v1950
        %2035 = vst.msk [vmem:[#allocation4 + $0x34] sm:$0xf] %vm2021, %v1952
        %2036 = vst.msk [vmem:[#allocation4 + $0x38] sm:$0xf] %vm2021, %v1954
        %2037 = vst.msk [vmem:[#allocation4 + $0x3c] sm:$0xf] %vm2021, %v1956
        %2038 = vst.msk [vmem:[#allocation4 + $0x40] sm:$0xf] %vm2021, %v1958
        %2039 = vst.msk [vmem:[#allocation4 + $0x44] sm:$0xf] %vm2021, %v1960
        %2040 = vst.msk [vmem:[#allocation4 + $0x48] sm:$0xf] %vm2021, %v1962
        %2041 = vst.msk [vmem:[#allocation4 + $0x4c] sm:$0xf] %vm2021, %v1964
        %2042 = vst.msk [vmem:[#allocation4 + $0x50] sm:$0xf] %vm2021, %v1966
        %2043 = vst.msk [vmem:[#allocation4 + $0x54] sm:$0xf] %vm2021, %v1968
        %2044 = vst.msk [vmem:[#allocation4 + $0x58] sm:$0xf] %vm2021, %v1970
        %2045 = vst.msk [vmem:[#allocation4 + $0x5c] sm:$0xf] %vm2021, %v1972
        %2046 = vst.msk [vmem:[#allocation4 + $0x60] sm:$0xf] %vm2021, %v1974
        %2047 = vst.msk [vmem:[#allocation4 + $0x64] sm:$0xf] %vm2021, %v1976
        %2048 = vst.msk [vmem:[#allocation4 + $0x68] sm:$0xf] %vm2021, %v1978
        %2049 = vst.msk [vmem:[#allocation4 + $0x6c] sm:$0xf] %vm2021, %v1980
        %2050 = vst.msk [vmem:[#allocation4 + $0x70] sm:$0xf] %vm2021, %v1982
        %2051 = vst.msk [vmem:[#allocation4 + $0x74] sm:$0xf] %vm2021, %v1984
        %2052 = vst.msk [vmem:[#allocation4 + $0x78] sm:$0xf] %vm2021, %v1986
        %2053 = vst.msk [vmem:[#allocation4 + $0x7c] sm:$0xf] %vm2021, %v1988
        %v2054 = vld [vmem:[%s1603 + $0x2] sm:$0xff]
        %v2055 = vld [vmem:[%s1603 + $0xa] sm:$0xff]
        %v2056 = vld [vmem:[%s1603 + $0x1a] sm:$0xff]
        %v2057 = vld [vmem:[%s1603 + $0x22] sm:$0xff]
        %v2058 = vld [vmem:[%s1603 + $0x32] sm:$0xff]
        %v2059 = vld [vmem:[%s1603 + $0x3a] sm:$0xff]
        %v2060 = vld [vmem:[%s1603 + $0x4a] sm:$0xff]
        %v2061 = vld [vmem:[%s1603 + $0x52] sm:$0xff]
        %v2062 = vld [vmem:[%s1603 + $0x62] sm:$0xff]
        %v2063 = vld [vmem:[%s1603 + $0x6a] sm:$0xff]
        %v2064 = vld [vmem:[%s1603 + $0x7a] sm:$0xff]
        %v2065 = vld [vmem:[%s1603 + $0x82] sm:$0xff]
        %v2066 = vld [vmem:[%s1603 + $0x92] sm:$0xff]
        %v2067 = vld [vmem:[%s1603 + $0x9a] sm:$0xff]
        %v2068 = vld [vmem:[%s1603 + $0xaa] sm:$0xff]
        %v2069 = vld [vmem:[%s1603 + $0xb2] sm:$0xff]
        %v2070 = vld [vmem:[%s1603 + $0xc2] sm:$0xff]
        %v2071 = vld [vmem:[%s1603 + $0xca] sm:$0xff]
        %v2072 = vld [vmem:[%s1603 + $0xda] sm:$0xff]
        %v2073 = vld [vmem:[%s1603 + $0xe2] sm:$0xff]
        %v2074 = vld [vmem:[%s1603 + $0xf2] sm:$0xff]
        %v2075 = vld [vmem:[%s1603 + $0xfa] sm:$0xff]
        %v2076 = vld [vmem:[%s1603 + $0x10a] sm:$0xff]
        %v2077 = vld [vmem:[%s1603 + $0x112] sm:$0xff]
        %v2078 = vld [vmem:[%s1603 + $0x122] sm:$0xff]
        %v2079 = vld [vmem:[%s1603 + $0x12a] sm:$0xff]
        %v2080 = vld [vmem:[%s1603 + $0x13a] sm:$0xff]
        %v2081 = vld [vmem:[%s1603 + $0x142] sm:$0xff]
        %v2082 = vld [vmem:[%s1603 + $0x152] sm:$0xff]
        %v2083 = vld [vmem:[%s1603 + $0x15a] sm:$0xff]
        %v2084 = vld [vmem:[%s1603 + $0x16a] sm:$0xff]
        %v2085 = vld [vmem:[%s1603 + $0x172] sm:$0xff]
        %v2086 = vpack.c.bf16 %v2054, %v2054
        %v2087 = vpack.c.bf16 %v2055, %v2055
        %v2088 = vpack.c.bf16 %v2056, %v2056
        %v2089 = vpack.c.bf16 %v2057, %v2057
        %v2090 = vpack.c.bf16 %v2058, %v2058
        %v2091 = vpack.c.bf16 %v2059, %v2059
        %v2092 = vpack.c.bf16 %v2060, %v2060
        %v2093 = vpack.c.bf16 %v2061, %v2061
        %v2094 = vpack.c.bf16 %v2062, %v2062
        %v2095 = vpack.c.bf16 %v2063, %v2063
        %v2096 = vpack.c.bf16 %v2064, %v2064
        %v2097 = vpack.c.bf16 %v2065, %v2065
        %v2098 = vpack.c.bf16 %v2066, %v2066
        %v2099 = vpack.c.bf16 %v2067, %v2067
        %v2100 = vpack.c.bf16 %v2068, %v2068
        %v2101 = vpack.c.bf16 %v2069, %v2069
        %v2102 = vpack.c.bf16 %v2070, %v2070
        %v2103 = vpack.c.bf16 %v2071, %v2071
        %v2104 = vpack.c.bf16 %v2072, %v2072
        %v2105 = vpack.c.bf16 %v2073, %v2073
        %v2106 = vpack.c.bf16 %v2074, %v2074
        %v2107 = vpack.c.bf16 %v2075, %v2075
        %v2108 = vpack.c.bf16 %v2076, %v2076
        %v2109 = vpack.c.bf16 %v2077, %v2077
        %v2110 = vpack.c.bf16 %v2078, %v2078
        %v2111 = vpack.c.bf16 %v2079, %v2079
        %v2112 = vpack.c.bf16 %v2080, %v2080
        %v2113 = vpack.c.bf16 %v2081, %v2081
        %v2114 = vpack.c.bf16 %v2082, %v2082
        %v2115 = vpack.c.bf16 %v2083, %v2083
        %v2116 = vpack.c.bf16 %v2084, %v2084
        %v2117 = vpack.c.bf16 %v2085, %v2085
        %2150 = vrot.lane.b32.xlu0 %v2086, 32
        %v2151 = vpop.permute.xlu0 %2150
        %2152 = vrot.lane.b32.xlu0 %v2087, 32
        %v2153 = vpop.permute.xlu0 %2152
        %2154 = vrot.lane.b32.xlu0 %v2088, 32
        %v2155 = vpop.permute.xlu0 %2154
        %2156 = vrot.lane.b32.xlu0 %v2089, 32
        %v2157 = vpop.permute.xlu0 %2156
        %2158 = vrot.lane.b32.xlu0 %v2090, 32
        %v2159 = vpop.permute.xlu0 %2158
        %2160 = vrot.lane.b32.xlu0 %v2091, 32
        %v2161 = vpop.permute.xlu0 %2160
        %2162 = vrot.lane.b32.xlu0 %v2092, 32
        %v2163 = vpop.permute.xlu0 %2162
        %2164 = vrot.lane.b32.xlu0 %v2093, 32
        %v2165 = vpop.permute.xlu0 %2164
        %2166 = vrot.lane.b32.xlu0 %v2094, 32
        %v2167 = vpop.permute.xlu0 %2166
        %2168 = vrot.lane.b32.xlu0 %v2095, 32
        %v2169 = vpop.permute.xlu0 %2168
        %2170 = vrot.lane.b32.xlu0 %v2096, 32
        %v2171 = vpop.permute.xlu0 %2170
        %2172 = vrot.lane.b32.xlu0 %v2097, 32
        %v2173 = vpop.permute.xlu0 %2172
        %2174 = vrot.lane.b32.xlu0 %v2098, 32
        %v2175 = vpop.permute.xlu0 %2174
        %2176 = vrot.lane.b32.xlu0 %v2099, 32
        %v2177 = vpop.permute.xlu0 %2176
        %2178 = vrot.lane.b32.xlu0 %v2100, 32
        %v2179 = vpop.permute.xlu0 %2178
        %2180 = vrot.lane.b32.xlu0 %v2101, 32
        %v2181 = vpop.permute.xlu0 %2180
        %2182 = vrot.lane.b32.xlu0 %v2102, 32
        %v2183 = vpop.permute.xlu0 %2182
        %2184 = vrot.lane.b32.xlu0 %v2103, 32
        %v2185 = vpop.permute.xlu0 %2184
        %2186 = vrot.lane.b32.xlu0 %v2104, 32
        %v2187 = vpop.permute.xlu0 %2186
        %2188 = vrot.lane.b32.xlu0 %v2105, 32
        %v2189 = vpop.permute.xlu0 %2188
        %2190 = vrot.lane.b32.xlu0 %v2106, 32
        %v2191 = vpop.permute.xlu0 %2190
        %2192 = vrot.lane.b32.xlu0 %v2107, 32
        %v2193 = vpop.permute.xlu0 %2192
        %2194 = vrot.lane.b32.xlu0 %v2108, 32
        %v2195 = vpop.permute.xlu0 %2194
        %2196 = vrot.lane.b32.xlu0 %v2109, 32
        %v2197 = vpop.permute.xlu0 %2196
        %2198 = vrot.lane.b32.xlu0 %v2110, 32
        %v2199 = vpop.permute.xlu0 %2198
        %2200 = vrot.lane.b32.xlu0 %v2111, 32
        %v2201 = vpop.permute.xlu0 %2200
        %2202 = vrot.lane.b32.xlu0 %v2112, 32
        %v2203 = vpop.permute.xlu0 %2202
        %2204 = vrot.lane.b32.xlu0 %v2113, 32
        %v2205 = vpop.permute.xlu0 %2204
        %2206 = vrot.lane.b32.xlu0 %v2114, 32
        %v2207 = vpop.permute.xlu0 %2206
        %2208 = vrot.lane.b32.xlu0 %v2115, 32
        %v2209 = vpop.permute.xlu0 %2208
        %2210 = vrot.lane.b32.xlu0 %v2116, 32
        %v2211 = vpop.permute.xlu0 %2210
        %2212 = vrot.lane.b32.xlu0 %v2117, 32
        %v2213 = vpop.permute.xlu0 %2212
        %vm2246 = vcmask 290048
        %2247 = vst.msk [vmem:[#allocation4] sm:$0xf] %vm2246, %v2151
        %2248 = vst.msk [vmem:[#allocation4 + $0x4] sm:$0xf] %vm2246, %v2153
        %2249 = vst.msk [vmem:[#allocation4 + $0x8] sm:$0xf] %vm2246, %v2155
        %2250 = vst.msk [vmem:[#allocation4 + $0xc] sm:$0xf] %vm2246, %v2157
        %2251 = vst.msk [vmem:[#allocation4 + $0x10] sm:$0xf] %vm2246, %v2159
        %2252 = vst.msk [vmem:[#allocation4 + $0x14] sm:$0xf] %vm2246, %v2161
        %2253 = vst.msk [vmem:[#allocation4 + $0x18] sm:$0xf] %vm2246, %v2163
        %2254 = vst.msk [vmem:[#allocation4 + $0x1c] sm:$0xf] %vm2246, %v2165
        %2255 = vst.msk [vmem:[#allocation4 + $0x20] sm:$0xf] %vm2246, %v2167
        %2256 = vst.msk [vmem:[#allocation4 + $0x24] sm:$0xf] %vm2246, %v2169
        %2257 = vst.msk [vmem:[#allocation4 + $0x28] sm:$0xf] %vm2246, %v2171
        %2258 = vst.msk [vmem:[#allocation4 + $0x2c] sm:$0xf] %vm2246, %v2173
        %2259 = vst.msk [vmem:[#allocation4 + $0x30] sm:$0xf] %vm2246, %v2175
        %2260 = vst.msk [vmem:[#allocation4 + $0x34] sm:$0xf] %vm2246, %v2177
        %2261 = vst.msk [vmem:[#allocation4 + $0x38] sm:$0xf] %vm2246, %v2179
        %2262 = vst.msk [vmem:[#allocation4 + $0x3c] sm:$0xf] %vm2246, %v2181
        %2263 = vst.msk [vmem:[#allocation4 + $0x40] sm:$0xf] %vm2246, %v2183
        %2264 = vst.msk [vmem:[#allocation4 + $0x44] sm:$0xf] %vm2246, %v2185
        %2265 = vst.msk [vmem:[#allocation4 + $0x48] sm:$0xf] %vm2246, %v2187
        %2266 = vst.msk [vmem:[#allocation4 + $0x4c] sm:$0xf] %vm2246, %v2189
        %2267 = vst.msk [vmem:[#allocation4 + $0x50] sm:$0xf] %vm2246, %v2191
        %2268 = vst.msk [vmem:[#allocation4 + $0x54] sm:$0xf] %vm2246, %v2193
        %2269 = vst.msk [vmem:[#allocation4 + $0x58] sm:$0xf] %vm2246, %v2195
        %2270 = vst.msk [vmem:[#allocation4 + $0x5c] sm:$0xf] %vm2246, %v2197
        %2271 = vst.msk [vmem:[#allocation4 + $0x60] sm:$0xf] %vm2246, %v2199
        %2272 = vst.msk [vmem:[#allocation4 + $0x64] sm:$0xf] %vm2246, %v2201
        %2273 = vst.msk [vmem:[#allocation4 + $0x68] sm:$0xf] %vm2246, %v2203
        %2274 = vst.msk [vmem:[#allocation4 + $0x6c] sm:$0xf] %vm2246, %v2205
        %2275 = vst.msk [vmem:[#allocation4 + $0x70] sm:$0xf] %vm2246, %v2207
        %2276 = vst.msk [vmem:[#allocation4 + $0x74] sm:$0xf] %vm2246, %v2209
        %2277 = vst.msk [vmem:[#allocation4 + $0x78] sm:$0xf] %vm2246, %v2211
        %2278 = vst.msk [vmem:[#allocation4 + $0x7c] sm:$0xf] %vm2246, %v2213
        %v2279 = vld [vmem:[#allocation4] sm:$0xf]
        %v2280 = vld [vmem:[#allocation4 + $0x4] sm:$0xf]
        %v2281 = vld [vmem:[#allocation4 + $0x8] sm:$0xf]
        %v2282 = vld [vmem:[#allocation4 + $0xc] sm:$0xf]
        %v2283 = vld [vmem:[#allocation4 + $0x10] sm:$0xf]
        %v2284 = vld [vmem:[#allocation4 + $0x14] sm:$0xf]
        %v2285 = vld [vmem:[#allocation4 + $0x18] sm:$0xf]
        %v2286 = vld [vmem:[#allocation4 + $0x1c] sm:$0xf]
        %v2287 = vld [vmem:[#allocation4 + $0x20] sm:$0xf]
        %v2288 = vld [vmem:[#allocation4 + $0x24] sm:$0xf]
        %v2289 = vld [vmem:[#allocation4 + $0x28] sm:$0xf]
        %v2290 = vld [vmem:[#allocation4 + $0x2c] sm:$0xf]
        %v2291 = vld [vmem:[#allocation4 + $0x30] sm:$0xf]
        %v2292 = vld [vmem:[#allocation4 + $0x34] sm:$0xf]
        %v2293 = vld [vmem:[#allocation4 + $0x38] sm:$0xf]
        %v2294 = vld [vmem:[#allocation4 + $0x3c] sm:$0xf]
        %v2295 = vld [vmem:[#allocation4 + $0x40] sm:$0xf]
        %v2296 = vld [vmem:[#allocation4 + $0x44] sm:$0xf]
        %v2297 = vld [vmem:[#allocation4 + $0x48] sm:$0xf]
        %v2298 = vld [vmem:[#allocation4 + $0x4c] sm:$0xf]
        %v2299 = vld [vmem:[#allocation4 + $0x50] sm:$0xf]
        %v2300 = vld [vmem:[#allocation4 + $0x54] sm:$0xf]
        %v2301 = vld [vmem:[#allocation4 + $0x58] sm:$0xf]
        %v2302 = vld [vmem:[#allocation4 + $0x5c] sm:$0xf]
        %v2303 = vld [vmem:[#allocation4 + $0x60] sm:$0xf]
        %v2304 = vld [vmem:[#allocation4 + $0x64] sm:$0xf]
        %v2305 = vld [vmem:[#allocation4 + $0x68] sm:$0xf]
        %v2306 = vld [vmem:[#allocation4 + $0x6c] sm:$0xf]
        %v2307 = vld [vmem:[#allocation4 + $0x70] sm:$0xf]
        %v2308 = vld [vmem:[#allocation4 + $0x74] sm:$0xf]
        %v2309 = vld [vmem:[#allocation4 + $0x78] sm:$0xf]
        %v2310 = vld [vmem:[#allocation4 + $0x7c] sm:$0xf]
        %v2311 = vld [vmem:[%s1] sm:$0xf]
        %v2312 = vld [vmem:[%s1 + $0x4] sm:$0xf]
        %v2313 = vld [vmem:[%s1 + $0x8] sm:$0xf]
        %v2314 = vld [vmem:[%s1 + $0xc] sm:$0xf]
        %v2315 = vld [vmem:[%s1 + $0x10] sm:$0x3]
        %v2316 = vld [vmem:[%s2] sm:$0x1]
        %v2318 = vperm.slane %v2316, 0
        %v2352 = vunpack.c.l.b16 %v2279
        %v2353 = vunpack.c.l.b16 %v2280
        %v2354 = vunpack.c.l.b16 %v2281
        %v2355 = vunpack.c.l.b16 %v2282
        %v2356 = vunpack.c.l.b16 %v2283
        %v2357 = vunpack.c.l.b16 %v2284
        %v2358 = vunpack.c.l.b16 %v2285
        %v2359 = vunpack.c.l.b16 %v2286
        %v2360 = vunpack.c.l.b16 %v2287
        %v2361 = vunpack.c.l.b16 %v2288
        %v2362 = vunpack.c.l.b16 %v2289
        %v2363 = vunpack.c.l.b16 %v2290
        %v2364 = vunpack.c.l.b16 %v2291
        %v2365 = vunpack.c.l.b16 %v2292
        %v2366 = vunpack.c.l.b16 %v2293
        %v2367 = vunpack.c.l.b16 %v2294
        %v2368 = vunpack.c.l.b16 %v2295
        %v2369 = vunpack.c.l.b16 %v2296
        %v2370 = vunpack.c.l.b16 %v2297
        %v2371 = vunpack.c.l.b16 %v2298
        %v2372 = vunpack.c.l.b16 %v2299
        %v2373 = vunpack.c.l.b16 %v2300
        %v2374 = vunpack.c.l.b16 %v2301
        %v2375 = vunpack.c.l.b16 %v2302
        %v2376 = vunpack.c.l.b16 %v2303
        %v2377 = vunpack.c.l.b16 %v2304
        %v2378 = vunpack.c.l.b16 %v2305
        %v2379 = vunpack.c.l.b16 %v2306
        %v2380 = vunpack.c.l.b16 %v2307
        %v2381 = vunpack.c.l.b16 %v2308
        %v2382 = vunpack.c.l.b16 %v2309
        %v2383 = vunpack.c.l.b16 %v2310
        %v2384 = vpack.c.b16 %v2353, %v2352
        %v2385 = vpack.c.b16 %v2355, %v2354
        %v2386 = vpack.c.b16 %v2357, %v2356
        %v2387 = vpack.c.b16 %v2359, %v2358
        %v2388 = vpack.c.b16 %v2361, %v2360
        %v2389 = vpack.c.b16 %v2363, %v2362
        %v2390 = vpack.c.b16 %v2365, %v2364
        %v2391 = vpack.c.b16 %v2367, %v2366
        %v2392 = vpack.c.b16 %v2369, %v2368
        %v2393 = vpack.c.b16 %v2371, %v2370
        %v2394 = vpack.c.b16 %v2373, %v2372
        %v2395 = vpack.c.b16 %v2375, %v2374
        %v2396 = vpack.c.b16 %v2377, %v2376
        %v2397 = vpack.c.b16 %v2379, %v2378
        %v2398 = vpack.c.b16 %v2381, %v2380
        %v2399 = vpack.c.b16 %v2383, %v2382
        %v2405 = vunpack.c.l.b16 %v2311
        %v2406 = vunpack.c.l.b16 %v2312
        %v2407 = vunpack.c.l.b16 %v2313
        %v2408 = vunpack.c.l.b16 %v2314
        %v2409 = vunpack.c.l.b16 %v2315
        %v2410 = vpack.c.b16 %v2406, %v2405
        %v2411 = vpack.c.b16 %v2408, %v2407
        %v2412 = vpack.c.b16 %v2409, %v2409
        %vm2415 = vcmask 293888
        %v2417 = vsel %vm2415, %v2384, 0
        %v2420 = vsel %vm2415, %v2385, 0
        %v2423 = vsel %vm2415, %v2386, 0
        %v2426 = vsel %vm2415, %v2387, 0
        %v2429 = vsel %vm2415, %v2388, 0
        %v2432 = vsel %vm2415, %v2389, 0
        %v2435 = vsel %vm2415, %v2390, 0
        %v2438 = vsel %vm2415, %v2391, 0
        %v2441 = vsel %vm2415, %v2392, 0
        %v2444 = vsel %vm2415, %v2393, 0
        %v2447 = vsel %vm2415, %v2394, 0
        %v2450 = vsel %vm2415, %v2395, 0
        %v2453 = vsel %vm2415, %v2396, 0
        %v2456 = vsel %vm2415, %v2397, 0
        %v2459 = vsel %vm2415, %v2398, 0
        %v2462 = vsel %vm2415, %v2399, 0
        %vm2464 = vcmask 1041408
        %v2466 = vsel %vm2464, %v2412, 0
        %2468 = vmatpush.bf16.msra.mxu0 0
        %2469 = vmatpush.bf16.msra.mxu0 0
        %2470 = vmatpush.bf16.msra.mxu0 0
        %2471 = vmatpush.bf16.msra.mxu0 0
        %2472 = vmatpush.bf16.msra.mxu0 0
        %2473 = vmatpush.bf16.msra.mxu0 %v2466
        %2474 = vmatpush.bf16.msra.mxu0 %v2411
        %2475 = vmatpush.bf16.msra.mxu0 %v2410
        %2476 = vmatmul.bf16.gmra.mxu0 %v2417
        %v2477 = vpop.f32.mrf.mxu0
        %v2478 = vadd.f32 %v2318, %v2477
        %v2479 = vpop.f32.mrf.mxu0
        %v2480 = vadd.f32 %v2318, %v2479
        %2481 = vmatmul.bf16.gmra.mxu0 %v2420
        %v2482 = vpop.f32.mrf.mxu0
        %v2483 = vadd.f32 %v2318, %v2482
        %v2484 = vpop.f32.mrf.mxu0
        %v2485 = vadd.f32 %v2318, %v2484
        %2486 = vmatmul.bf16.gmra.mxu0 %v2423
        %v2487 = vpop.f32.mrf.mxu0
        %v2488 = vadd.f32 %v2318, %v2487
        %v2489 = vpop.f32.mrf.mxu0
        %v2490 = vadd.f32 %v2318, %v2489
        %2491 = vmatmul.bf16.gmra.mxu0 %v2426
        %v2492 = vpop.f32.mrf.mxu0
        %v2493 = vadd.f32 %v2318, %v2492
        %v2494 = vpop.f32.mrf.mxu0
        %v2495 = vadd.f32 %v2318, %v2494
        %2496 = vmatmul.bf16.gmra.mxu0 %v2429
        %v2497 = vpop.f32.mrf.mxu0
        %v2498 = vadd.f32 %v2318, %v2497
        %v2499 = vpop.f32.mrf.mxu0
        %v2500 = vadd.f32 %v2318, %v2499
        %2501 = vmatmul.bf16.gmra.mxu0 %v2432
        %v2502 = vpop.f32.mrf.mxu0
        %v2503 = vadd.f32 %v2318, %v2502
        %v2504 = vpop.f32.mrf.mxu0
        %v2505 = vadd.f32 %v2318, %v2504
        %2506 = vmatmul.bf16.gmra.mxu0 %v2435
        %v2507 = vpop.f32.mrf.mxu0
        %v2508 = vadd.f32 %v2318, %v2507
        %v2509 = vpop.f32.mrf.mxu0
        %v2510 = vadd.f32 %v2318, %v2509
        %2511 = vmatmul.bf16.gmra.mxu0 %v2438
        %v2512 = vpop.f32.mrf.mxu0
        %v2513 = vadd.f32 %v2318, %v2512
        %v2514 = vpop.f32.mrf.mxu0
        %v2515 = vadd.f32 %v2318, %v2514
        %2516 = vmatmul.bf16.gmra.mxu0 %v2441
        %v2517 = vpop.f32.mrf.mxu0
        %v2518 = vadd.f32 %v2318, %v2517
        %v2519 = vpop.f32.mrf.mxu0
        %v2520 = vadd.f32 %v2318, %v2519
        %2521 = vmatmul.bf16.gmra.mxu0 %v2444
        %v2522 = vpop.f32.mrf.mxu0
        %v2523 = vadd.f32 %v2318, %v2522
        %v2524 = vpop.f32.mrf.mxu0
        %v2525 = vadd.f32 %v2318, %v2524
        %2526 = vmatmul.bf16.gmra.mxu0 %v2447
        %v2527 = vpop.f32.mrf.mxu0
        %v2528 = vadd.f32 %v2318, %v2527
        %v2529 = vpop.f32.mrf.mxu0
        %v2530 = vadd.f32 %v2318, %v2529
        %2531 = vmatmul.bf16.gmra.mxu0 %v2450
        %v2532 = vpop.f32.mrf.mxu0
        %v2533 = vadd.f32 %v2318, %v2532
        %v2534 = vpop.f32.mrf.mxu0
        %v2535 = vadd.f32 %v2318, %v2534
        %2536 = vmatmul.bf16.gmra.mxu0 %v2453
        %v2537 = vpop.f32.mrf.mxu0
        %v2538 = vadd.f32 %v2318, %v2537
        %v2539 = vpop.f32.mrf.mxu0
        %v2540 = vadd.f32 %v2318, %v2539
        %2541 = vmatmul.bf16.gmra.mxu0 %v2456
        %v2542 = vpop.f32.mrf.mxu0
        %v2543 = vadd.f32 %v2318, %v2542
        %v2544 = vpop.f32.mrf.mxu0
        %v2545 = vadd.f32 %v2318, %v2544
        %2546 = vmatmul.bf16.gmra.mxu0 %v2459
        %v2547 = vpop.f32.mrf.mxu0
        %v2548 = vadd.f32 %v2318, %v2547
        %v2549 = vpop.f32.mrf.mxu0
        %v2550 = vadd.f32 %v2318, %v2549
        %2551 = vmatmul.bf16.gmra.mxu0 %v2462
        %v2552 = vpop.f32.mrf.mxu0
        %v2553 = vadd.f32 %v2318, %v2552
        %v2554 = vpop.f32.mrf.mxu0
        %v2555 = vadd.f32 %v2318, %v2554
        %2556 = vdwg.mxu0
        %v2557 = vmax.f32 %v2478, 0.0
        %v2558 = vmax.f32 %v2480, 0.0
        %v2559 = vmax.f32 %v2483, 0.0
        %v2560 = vmax.f32 %v2485, 0.0
        %v2561 = vmax.f32 %v2488, 0.0
        %v2562 = vmax.f32 %v2490, 0.0
        %v2563 = vmax.f32 %v2493, 0.0
        %v2564 = vmax.f32 %v2495, 0.0
        %v2565 = vmax.f32 %v2498, 0.0
        %v2566 = vmax.f32 %v2500, 0.0
        %v2567 = vmax.f32 %v2503, 0.0
        %v2568 = vmax.f32 %v2505, 0.0
        %v2569 = vmax.f32 %v2508, 0.0
        %v2570 = vmax.f32 %v2510, 0.0
        %v2571 = vmax.f32 %v2513, 0.0
        %v2572 = vmax.f32 %v2515, 0.0
        %v2573 = vmax.f32 %v2518, 0.0
        %v2574 = vmax.f32 %v2520, 0.0
        %v2575 = vmax.f32 %v2523, 0.0
        %v2576 = vmax.f32 %v2525, 0.0
        %v2577 = vmax.f32 %v2528, 0.0
        %v2578 = vmax.f32 %v2530, 0.0
        %v2579 = vmax.f32 %v2533, 0.0
        %v2580 = vmax.f32 %v2535, 0.0
        %v2581 = vmax.f32 %v2538, 0.0
        %v2582 = vmax.f32 %v2540, 0.0
        %v2583 = vmax.f32 %v2543, 0.0
        %v2584 = vmax.f32 %v2545, 0.0
        %v2585 = vmax.f32 %v2548, 0.0
        %v2586 = vmax.f32 %v2550, 0.0
        %v2587 = vmax.f32 %v2553, 0.0
        %v2588 = vmax.f32 %v2555, 0.0
        %s2589 = scalar_lea.vmem [#allocation3], 24
        %2590 = vst.msk [vmem:[%s2589 + $0x1] sm:$0xff] %vm270, %v2557
        %2591 = vst.msk [vmem:[%s2589 + $0x9] sm:$0xff] %vm270, %v2558
        %2592 = vst.msk [vmem:[%s2589 + $0x19] sm:$0xff] %vm270, %v2559
        %2593 = vst.msk [vmem:[%s2589 + $0x21] sm:$0xff] %vm270, %v2560
        %2594 = vst.msk [vmem:[%s2589 + $0x31] sm:$0xff] %vm270, %v2561
        %2595 = vst.msk [vmem:[%s2589 + $0x39] sm:$0xff] %vm270, %v2562
        %2596 = vst.msk [vmem:[%s2589 + $0x49] sm:$0xff] %vm270, %v2563
        %2597 = vst.msk [vmem:[%s2589 + $0x51] sm:$0xff] %vm270, %v2564
        %2598 = vst.msk [vmem:[%s2589 + $0x61] sm:$0xff] %vm270, %v2565
        %2599 = vst.msk [vmem:[%s2589 + $0x69] sm:$0xff] %vm270, %v2566
        %2600 = vst.msk [vmem:[%s2589 + $0x79] sm:$0xff] %vm270, %v2567
        %2601 = vst.msk [vmem:[%s2589 + $0x81] sm:$0xff] %vm270, %v2568
        %2602 = vst.msk [vmem:[%s2589 + $0x91] sm:$0xff] %vm270, %v2569
        %2603 = vst.msk [vmem:[%s2589 + $0x99] sm:$0xff] %vm270, %v2570
        %2604 = vst.msk [vmem:[%s2589 + $0xa9] sm:$0xff] %vm270, %v2571
        %2605 = vst.msk [vmem:[%s2589 + $0xb1] sm:$0xff] %vm270, %v2572
        %2606 = vst.msk [vmem:[%s2589 + $0xc1] sm:$0xff] %vm270, %v2573
        %2607 = vst.msk [vmem:[%s2589 + $0xc9] sm:$0xff] %vm270, %v2574
        %2608 = vst.msk [vmem:[%s2589 + $0xd9] sm:$0xff] %vm270, %v2575
        %2609 = vst.msk [vmem:[%s2589 + $0xe1] sm:$0xff] %vm270, %v2576
        %2610 = vst.msk [vmem:[%s2589 + $0xf1] sm:$0xff] %vm270, %v2577
        %2611 = vst.msk [vmem:[%s2589 + $0xf9] sm:$0xff] %vm270, %v2578
        %2612 = vst.msk [vmem:[%s2589 + $0x109] sm:$0xff] %vm270, %v2579
        %2613 = vst.msk [vmem:[%s2589 + $0x111] sm:$0xff] %vm270, %v2580
        %2614 = vst.msk [vmem:[%s2589 + $0x121] sm:$0xff] %vm270, %v2581
        %2615 = vst.msk [vmem:[%s2589 + $0x129] sm:$0xff] %vm270, %v2582
        %2616 = vst.msk [vmem:[%s2589 + $0x139] sm:$0xff] %vm270, %v2583
        %2617 = vst.msk [vmem:[%s2589 + $0x141] sm:$0xff] %vm270, %v2584
        %2618 = vst.msk [vmem:[%s2589 + $0x151] sm:$0xff] %vm270, %v2585
        %2619 = vst.msk [vmem:[%s2589 + $0x159] sm:$0xff] %vm270, %v2586
        %2620 = vst.msk [vmem:[%s2589 + $0x169] sm:$0xff] %vm270, %v2587
        %2621 = vst.msk [vmem:[%s2589 + $0x171] sm:$0xff] %vm270, %v2588
        %v2622 = vld [vmem:[#allocation3] sm:$0xff]
        %v2623 = vld [vmem:[#allocation3 + $0x8] sm:$0xff]
        %v2624 = vld [vmem:[#allocation3 + $0x18] sm:$0xff]
        %v2625 = vld [vmem:[#allocation3 + $0x20] sm:$0xff]
        %v2626 = vld [vmem:[#allocation3 + $0x30] sm:$0xff]
        %v2627 = vld [vmem:[#allocation3 + $0x38] sm:$0xff]
        %v2628 = vld [vmem:[#allocation3 + $0x48] sm:$0xff]
        %v2629 = vld [vmem:[#allocation3 + $0x50] sm:$0xff]
        %v2630 = vld [vmem:[#allocation3 + $0x60] sm:$0xff]
        %v2631 = vld [vmem:[#allocation3 + $0x68] sm:$0xff]
        %v2632 = vld [vmem:[#allocation3 + $0x78] sm:$0xff]
        %v2633 = vld [vmem:[#allocation3 + $0x80] sm:$0xff]
        %v2634 = vld [vmem:[#allocation3 + $0x90] sm:$0xff]
        %v2635 = vld [vmem:[#allocation3 + $0x98] sm:$0xff]
        %v2636 = vld [vmem:[#allocation3 + $0xa8] sm:$0xff]
        %v2637 = vld [vmem:[#allocation3 + $0xb0] sm:$0xff]
        %v2638 = vld [vmem:[#allocation3 + $0xc0] sm:$0xff]
        %v2639 = vld [vmem:[#allocation3 + $0xc8] sm:$0xff]
        %v2640 = vld [vmem:[#allocation3 + $0xd8] sm:$0xff]
        %v2641 = vld [vmem:[#allocation3 + $0xe0] sm:$0xff]
        %v2642 = vld [vmem:[#allocation3 + $0xf0] sm:$0xff]
        %v2643 = vld [vmem:[#allocation3 + $0xf8] sm:$0xff]
        %v2644 = vld [vmem:[#allocation3 + $0x108] sm:$0xff]
        %v2645 = vld [vmem:[#allocation3 + $0x110] sm:$0xff]
        %v2646 = vld [vmem:[#allocation3 + $0x120] sm:$0xff]
        %v2647 = vld [vmem:[#allocation3 + $0x128] sm:$0xff]
        %v2648 = vld [vmem:[#allocation3 + $0x138] sm:$0xff]
        %v2649 = vld [vmem:[#allocation3 + $0x140] sm:$0xff]
        %v2650 = vld [vmem:[#allocation3 + $0x150] sm:$0xff]
        %v2651 = vld [vmem:[#allocation3 + $0x158] sm:$0xff]
        %v2652 = vld [vmem:[#allocation3 + $0x168] sm:$0xff]
        %v2653 = vld [vmem:[#allocation3 + $0x170] sm:$0xff]
        %v2654 = vpack.c.bf16 %v2622, %v2622
        %v2655 = vpack.c.bf16 %v2623, %v2623
        %v2656 = vpack.c.bf16 %v2624, %v2624
        %v2657 = vpack.c.bf16 %v2625, %v2625
        %v2658 = vpack.c.bf16 %v2626, %v2626
        %v2659 = vpack.c.bf16 %v2627, %v2627
        %v2660 = vpack.c.bf16 %v2628, %v2628
        %v2661 = vpack.c.bf16 %v2629, %v2629
        %v2662 = vpack.c.bf16 %v2630, %v2630
        %v2663 = vpack.c.bf16 %v2631, %v2631
        %v2664 = vpack.c.bf16 %v2632, %v2632
        %v2665 = vpack.c.bf16 %v2633, %v2633
        %v2666 = vpack.c.bf16 %v2634, %v2634
        %v2667 = vpack.c.bf16 %v2635, %v2635
        %v2668 = vpack.c.bf16 %v2636, %v2636
        %v2669 = vpack.c.bf16 %v2637, %v2637
        %v2670 = vpack.c.bf16 %v2638, %v2638
        %v2671 = vpack.c.bf16 %v2639, %v2639
        %v2672 = vpack.c.bf16 %v2640, %v2640
        %v2673 = vpack.c.bf16 %v2641, %v2641
        %v2674 = vpack.c.bf16 %v2642, %v2642
        %v2675 = vpack.c.bf16 %v2643, %v2643
        %v2676 = vpack.c.bf16 %v2644, %v2644
        %v2677 = vpack.c.bf16 %v2645, %v2645
        %v2678 = vpack.c.bf16 %v2646, %v2646
        %v2679 = vpack.c.bf16 %v2647, %v2647
        %v2680 = vpack.c.bf16 %v2648, %v2648
        %v2681 = vpack.c.bf16 %v2649, %v2649
        %v2682 = vpack.c.bf16 %v2650, %v2650
        %v2683 = vpack.c.bf16 %v2651, %v2651
        %v2684 = vpack.c.bf16 %v2652, %v2652
        %v2685 = vpack.c.bf16 %v2653, %v2653
        %vm2686 = vcmask 60416
        %2687 = vst.msk [vmem:[#allocation5] sm:$0xf] %vm2686, %v2654
        %2688 = vst.msk [vmem:[#allocation5 + $0x4] sm:$0xf] %vm2686, %v2655
        %2689 = vst.msk [vmem:[#allocation5 + $0x8] sm:$0xf] %vm2686, %v2656
        %2690 = vst.msk [vmem:[#allocation5 + $0xc] sm:$0xf] %vm2686, %v2657
        %2691 = vst.msk [vmem:[#allocation5 + $0x10] sm:$0xf] %vm2686, %v2658
        %2692 = vst.msk [vmem:[#allocation5 + $0x14] sm:$0xf] %vm2686, %v2659
        %2693 = vst.msk [vmem:[#allocation5 + $0x18] sm:$0xf] %vm2686, %v2660
        %2694 = vst.msk [vmem:[#allocation5 + $0x1c] sm:$0xf] %vm2686, %v2661
        %2695 = vst.msk [vmem:[#allocation5 + $0x20] sm:$0xf] %vm2686, %v2662
        %2696 = vst.msk [vmem:[#allocation5 + $0x24] sm:$0xf] %vm2686, %v2663
        %2697 = vst.msk [vmem:[#allocation5 + $0x28] sm:$0xf] %vm2686, %v2664
        %2698 = vst.msk [vmem:[#allocation5 + $0x2c] sm:$0xf] %vm2686, %v2665
        %2699 = vst.msk [vmem:[#allocation5 + $0x30] sm:$0xf] %vm2686, %v2666
        %2700 = vst.msk [vmem:[#allocation5 + $0x34] sm:$0xf] %vm2686, %v2667
        %2701 = vst.msk [vmem:[#allocation5 + $0x38] sm:$0xf] %vm2686, %v2668
        %2702 = vst.msk [vmem:[#allocation5 + $0x3c] sm:$0xf] %vm2686, %v2669
        %2703 = vst.msk [vmem:[#allocation5 + $0x40] sm:$0xf] %vm2686, %v2670
        %2704 = vst.msk [vmem:[#allocation5 + $0x44] sm:$0xf] %vm2686, %v2671
        %2705 = vst.msk [vmem:[#allocation5 + $0x48] sm:$0xf] %vm2686, %v2672
        %2706 = vst.msk [vmem:[#allocation5 + $0x4c] sm:$0xf] %vm2686, %v2673
        %2707 = vst.msk [vmem:[#allocation5 + $0x50] sm:$0xf] %vm2686, %v2674
        %2708 = vst.msk [vmem:[#allocation5 + $0x54] sm:$0xf] %vm2686, %v2675
        %2709 = vst.msk [vmem:[#allocation5 + $0x58] sm:$0xf] %vm2686, %v2676
        %2710 = vst.msk [vmem:[#allocation5 + $0x5c] sm:$0xf] %vm2686, %v2677
        %2711 = vst.msk [vmem:[#allocation5 + $0x60] sm:$0xf] %vm2686, %v2678
        %2712 = vst.msk [vmem:[#allocation5 + $0x64] sm:$0xf] %vm2686, %v2679
        %2713 = vst.msk [vmem:[#allocation5 + $0x68] sm:$0xf] %vm2686, %v2680
        %2714 = vst.msk [vmem:[#allocation5 + $0x6c] sm:$0xf] %vm2686, %v2681
        %2715 = vst.msk [vmem:[#allocation5 + $0x70] sm:$0xf] %vm2686, %v2682
        %2716 = vst.msk [vmem:[#allocation5 + $0x74] sm:$0xf] %vm2686, %v2683
        %2717 = vst.msk [vmem:[#allocation5 + $0x78] sm:$0xf] %vm2686, %v2684
        %2718 = vst.msk [vmem:[#allocation5 + $0x7c] sm:$0xf] %vm2686, %v2685
        %v2719 = vld [vmem:[#allocation3 + $0x1] sm:$0xff]
        %v2720 = vld [vmem:[#allocation3 + $0x9] sm:$0xff]
        %v2721 = vld [vmem:[#allocation3 + $0x19] sm:$0xff]
        %v2722 = vld [vmem:[#allocation3 + $0x21] sm:$0xff]
        %v2723 = vld [vmem:[#allocation3 + $0x31] sm:$0xff]
        %v2724 = vld [vmem:[#allocation3 + $0x39] sm:$0xff]
        %v2725 = vld [vmem:[#allocation3 + $0x49] sm:$0xff]
        %v2726 = vld [vmem:[#allocation3 + $0x51] sm:$0xff]
        %v2727 = vld [vmem:[#allocation3 + $0x61] sm:$0xff]
        %v2728 = vld [vmem:[#allocation3 + $0x69] sm:$0xff]
        %v2729 = vld [vmem:[#allocation3 + $0x79] sm:$0xff]
        %v2730 = vld [vmem:[#allocation3 + $0x81] sm:$0xff]
        %v2731 = vld [vmem:[#allocation3 + $0x91] sm:$0xff]
        %v2732 = vld [vmem:[#allocation3 + $0x99] sm:$0xff]
        %v2733 = vld [vmem:[#allocation3 + $0xa9] sm:$0xff]
        %v2734 = vld [vmem:[#allocation3 + $0xb1] sm:$0xff]
        %v2735 = vld [vmem:[#allocation3 + $0xc1] sm:$0xff]
        %v2736 = vld [vmem:[#allocation3 + $0xc9] sm:$0xff]
        %v2737 = vld [vmem:[#allocation3 + $0xd9] sm:$0xff]
        %v2738 = vld [vmem:[#allocation3 + $0xe1] sm:$0xff]
        %v2739 = vld [vmem:[#allocation3 + $0xf1] sm:$0xff]
        %v2740 = vld [vmem:[#allocation3 + $0xf9] sm:$0xff]
        %v2741 = vld [vmem:[#allocation3 + $0x109] sm:$0xff]
        %v2742 = vld [vmem:[#allocation3 + $0x111] sm:$0xff]
        %v2743 = vld [vmem:[#allocation3 + $0x121] sm:$0xff]
        %v2744 = vld [vmem:[#allocation3 + $0x129] sm:$0xff]
        %v2745 = vld [vmem:[#allocation3 + $0x139] sm:$0xff]
        %v2746 = vld [vmem:[#allocation3 + $0x141] sm:$0xff]
        %v2747 = vld [vmem:[#allocation3 + $0x151] sm:$0xff]
        %v2748 = vld [vmem:[#allocation3 + $0x159] sm:$0xff]
        %v2749 = vld [vmem:[#allocation3 + $0x169] sm:$0xff]
        %v2750 = vld [vmem:[#allocation3 + $0x171] sm:$0xff]
        %v2751 = vpack.c.bf16 %v2719, %v2719
        %v2752 = vpack.c.bf16 %v2720, %v2720
        %v2753 = vpack.c.bf16 %v2721, %v2721
        %v2754 = vpack.c.bf16 %v2722, %v2722
        %v2755 = vpack.c.bf16 %v2723, %v2723
        %v2756 = vpack.c.bf16 %v2724, %v2724
        %v2757 = vpack.c.bf16 %v2725, %v2725
        %v2758 = vpack.c.bf16 %v2726, %v2726
        %v2759 = vpack.c.bf16 %v2727, %v2727
        %v2760 = vpack.c.bf16 %v2728, %v2728
        %v2761 = vpack.c.bf16 %v2729, %v2729
        %v2762 = vpack.c.bf16 %v2730, %v2730
        %v2763 = vpack.c.bf16 %v2731, %v2731
        %v2764 = vpack.c.bf16 %v2732, %v2732
        %v2765 = vpack.c.bf16 %v2733, %v2733
        %v2766 = vpack.c.bf16 %v2734, %v2734
        %v2767 = vpack.c.bf16 %v2735, %v2735
        %v2768 = vpack.c.bf16 %v2736, %v2736
        %v2769 = vpack.c.bf16 %v2737, %v2737
        %v2770 = vpack.c.bf16 %v2738, %v2738
        %v2771 = vpack.c.bf16 %v2739, %v2739
        %v2772 = vpack.c.bf16 %v2740, %v2740
        %v2773 = vpack.c.bf16 %v2741, %v2741
        %v2774 = vpack.c.bf16 %v2742, %v2742
        %v2775 = vpack.c.bf16 %v2743, %v2743
        %v2776 = vpack.c.bf16 %v2744, %v2744
        %v2777 = vpack.c.bf16 %v2745, %v2745
        %v2778 = vpack.c.bf16 %v2746, %v2746
        %v2779 = vpack.c.bf16 %v2747, %v2747
        %v2780 = vpack.c.bf16 %v2748, %v2748
        %v2781 = vpack.c.bf16 %v2749, %v2749
        %v2782 = vpack.c.bf16 %v2750, %v2750
        %2815 = vrot.lane.b32.xlu0 %v2751, 8
        %v2816 = vpop.permute.xlu0 %2815
        %2817 = vrot.lane.b32.xlu0 %v2752, 8
        %v2818 = vpop.permute.xlu0 %2817
        %2819 = vrot.lane.b32.xlu0 %v2753, 8
        %v2820 = vpop.permute.xlu0 %2819
        %2821 = vrot.lane.b32.xlu0 %v2754, 8
        %v2822 = vpop.permute.xlu0 %2821
        %2823 = vrot.lane.b32.xlu0 %v2755, 8
        %v2824 = vpop.permute.xlu0 %2823
        %2825 = vrot.lane.b32.xlu0 %v2756, 8
        %v2826 = vpop.permute.xlu0 %2825
        %2827 = vrot.lane.b32.xlu0 %v2757, 8
        %v2828 = vpop.permute.xlu0 %2827
        %2829 = vrot.lane.b32.xlu0 %v2758, 8
        %v2830 = vpop.permute.xlu0 %2829
        %2831 = vrot.lane.b32.xlu0 %v2759, 8
        %v2832 = vpop.permute.xlu0 %2831
        %2833 = vrot.lane.b32.xlu0 %v2760, 8
        %v2834 = vpop.permute.xlu0 %2833
        %2835 = vrot.lane.b32.xlu0 %v2761, 8
        %v2836 = vpop.permute.xlu0 %2835
        %2837 = vrot.lane.b32.xlu0 %v2762, 8
        %v2838 = vpop.permute.xlu0 %2837
        %2839 = vrot.lane.b32.xlu0 %v2763, 8
        %v2840 = vpop.permute.xlu0 %2839
        %2841 = vrot.lane.b32.xlu0 %v2764, 8
        %v2842 = vpop.permute.xlu0 %2841
        %2843 = vrot.lane.b32.xlu0 %v2765, 8
        %v2844 = vpop.permute.xlu0 %2843
        %2845 = vrot.lane.b32.xlu0 %v2766, 8
        %v2846 = vpop.permute.xlu0 %2845
        %2847 = vrot.lane.b32.xlu0 %v2767, 8
        %v2848 = vpop.permute.xlu0 %2847
        %2849 = vrot.lane.b32.xlu0 %v2768, 8
        %v2850 = vpop.permute.xlu0 %2849
        %2851 = vrot.lane.b32.xlu0 %v2769, 8
        %v2852 = vpop.permute.xlu0 %2851
        %2853 = vrot.lane.b32.xlu0 %v2770, 8
        %v2854 = vpop.permute.xlu0 %2853
        %2855 = vrot.lane.b32.xlu0 %v2771, 8
        %v2856 = vpop.permute.xlu0 %2855
        %2857 = vrot.lane.b32.xlu0 %v2772, 8
        %v2858 = vpop.permute.xlu0 %2857
        %2859 = vrot.lane.b32.xlu0 %v2773, 8
        %v2860 = vpop.permute.xlu0 %2859
        %2861 = vrot.lane.b32.xlu0 %v2774, 8
        %v2862 = vpop.permute.xlu0 %2861
        %2863 = vrot.lane.b32.xlu0 %v2775, 8
        %v2864 = vpop.permute.xlu0 %2863
        %2865 = vrot.lane.b32.xlu0 %v2776, 8
        %v2866 = vpop.permute.xlu0 %2865
        %2867 = vrot.lane.b32.xlu0 %v2777, 8
        %v2868 = vpop.permute.xlu0 %2867
        %2869 = vrot.lane.b32.xlu0 %v2778, 8
        %v2870 = vpop.permute.xlu0 %2869
        %2871 = vrot.lane.b32.xlu0 %v2779, 8
        %v2872 = vpop.permute.xlu0 %2871
        %2873 = vrot.lane.b32.xlu0 %v2780, 8
        %v2874 = vpop.permute.xlu0 %2873
        %2875 = vrot.lane.b32.xlu0 %v2781, 8
        %v2876 = vpop.permute.xlu0 %2875
        %2877 = vrot.lane.b32.xlu0 %v2782, 8
        %v2878 = vpop.permute.xlu0 %2877
        %vm2911 = vcmask 126016
        %2912 = vst.msk [vmem:[#allocation5] sm:$0xf] %vm2911, %v2816
        %2913 = vst.msk [vmem:[#allocation5 + $0x4] sm:$0xf] %vm2911, %v2818
        %2914 = vst.msk [vmem:[#allocation5 + $0x8] sm:$0xf] %vm2911, %v2820
        %2915 = vst.msk [vmem:[#allocation5 + $0xc] sm:$0xf] %vm2911, %v2822
        %2916 = vst.msk [vmem:[#allocation5 + $0x10] sm:$0xf] %vm2911, %v2824
        %2917 = vst.msk [vmem:[#allocation5 + $0x14] sm:$0xf] %vm2911, %v2826
        %2918 = vst.msk [vmem:[#allocation5 + $0x18] sm:$0xf] %vm2911, %v2828
        %2919 = vst.msk [vmem:[#allocation5 + $0x1c] sm:$0xf] %vm2911, %v2830
        %2920 = vst.msk [vmem:[#allocation5 + $0x20] sm:$0xf] %vm2911, %v2832
        %2921 = vst.msk [vmem:[#allocation5 + $0x24] sm:$0xf] %vm2911, %v2834
        %2922 = vst.msk [vmem:[#allocation5 + $0x28] sm:$0xf] %vm2911, %v2836
        %2923 = vst.msk [vmem:[#allocation5 + $0x2c] sm:$0xf] %vm2911, %v2838
        %2924 = vst.msk [vmem:[#allocation5 + $0x30] sm:$0xf] %vm2911, %v2840
        %2925 = vst.msk [vmem:[#allocation5 + $0x34] sm:$0xf] %vm2911, %v2842
        %2926 = vst.msk [vmem:[#allocation5 + $0x38] sm:$0xf] %vm2911, %v2844
        %2927 = vst.msk [vmem:[#allocation5 + $0x3c] sm:$0xf] %vm2911, %v2846
        %2928 = vst.msk [vmem:[#allocation5 + $0x40] sm:$0xf] %vm2911, %v2848
        %2929 = vst.msk [vmem:[#allocation5 + $0x44] sm:$0xf] %vm2911, %v2850
        %2930 = vst.msk [vmem:[#allocation5 + $0x48] sm:$0xf] %vm2911, %v2852
        %2931 = vst.msk [vmem:[#allocation5 + $0x4c] sm:$0xf] %vm2911, %v2854
        %2932 = vst.msk [vmem:[#allocation5 + $0x50] sm:$0xf] %vm2911, %v2856
        %2933 = vst.msk [vmem:[#allocation5 + $0x54] sm:$0xf] %vm2911, %v2858
        %2934 = vst.msk [vmem:[#allocation5 + $0x58] sm:$0xf] %vm2911, %v2860
        %2935 = vst.msk [vmem:[#allocation5 + $0x5c] sm:$0xf] %vm2911, %v2862
        %2936 = vst.msk [vmem:[#allocation5 + $0x60] sm:$0xf] %vm2911, %v2864
        %2937 = vst.msk [vmem:[#allocation5 + $0x64] sm:$0xf] %vm2911, %v2866
        %2938 = vst.msk [vmem:[#allocation5 + $0x68] sm:$0xf] %vm2911, %v2868
        %2939 = vst.msk [vmem:[#allocation5 + $0x6c] sm:$0xf] %vm2911, %v2870
        %2940 = vst.msk [vmem:[#allocation5 + $0x70] sm:$0xf] %vm2911, %v2872
        %2941 = vst.msk [vmem:[#allocation5 + $0x74] sm:$0xf] %vm2911, %v2874
        %2942 = vst.msk [vmem:[#allocation5 + $0x78] sm:$0xf] %vm2911, %v2876
        %2943 = vst.msk [vmem:[#allocation5 + $0x7c] sm:$0xf] %vm2911, %v2878
        %v2944 = vld [vmem:[#allocation3 + $0x2] sm:$0xff]
        %v2945 = vld [vmem:[#allocation3 + $0xa] sm:$0xff]
        %v2946 = vld [vmem:[#allocation3 + $0x1a] sm:$0xff]
        %v2947 = vld [vmem:[#allocation3 + $0x22] sm:$0xff]
        %v2948 = vld [vmem:[#allocation3 + $0x32] sm:$0xff]
        %v2949 = vld [vmem:[#allocation3 + $0x3a] sm:$0xff]
        %v2950 = vld [vmem:[#allocation3 + $0x4a] sm:$0xff]
        %v2951 = vld [vmem:[#allocation3 + $0x52] sm:$0xff]
        %v2952 = vld [vmem:[#allocation3 + $0x62] sm:$0xff]
        %v2953 = vld [vmem:[#allocation3 + $0x6a] sm:$0xff]
        %v2954 = vld [vmem:[#allocation3 + $0x7a] sm:$0xff]
        %v2955 = vld [vmem:[#allocation3 + $0x82] sm:$0xff]
        %v2956 = vld [vmem:[#allocation3 + $0x92] sm:$0xff]
        %v2957 = vld [vmem:[#allocation3 + $0x9a] sm:$0xff]
        %v2958 = vld [vmem:[#allocation3 + $0xaa] sm:$0xff]
        %v2959 = vld [vmem:[#allocation3 + $0xb2] sm:$0xff]
        %v2960 = vld [vmem:[#allocation3 + $0xc2] sm:$0xff]
        %v2961 = vld [vmem:[#allocation3 + $0xca] sm:$0xff]
        %v2962 = vld [vmem:[#allocation3 + $0xda] sm:$0xff]
        %v2963 = vld [vmem:[#allocation3 + $0xe2] sm:$0xff]
        %v2964 = vld [vmem:[#allocation3 + $0xf2] sm:$0xff]
        %v2965 = vld [vmem:[#allocation3 + $0xfa] sm:$0xff]
        %v2966 = vld [vmem:[#allocation3 + $0x10a] sm:$0xff]
        %v2967 = vld [vmem:[#allocation3 + $0x112] sm:$0xff]
        %v2968 = vld [vmem:[#allocation3 + $0x122] sm:$0xff]
        %v2969 = vld [vmem:[#allocation3 + $0x12a] sm:$0xff]
        %v2970 = vld [vmem:[#allocation3 + $0x13a] sm:$0xff]
        %v2971 = vld [vmem:[#allocation3 + $0x142] sm:$0xff]
        %v2972 = vld [vmem:[#allocation3 + $0x152] sm:$0xff]
        %v2973 = vld [vmem:[#allocation3 + $0x15a] sm:$0xff]
        %v2974 = vld [vmem:[#allocation3 + $0x16a] sm:$0xff]
        %v2975 = vld [vmem:[#allocation3 + $0x172] sm:$0xff]
        %v2976 = vpack.c.bf16 %v2944, %v2944
        %v2977 = vpack.c.bf16 %v2945, %v2945
        %v2978 = vpack.c.bf16 %v2946, %v2946
        %v2979 = vpack.c.bf16 %v2947, %v2947
        %v2980 = vpack.c.bf16 %v2948, %v2948
        %v2981 = vpack.c.bf16 %v2949, %v2949
        %v2982 = vpack.c.bf16 %v2950, %v2950
        %v2983 = vpack.c.bf16 %v2951, %v2951
        %v2984 = vpack.c.bf16 %v2952, %v2952
        %v2985 = vpack.c.bf16 %v2953, %v2953
        %v2986 = vpack.c.bf16 %v2954, %v2954
        %v2987 = vpack.c.bf16 %v2955, %v2955
        %v2988 = vpack.c.bf16 %v2956, %v2956
        %v2989 = vpack.c.bf16 %v2957, %v2957
        %v2990 = vpack.c.bf16 %v2958, %v2958
        %v2991 = vpack.c.bf16 %v2959, %v2959
        %v2992 = vpack.c.bf16 %v2960, %v2960
        %v2993 = vpack.c.bf16 %v2961, %v2961
        %v2994 = vpack.c.bf16 %v2962, %v2962
        %v2995 = vpack.c.bf16 %v2963, %v2963
        %v2996 = vpack.c.bf16 %v2964, %v2964
        %v2997 = vpack.c.bf16 %v2965, %v2965
        %v2998 = vpack.c.bf16 %v2966, %v2966
        %v2999 = vpack.c.bf16 %v2967, %v2967
        %v3000 = vpack.c.bf16 %v2968, %v2968
        %v3001 = vpack.c.bf16 %v2969, %v2969
        %v3002 = vpack.c.bf16 %v2970, %v2970
        %v3003 = vpack.c.bf16 %v2971, %v2971
        %v3004 = vpack.c.bf16 %v2972, %v2972
        %v3005 = vpack.c.bf16 %v2973, %v2973
        %v3006 = vpack.c.bf16 %v2974, %v2974
        %v3007 = vpack.c.bf16 %v2975, %v2975
        %3040 = vrot.lane.b32.xlu0 %v2976, 16
        %v3041 = vpop.permute.xlu0 %3040
        %3042 = vrot.lane.b32.xlu0 %v2977, 16
        %v3043 = vpop.permute.xlu0 %3042
        %3044 = vrot.lane.b32.xlu0 %v2978, 16
        %v3045 = vpop.permute.xlu0 %3044
        %3046 = vrot.lane.b32.xlu0 %v2979, 16
        %v3047 = vpop.permute.xlu0 %3046
        %3048 = vrot.lane.b32.xlu0 %v2980, 16
        %v3049 = vpop.permute.xlu0 %3048
        %3050 = vrot.lane.b32.xlu0 %v2981, 16
        %v3051 = vpop.permute.xlu0 %3050
        %3052 = vrot.lane.b32.xlu0 %v2982, 16
        %v3053 = vpop.permute.xlu0 %3052
        %3054 = vrot.lane.b32.xlu0 %v2983, 16
        %v3055 = vpop.permute.xlu0 %3054
        %3056 = vrot.lane.b32.xlu0 %v2984, 16
        %v3057 = vpop.permute.xlu0 %3056
        %3058 = vrot.lane.b32.xlu0 %v2985, 16
        %v3059 = vpop.permute.xlu0 %3058
        %3060 = vrot.lane.b32.xlu0 %v2986, 16
        %v3061 = vpop.permute.xlu0 %3060
        %3062 = vrot.lane.b32.xlu0 %v2987, 16
        %v3063 = vpop.permute.xlu0 %3062
        %3064 = vrot.lane.b32.xlu0 %v2988, 16
        %v3065 = vpop.permute.xlu0 %3064
        %3066 = vrot.lane.b32.xlu0 %v2989, 16
        %v3067 = vpop.permute.xlu0 %3066
        %3068 = vrot.lane.b32.xlu0 %v2990, 16
        %v3069 = vpop.permute.xlu0 %3068
        %3070 = vrot.lane.b32.xlu0 %v2991, 16
        %v3071 = vpop.permute.xlu0 %3070
        %3072 = vrot.lane.b32.xlu0 %v2992, 16
        %v3073 = vpop.permute.xlu0 %3072
        %3074 = vrot.lane.b32.xlu0 %v2993, 16
        %v3075 = vpop.permute.xlu0 %3074
        %3076 = vrot.lane.b32.xlu0 %v2994, 16
        %v3077 = vpop.permute.xlu0 %3076
        %3078 = vrot.lane.b32.xlu0 %v2995, 16
        %v3079 = vpop.permute.xlu0 %3078
        %3080 = vrot.lane.b32.xlu0 %v2996, 16
        %v3081 = vpop.permute.xlu0 %3080
        %3082 = vrot.lane.b32.xlu0 %v2997, 16
        %v3083 = vpop.permute.xlu0 %3082
        %3084 = vrot.lane.b32.xlu0 %v2998, 16
        %v3085 = vpop.permute.xlu0 %3084
        %3086 = vrot.lane.b32.xlu0 %v2999, 16
        %v3087 = vpop.permute.xlu0 %3086
        %3088 = vrot.lane.b32.xlu0 %v3000, 16
        %v3089 = vpop.permute.xlu0 %3088
        %3090 = vrot.lane.b32.xlu0 %v3001, 16
        %v3091 = vpop.permute.xlu0 %3090
        %3092 = vrot.lane.b32.xlu0 %v3002, 16
        %v3093 = vpop.permute.xlu0 %3092
        %3094 = vrot.lane.b32.xlu0 %v3003, 16
        %v3095 = vpop.permute.xlu0 %3094
        %3096 = vrot.lane.b32.xlu0 %v3004, 16
        %v3097 = vpop.permute.xlu0 %3096
        %3098 = vrot.lane.b32.xlu0 %v3005, 16
        %v3099 = vpop.permute.xlu0 %3098
        %3100 = vrot.lane.b32.xlu0 %v3006, 16
        %v3101 = vpop.permute.xlu0 %3100
        %3102 = vrot.lane.b32.xlu0 %v3007, 16
        %v3103 = vpop.permute.xlu0 %3102
        %vm3136 = vcmask 191616
        %3137 = vst.msk [vmem:[#allocation5] sm:$0xf] %vm3136, %v3041
        %3138 = vst.msk [vmem:[#allocation5 + $0x4] sm:$0xf] %vm3136, %v3043
        %3139 = vst.msk [vmem:[#allocation5 + $0x8] sm:$0xf] %vm3136, %v3045
        %3140 = vst.msk [vmem:[#allocation5 + $0xc] sm:$0xf] %vm3136, %v3047
        %3141 = vst.msk [vmem:[#allocation5 + $0x10] sm:$0xf] %vm3136, %v3049
        %3142 = vst.msk [vmem:[#allocation5 + $0x14] sm:$0xf] %vm3136, %v3051
        %3143 = vst.msk [vmem:[#allocation5 + $0x18] sm:$0xf] %vm3136, %v3053
        %3144 = vst.msk [vmem:[#allocation5 + $0x1c] sm:$0xf] %vm3136, %v3055
        %3145 = vst.msk [vmem:[#allocation5 + $0x20] sm:$0xf] %vm3136, %v3057
        %3146 = vst.msk [vmem:[#allocation5 + $0x24] sm:$0xf] %vm3136, %v3059
        %3147 = vst.msk [vmem:[#allocation5 + $0x28] sm:$0xf] %vm3136, %v3061
        %3148 = vst.msk [vmem:[#allocation5 + $0x2c] sm:$0xf] %vm3136, %v3063
        %3149 = vst.msk [vmem:[#allocation5 + $0x30] sm:$0xf] %vm3136, %v3065
        %3150 = vst.msk [vmem:[#allocation5 + $0x34] sm:$0xf] %vm3136, %v3067
        %3151 = vst.msk [vmem:[#allocation5 + $0x38] sm:$0xf] %vm3136, %v3069
        %3152 = vst.msk [vmem:[#allocation5 + $0x3c] sm:$0xf] %vm3136, %v3071
        %3153 = vst.msk [vmem:[#allocation5 + $0x40] sm:$0xf] %vm3136, %v3073
        %3154 = vst.msk [vmem:[#allocation5 + $0x44] sm:$0xf] %vm3136, %v3075
        %3155 = vst.msk [vmem:[#allocation5 + $0x48] sm:$0xf] %vm3136, %v3077
        %3156 = vst.msk [vmem:[#allocation5 + $0x4c] sm:$0xf] %vm3136, %v3079
        %3157 = vst.msk [vmem:[#allocation5 + $0x50] sm:$0xf] %vm3136, %v3081
        %3158 = vst.msk [vmem:[#allocation5 + $0x54] sm:$0xf] %vm3136, %v3083
        %3159 = vst.msk [vmem:[#allocation5 + $0x58] sm:$0xf] %vm3136, %v3085
        %3160 = vst.msk [vmem:[#allocation5 + $0x5c] sm:$0xf] %vm3136, %v3087
        %3161 = vst.msk [vmem:[#allocation5 + $0x60] sm:$0xf] %vm3136, %v3089
        %3162 = vst.msk [vmem:[#allocation5 + $0x64] sm:$0xf] %vm3136, %v3091
        %3163 = vst.msk [vmem:[#allocation5 + $0x68] sm:$0xf] %vm3136, %v3093
        %3164 = vst.msk [vmem:[#allocation5 + $0x6c] sm:$0xf] %vm3136, %v3095
        %3165 = vst.msk [vmem:[#allocation5 + $0x70] sm:$0xf] %vm3136, %v3097
        %3166 = vst.msk [vmem:[#allocation5 + $0x74] sm:$0xf] %vm3136, %v3099
        %3167 = vst.msk [vmem:[#allocation5 + $0x78] sm:$0xf] %vm3136, %v3101
        %3168 = vst.msk [vmem:[#allocation5 + $0x7c] sm:$0xf] %vm3136, %v3103
        %v3169 = vld [vmem:[%s2589] sm:$0xff]
        %v3170 = vld [vmem:[%s2589 + $0x8] sm:$0xff]
        %v3171 = vld [vmem:[%s2589 + $0x18] sm:$0xff]
        %v3172 = vld [vmem:[%s2589 + $0x20] sm:$0xff]
        %v3173 = vld [vmem:[%s2589 + $0x30] sm:$0xff]
        %v3174 = vld [vmem:[%s2589 + $0x38] sm:$0xff]
        %v3175 = vld [vmem:[%s2589 + $0x48] sm:$0xff]
        %v3176 = vld [vmem:[%s2589 + $0x50] sm:$0xff]
        %v3177 = vld [vmem:[%s2589 + $0x60] sm:$0xff]
        %v3178 = vld [vmem:[%s2589 + $0x68] sm:$0xff]
        %v3179 = vld [vmem:[%s2589 + $0x78] sm:$0xff]
        %v3180 = vld [vmem:[%s2589 + $0x80] sm:$0xff]
        %v3181 = vld [vmem:[%s2589 + $0x90] sm:$0xff]
        %v3182 = vld [vmem:[%s2589 + $0x98] sm:$0xff]
        %v3183 = vld [vmem:[%s2589 + $0xa8] sm:$0xff]
        %v3184 = vld [vmem:[%s2589 + $0xb0] sm:$0xff]
        %v3185 = vld [vmem:[%s2589 + $0xc0] sm:$0xff]
        %v3186 = vld [vmem:[%s2589 + $0xc8] sm:$0xff]
        %v3187 = vld [vmem:[%s2589 + $0xd8] sm:$0xff]
        %v3188 = vld [vmem:[%s2589 + $0xe0] sm:$0xff]
        %v3189 = vld [vmem:[%s2589 + $0xf0] sm:$0xff]
        %v3190 = vld [vmem:[%s2589 + $0xf8] sm:$0xff]
        %v3191 = vld [vmem:[%s2589 + $0x108] sm:$0xff]
        %v3192 = vld [vmem:[%s2589 + $0x110] sm:$0xff]
        %v3193 = vld [vmem:[%s2589 + $0x120] sm:$0xff]
        %v3194 = vld [vmem:[%s2589 + $0x128] sm:$0xff]
        %v3195 = vld [vmem:[%s2589 + $0x138] sm:$0xff]
        %v3196 = vld [vmem:[%s2589 + $0x140] sm:$0xff]
        %v3197 = vld [vmem:[%s2589 + $0x150] sm:$0xff]
        %v3198 = vld [vmem:[%s2589 + $0x158] sm:$0xff]
        %v3199 = vld [vmem:[%s2589 + $0x168] sm:$0xff]
        %v3200 = vld [vmem:[%s2589 + $0x170] sm:$0xff]
        %v3201 = vpack.c.bf16 %v3169, %v3169
        %v3202 = vpack.c.bf16 %v3170, %v3170
        %v3203 = vpack.c.bf16 %v3171, %v3171
        %v3204 = vpack.c.bf16 %v3172, %v3172
        %v3205 = vpack.c.bf16 %v3173, %v3173
        %v3206 = vpack.c.bf16 %v3174, %v3174
        %v3207 = vpack.c.bf16 %v3175, %v3175
        %v3208 = vpack.c.bf16 %v3176, %v3176
        %v3209 = vpack.c.bf16 %v3177, %v3177
        %v3210 = vpack.c.bf16 %v3178, %v3178
        %v3211 = vpack.c.bf16 %v3179, %v3179
        %v3212 = vpack.c.bf16 %v3180, %v3180
        %v3213 = vpack.c.bf16 %v3181, %v3181
        %v3214 = vpack.c.bf16 %v3182, %v3182
        %v3215 = vpack.c.bf16 %v3183, %v3183
        %v3216 = vpack.c.bf16 %v3184, %v3184
        %v3217 = vpack.c.bf16 %v3185, %v3185
        %v3218 = vpack.c.bf16 %v3186, %v3186
        %v3219 = vpack.c.bf16 %v3187, %v3187
        %v3220 = vpack.c.bf16 %v3188, %v3188
        %v3221 = vpack.c.bf16 %v3189, %v3189
        %v3222 = vpack.c.bf16 %v3190, %v3190
        %v3223 = vpack.c.bf16 %v3191, %v3191
        %v3224 = vpack.c.bf16 %v3192, %v3192
        %v3225 = vpack.c.bf16 %v3193, %v3193
        %v3226 = vpack.c.bf16 %v3194, %v3194
        %v3227 = vpack.c.bf16 %v3195, %v3195
        %v3228 = vpack.c.bf16 %v3196, %v3196
        %v3229 = vpack.c.bf16 %v3197, %v3197
        %v3230 = vpack.c.bf16 %v3198, %v3198
        %v3231 = vpack.c.bf16 %v3199, %v3199
        %v3232 = vpack.c.bf16 %v3200, %v3200
        %3265 = vrot.lane.b32.xlu0 %v3201, 24
        %v3266 = vpop.permute.xlu0 %3265
        %3267 = vrot.lane.b32.xlu0 %v3202, 24
        %v3268 = vpop.permute.xlu0 %3267
        %3269 = vrot.lane.b32.xlu0 %v3203, 24
        %v3270 = vpop.permute.xlu0 %3269
        %3271 = vrot.lane.b32.xlu0 %v3204, 24
        %v3272 = vpop.permute.xlu0 %3271
        %3273 = vrot.lane.b32.xlu0 %v3205, 24
        %v3274 = vpop.permute.xlu0 %3273
        %3275 = vrot.lane.b32.xlu0 %v3206, 24
        %v3276 = vpop.permute.xlu0 %3275
        %3277 = vrot.lane.b32.xlu0 %v3207, 24
        %v3278 = vpop.permute.xlu0 %3277
        %3279 = vrot.lane.b32.xlu0 %v3208, 24
        %v3280 = vpop.permute.xlu0 %3279
        %3281 = vrot.lane.b32.xlu0 %v3209, 24
        %v3282 = vpop.permute.xlu0 %3281
        %3283 = vrot.lane.b32.xlu0 %v3210, 24
        %v3284 = vpop.permute.xlu0 %3283
        %3285 = vrot.lane.b32.xlu0 %v3211, 24
        %v3286 = vpop.permute.xlu0 %3285
        %3287 = vrot.lane.b32.xlu0 %v3212, 24
        %v3288 = vpop.permute.xlu0 %3287
        %3289 = vrot.lane.b32.xlu0 %v3213, 24
        %v3290 = vpop.permute.xlu0 %3289
        %3291 = vrot.lane.b32.xlu0 %v3214, 24
        %v3292 = vpop.permute.xlu0 %3291
        %3293 = vrot.lane.b32.xlu0 %v3215, 24
        %v3294 = vpop.permute.xlu0 %3293
        %3295 = vrot.lane.b32.xlu0 %v3216, 24
        %v3296 = vpop.permute.xlu0 %3295
        %3297 = vrot.lane.b32.xlu0 %v3217, 24
        %v3298 = vpop.permute.xlu0 %3297
        %3299 = vrot.lane.b32.xlu0 %v3218, 24
        %v3300 = vpop.permute.xlu0 %3299
        %3301 = vrot.lane.b32.xlu0 %v3219, 24
        %v3302 = vpop.permute.xlu0 %3301
        %3303 = vrot.lane.b32.xlu0 %v3220, 24
        %v3304 = vpop.permute.xlu0 %3303
        %3305 = vrot.lane.b32.xlu0 %v3221, 24
        %v3306 = vpop.permute.xlu0 %3305
        %3307 = vrot.lane.b32.xlu0 %v3222, 24
        %v3308 = vpop.permute.xlu0 %3307
        %3309 = vrot.lane.b32.xlu0 %v3223, 24
        %v3310 = vpop.permute.xlu0 %3309
        %3311 = vrot.lane.b32.xlu0 %v3224, 24
        %v3312 = vpop.permute.xlu0 %3311
        %3313 = vrot.lane.b32.xlu0 %v3225, 24
        %v3314 = vpop.permute.xlu0 %3313
        %3315 = vrot.lane.b32.xlu0 %v3226, 24
        %v3316 = vpop.permute.xlu0 %3315
        %3317 = vrot.lane.b32.xlu0 %v3227, 24
        %v3318 = vpop.permute.xlu0 %3317
        %3319 = vrot.lane.b32.xlu0 %v3228, 24
        %v3320 = vpop.permute.xlu0 %3319
        %3321 = vrot.lane.b32.xlu0 %v3229, 24
        %v3322 = vpop.permute.xlu0 %3321
        %3323 = vrot.lane.b32.xlu0 %v3230, 24
        %v3324 = vpop.permute.xlu0 %3323
        %3325 = vrot.lane.b32.xlu0 %v3231, 24
        %v3326 = vpop.permute.xlu0 %3325
        %3327 = vrot.lane.b32.xlu0 %v3232, 24
        %v3328 = vpop.permute.xlu0 %3327
        %vm3361 = vcmask 257216
        %3362 = vst.msk [vmem:[#allocation5] sm:$0xf] %vm3361, %v3266
        %3363 = vst.msk [vmem:[#allocation5 + $0x4] sm:$0xf] %vm3361, %v3268
        %3364 = vst.msk [vmem:[#allocation5 + $0x8] sm:$0xf] %vm3361, %v3270
        %3365 = vst.msk [vmem:[#allocation5 + $0xc] sm:$0xf] %vm3361, %v3272
        %3366 = vst.msk [vmem:[#allocation5 + $0x10] sm:$0xf] %vm3361, %v3274
        %3367 = vst.msk [vmem:[#allocation5 + $0x14] sm:$0xf] %vm3361, %v3276
        %3368 = vst.msk [vmem:[#allocation5 + $0x18] sm:$0xf] %vm3361, %v3278
        %3369 = vst.msk [vmem:[#allocation5 + $0x1c] sm:$0xf] %vm3361, %v3280
        %3370 = vst.msk [vmem:[#allocation5 + $0x20] sm:$0xf] %vm3361, %v3282
        %3371 = vst.msk [vmem:[#allocation5 + $0x24] sm:$0xf] %vm3361, %v3284
        %3372 = vst.msk [vmem:[#allocation5 + $0x28] sm:$0xf] %vm3361, %v3286
        %3373 = vst.msk [vmem:[#allocation5 + $0x2c] sm:$0xf] %vm3361, %v3288
        %3374 = vst.msk [vmem:[#allocation5 + $0x30] sm:$0xf] %vm3361, %v3290
        %3375 = vst.msk [vmem:[#allocation5 + $0x34] sm:$0xf] %vm3361, %v3292
        %3376 = vst.msk [vmem:[#allocation5 + $0x38] sm:$0xf] %vm3361, %v3294
        %3377 = vst.msk [vmem:[#allocation5 + $0x3c] sm:$0xf] %vm3361, %v3296
        %3378 = vst.msk [vmem:[#allocation5 + $0x40] sm:$0xf] %vm3361, %v3298
        %3379 = vst.msk [vmem:[#allocation5 + $0x44] sm:$0xf] %vm3361, %v3300
        %3380 = vst.msk [vmem:[#allocation5 + $0x48] sm:$0xf] %vm3361, %v3302
        %3381 = vst.msk [vmem:[#allocation5 + $0x4c] sm:$0xf] %vm3361, %v3304
        %3382 = vst.msk [vmem:[#allocation5 + $0x50] sm:$0xf] %vm3361, %v3306
        %3383 = vst.msk [vmem:[#allocation5 + $0x54] sm:$0xf] %vm3361, %v3308
        %3384 = vst.msk [vmem:[#allocation5 + $0x58] sm:$0xf] %vm3361, %v3310
        %3385 = vst.msk [vmem:[#allocation5 + $0x5c] sm:$0xf] %vm3361, %v3312
        %3386 = vst.msk [vmem:[#allocation5 + $0x60] sm:$0xf] %vm3361, %v3314
        %3387 = vst.msk [vmem:[#allocation5 + $0x64] sm:$0xf] %vm3361, %v3316
        %3388 = vst.msk [vmem:[#allocation5 + $0x68] sm:$0xf] %vm3361, %v3318
        %3389 = vst.msk [vmem:[#allocation5 + $0x6c] sm:$0xf] %vm3361, %v3320
        %3390 = vst.msk [vmem:[#allocation5 + $0x70] sm:$0xf] %vm3361, %v3322
        %3391 = vst.msk [vmem:[#allocation5 + $0x74] sm:$0xf] %vm3361, %v3324
        %3392 = vst.msk [vmem:[#allocation5 + $0x78] sm:$0xf] %vm3361, %v3326
        %3393 = vst.msk [vmem:[#allocation5 + $0x7c] sm:$0xf] %vm3361, %v3328
        %v3394 = vld [vmem:[%s2589 + $0x1] sm:$0xff]
        %v3395 = vld [vmem:[%s2589 + $0x9] sm:$0xff]
        %v3396 = vld [vmem:[%s2589 + $0x19] sm:$0xff]
        %v3397 = vld [vmem:[%s2589 + $0x21] sm:$0xff]
        %v3398 = vld [vmem:[%s2589 + $0x31] sm:$0xff]
        %v3399 = vld [vmem:[%s2589 + $0x39] sm:$0xff]
        %v3400 = vld [vmem:[%s2589 + $0x49] sm:$0xff]
        %v3401 = vld [vmem:[%s2589 + $0x51] sm:$0xff]
        %v3402 = vld [vmem:[%s2589 + $0x61] sm:$0xff]
        %v3403 = vld [vmem:[%s2589 + $0x69] sm:$0xff]
        %v3404 = vld [vmem:[%s2589 + $0x79] sm:$0xff]
        %v3405 = vld [vmem:[%s2589 + $0x81] sm:$0xff]
        %v3406 = vld [vmem:[%s2589 + $0x91] sm:$0xff]
        %v3407 = vld [vmem:[%s2589 + $0x99] sm:$0xff]
        %v3408 = vld [vmem:[%s2589 + $0xa9] sm:$0xff]
        %v3409 = vld [vmem:[%s2589 + $0xb1] sm:$0xff]
        %v3410 = vld [vmem:[%s2589 + $0xc1] sm:$0xff]
        %v3411 = vld [vmem:[%s2589 + $0xc9] sm:$0xff]
        %v3412 = vld [vmem:[%s2589 + $0xd9] sm:$0xff]
        %v3413 = vld [vmem:[%s2589 + $0xe1] sm:$0xff]
        %v3414 = vld [vmem:[%s2589 + $0xf1] sm:$0xff]
        %v3415 = vld [vmem:[%s2589 + $0xf9] sm:$0xff]
        %v3416 = vld [vmem:[%s2589 + $0x109] sm:$0xff]
        %v3417 = vld [vmem:[%s2589 + $0x111] sm:$0xff]
        %v3418 = vld [vmem:[%s2589 + $0x121] sm:$0xff]
        %v3419 = vld [vmem:[%s2589 + $0x129] sm:$0xff]
        %v3420 = vld [vmem:[%s2589 + $0x139] sm:$0xff]
        %v3421 = vld [vmem:[%s2589 + $0x141] sm:$0xff]
        %v3422 = vld [vmem:[%s2589 + $0x151] sm:$0xff]
        %v3423 = vld [vmem:[%s2589 + $0x159] sm:$0xff]
        %v3424 = vld [vmem:[%s2589 + $0x169] sm:$0xff]
        %v3425 = vld [vmem:[%s2589 + $0x171] sm:$0xff]
        %v3426 = vpack.c.bf16 %v3394, %v3394
        %v3427 = vpack.c.bf16 %v3395, %v3395
        %v3428 = vpack.c.bf16 %v3396, %v3396
        %v3429 = vpack.c.bf16 %v3397, %v3397
        %v3430 = vpack.c.bf16 %v3398, %v3398
        %v3431 = vpack.c.bf16 %v3399, %v3399
        %v3432 = vpack.c.bf16 %v3400, %v3400
        %v3433 = vpack.c.bf16 %v3401, %v3401
        %v3434 = vpack.c.bf16 %v3402, %v3402
        %v3435 = vpack.c.bf16 %v3403, %v3403
        %v3436 = vpack.c.bf16 %v3404, %v3404
        %v3437 = vpack.c.bf16 %v3405, %v3405
        %v3438 = vpack.c.bf16 %v3406, %v3406
        %v3439 = vpack.c.bf16 %v3407, %v3407
        %v3440 = vpack.c.bf16 %v3408, %v3408
        %v3441 = vpack.c.bf16 %v3409, %v3409
        %v3442 = vpack.c.bf16 %v3410, %v3410
        %v3443 = vpack.c.bf16 %v3411, %v3411
        %v3444 = vpack.c.bf16 %v3412, %v3412
        %v3445 = vpack.c.bf16 %v3413, %v3413
        %v3446 = vpack.c.bf16 %v3414, %v3414
        %v3447 = vpack.c.bf16 %v3415, %v3415
        %v3448 = vpack.c.bf16 %v3416, %v3416
        %v3449 = vpack.c.bf16 %v3417, %v3417
        %v3450 = vpack.c.bf16 %v3418, %v3418
        %v3451 = vpack.c.bf16 %v3419, %v3419
        %v3452 = vpack.c.bf16 %v3420, %v3420
        %v3453 = vpack.c.bf16 %v3421, %v3421
        %v3454 = vpack.c.bf16 %v3422, %v3422
        %v3455 = vpack.c.bf16 %v3423, %v3423
        %v3456 = vpack.c.bf16 %v3424, %v3424
        %v3457 = vpack.c.bf16 %v3425, %v3425
        %3490 = vrot.lane.b32.xlu0 %v3426, 32
        %v3491 = vpop.permute.xlu0 %3490
        %3492 = vrot.lane.b32.xlu0 %v3427, 32
        %v3493 = vpop.permute.xlu0 %3492
        %3494 = vrot.lane.b32.xlu0 %v3428, 32
        %v3495 = vpop.permute.xlu0 %3494
        %3496 = vrot.lane.b32.xlu0 %v3429, 32
        %v3497 = vpop.permute.xlu0 %3496
        %3498 = vrot.lane.b32.xlu0 %v3430, 32
        %v3499 = vpop.permute.xlu0 %3498
        %3500 = vrot.lane.b32.xlu0 %v3431, 32
        %v3501 = vpop.permute.xlu0 %3500
        %3502 = vrot.lane.b32.xlu0 %v3432, 32
        %v3503 = vpop.permute.xlu0 %3502
        %3504 = vrot.lane.b32.xlu0 %v3433, 32
        %v3505 = vpop.permute.xlu0 %3504
        %3506 = vrot.lane.b32.xlu0 %v3434, 32
        %v3507 = vpop.permute.xlu0 %3506
        %3508 = vrot.lane.b32.xlu0 %v3435, 32
        %v3509 = vpop.permute.xlu0 %3508
        %3510 = vrot.lane.b32.xlu0 %v3436, 32
        %v3511 = vpop.permute.xlu0 %3510
        %3512 = vrot.lane.b32.xlu0 %v3437, 32
        %v3513 = vpop.permute.xlu0 %3512
        %3514 = vrot.lane.b32.xlu0 %v3438, 32
        %v3515 = vpop.permute.xlu0 %3514
        %3516 = vrot.lane.b32.xlu0 %v3439, 32
        %v3517 = vpop.permute.xlu0 %3516
        %3518 = vrot.lane.b32.xlu0 %v3440, 32
        %v3519 = vpop.permute.xlu0 %3518
        %3520 = vrot.lane.b32.xlu0 %v3441, 32
        %v3521 = vpop.permute.xlu0 %3520
        %3522 = vrot.lane.b32.xlu0 %v3442, 32
        %v3523 = vpop.permute.xlu0 %3522
        %3524 = vrot.lane.b32.xlu0 %v3443, 32
        %v3525 = vpop.permute.xlu0 %3524
        %3526 = vrot.lane.b32.xlu0 %v3444, 32
        %v3527 = vpop.permute.xlu0 %3526
        %3528 = vrot.lane.b32.xlu0 %v3445, 32
        %v3529 = vpop.permute.xlu0 %3528
        %3530 = vrot.lane.b32.xlu0 %v3446, 32
        %v3531 = vpop.permute.xlu0 %3530
        %3532 = vrot.lane.b32.xlu0 %v3447, 32
        %v3533 = vpop.permute.xlu0 %3532
        %3534 = vrot.lane.b32.xlu0 %v3448, 32
        %v3535 = vpop.permute.xlu0 %3534
        %3536 = vrot.lane.b32.xlu0 %v3449, 32
        %v3537 = vpop.permute.xlu0 %3536
        %3538 = vrot.lane.b32.xlu0 %v3450, 32
        %v3539 = vpop.permute.xlu0 %3538
        %3540 = vrot.lane.b32.xlu0 %v3451, 32
        %v3541 = vpop.permute.xlu0 %3540
        %3542 = vrot.lane.b32.xlu0 %v3452, 32
        %v3543 = vpop.permute.xlu0 %3542
        %3544 = vrot.lane.b32.xlu0 %v3453, 32
        %v3545 = vpop.permute.xlu0 %3544
        %3546 = vrot.lane.b32.xlu0 %v3454, 32
        %v3547 = vpop.permute.xlu0 %3546
        %3548 = vrot.lane.b32.xlu0 %v3455, 32
        %v3549 = vpop.permute.xlu0 %3548
        %3550 = vrot.lane.b32.xlu0 %v3456, 32
        %v3551 = vpop.permute.xlu0 %3550
        %3552 = vrot.lane.b32.xlu0 %v3457, 32
        %v3553 = vpop.permute.xlu0 %3552
        %vm3586 = vcmask 322816
        %3587 = vst.msk [vmem:[#allocation5] sm:$0xf] %vm3586, %v3491
        %3588 = vst.msk [vmem:[#allocation5 + $0x4] sm:$0xf] %vm3586, %v3493
        %3589 = vst.msk [vmem:[#allocation5 + $0x8] sm:$0xf] %vm3586, %v3495
        %3590 = vst.msk [vmem:[#allocation5 + $0xc] sm:$0xf] %vm3586, %v3497
        %3591 = vst.msk [vmem:[#allocation5 + $0x10] sm:$0xf] %vm3586, %v3499
        %3592 = vst.msk [vmem:[#allocation5 + $0x14] sm:$0xf] %vm3586, %v3501
        %3593 = vst.msk [vmem:[#allocation5 + $0x18] sm:$0xf] %vm3586, %v3503
        %3594 = vst.msk [vmem:[#allocation5 + $0x1c] sm:$0xf] %vm3586, %v3505
        %3595 = vst.msk [vmem:[#allocation5 + $0x20] sm:$0xf] %vm3586, %v3507
        %3596 = vst.msk [vmem:[#allocation5 + $0x24] sm:$0xf] %vm3586, %v3509
        %3597 = vst.msk [vmem:[#allocation5 + $0x28] sm:$0xf] %vm3586, %v3511
        %3598 = vst.msk [vmem:[#allocation5 + $0x2c] sm:$0xf] %vm3586, %v3513
        %3599 = vst.msk [vmem:[#allocation5 + $0x30] sm:$0xf] %vm3586, %v3515
        %3600 = vst.msk [vmem:[#allocation5 + $0x34] sm:$0xf] %vm3586, %v3517
        %3601 = vst.msk [vmem:[#allocation5 + $0x38] sm:$0xf] %vm3586, %v3519
        %3602 = vst.msk [vmem:[#allocation5 + $0x3c] sm:$0xf] %vm3586, %v3521
        %3603 = vst.msk [vmem:[#allocation5 + $0x40] sm:$0xf] %vm3586, %v3523
        %3604 = vst.msk [vmem:[#allocation5 + $0x44] sm:$0xf] %vm3586, %v3525
        %3605 = vst.msk [vmem:[#allocation5 + $0x48] sm:$0xf] %vm3586, %v3527
        %3606 = vst.msk [vmem:[#allocation5 + $0x4c] sm:$0xf] %vm3586, %v3529
        %3607 = vst.msk [vmem:[#allocation5 + $0x50] sm:$0xf] %vm3586, %v3531
        %3608 = vst.msk [vmem:[#allocation5 + $0x54] sm:$0xf] %vm3586, %v3533
        %3609 = vst.msk [vmem:[#allocation5 + $0x58] sm:$0xf] %vm3586, %v3535
        %3610 = vst.msk [vmem:[#allocation5 + $0x5c] sm:$0xf] %vm3586, %v3537
        %3611 = vst.msk [vmem:[#allocation5 + $0x60] sm:$0xf] %vm3586, %v3539
        %3612 = vst.msk [vmem:[#allocation5 + $0x64] sm:$0xf] %vm3586, %v3541
        %3613 = vst.msk [vmem:[#allocation5 + $0x68] sm:$0xf] %vm3586, %v3543
        %3614 = vst.msk [vmem:[#allocation5 + $0x6c] sm:$0xf] %vm3586, %v3545
        %3615 = vst.msk [vmem:[#allocation5 + $0x70] sm:$0xf] %vm3586, %v3547
        %3616 = vst.msk [vmem:[#allocation5 + $0x74] sm:$0xf] %vm3586, %v3549
        %3617 = vst.msk [vmem:[#allocation5 + $0x78] sm:$0xf] %vm3586, %v3551
        %3618 = vst.msk [vmem:[#allocation5 + $0x7c] sm:$0xf] %vm3586, %v3553
        %v3619 = vld [vmem:[%s2589 + $0x2] sm:$0xff]
        %v3620 = vld [vmem:[%s2589 + $0xa] sm:$0xff]
        %v3621 = vld [vmem:[%s2589 + $0x1a] sm:$0xff]
        %v3622 = vld [vmem:[%s2589 + $0x22] sm:$0xff]
        %v3623 = vld [vmem:[%s2589 + $0x32] sm:$0xff]
        %v3624 = vld [vmem:[%s2589 + $0x3a] sm:$0xff]
        %v3625 = vld [vmem:[%s2589 + $0x4a] sm:$0xff]
        %v3626 = vld [vmem:[%s2589 + $0x52] sm:$0xff]
        %v3627 = vld [vmem:[%s2589 + $0x62] sm:$0xff]
        %v3628 = vld [vmem:[%s2589 + $0x6a] sm:$0xff]
        %v3629 = vld [vmem:[%s2589 + $0x7a] sm:$0xff]
        %v3630 = vld [vmem:[%s2589 + $0x82] sm:$0xff]
        %v3631 = vld [vmem:[%s2589 + $0x92] sm:$0xff]
        %v3632 = vld [vmem:[%s2589 + $0x9a] sm:$0xff]
        %v3633 = vld [vmem:[%s2589 + $0xaa] sm:$0xff]
        %v3634 = vld [vmem:[%s2589 + $0xb2] sm:$0xff]
        %v3635 = vld [vmem:[%s2589 + $0xc2] sm:$0xff]
        %v3636 = vld [vmem:[%s2589 + $0xca] sm:$0xff]
        %v3637 = vld [vmem:[%s2589 + $0xda] sm:$0xff]
        %v3638 = vld [vmem:[%s2589 + $0xe2] sm:$0xff]
        %v3639 = vld [vmem:[%s2589 + $0xf2] sm:$0xff]
        %v3640 = vld [vmem:[%s2589 + $0xfa] sm:$0xff]
        %v3641 = vld [vmem:[%s2589 + $0x10a] sm:$0xff]
        %v3642 = vld [vmem:[%s2589 + $0x112] sm:$0xff]
        %v3643 = vld [vmem:[%s2589 + $0x122] sm:$0xff]
        %v3644 = vld [vmem:[%s2589 + $0x12a] sm:$0xff]
        %v3645 = vld [vmem:[%s2589 + $0x13a] sm:$0xff]
        %v3646 = vld [vmem:[%s2589 + $0x142] sm:$0xff]
        %v3647 = vld [vmem:[%s2589 + $0x152] sm:$0xff]
        %v3648 = vld [vmem:[%s2589 + $0x15a] sm:$0xff]
        %v3649 = vld [vmem:[%s2589 + $0x16a] sm:$0xff]
        %v3650 = vld [vmem:[%s2589 + $0x172] sm:$0xff]
        %v3651 = vpack.c.bf16 %v3619, %v3619
        %v3652 = vpack.c.bf16 %v3620, %v3620
        %v3653 = vpack.c.bf16 %v3621, %v3621
        %v3654 = vpack.c.bf16 %v3622, %v3622
        %v3655 = vpack.c.bf16 %v3623, %v3623
        %v3656 = vpack.c.bf16 %v3624, %v3624
        %v3657 = vpack.c.bf16 %v3625, %v3625
        %v3658 = vpack.c.bf16 %v3626, %v3626
        %v3659 = vpack.c.bf16 %v3627, %v3627
        %v3660 = vpack.c.bf16 %v3628, %v3628
        %v3661 = vpack.c.bf16 %v3629, %v3629
        %v3662 = vpack.c.bf16 %v3630, %v3630
        %v3663 = vpack.c.bf16 %v3631, %v3631
        %v3664 = vpack.c.bf16 %v3632, %v3632
        %v3665 = vpack.c.bf16 %v3633, %v3633
        %v3666 = vpack.c.bf16 %v3634, %v3634
        %v3667 = vpack.c.bf16 %v3635, %v3635
        %v3668 = vpack.c.bf16 %v3636, %v3636
        %v3669 = vpack.c.bf16 %v3637, %v3637
        %v3670 = vpack.c.bf16 %v3638, %v3638
        %v3671 = vpack.c.bf16 %v3639, %v3639
        %v3672 = vpack.c.bf16 %v3640, %v3640
        %v3673 = vpack.c.bf16 %v3641, %v3641
        %v3674 = vpack.c.bf16 %v3642, %v3642
        %v3675 = vpack.c.bf16 %v3643, %v3643
        %v3676 = vpack.c.bf16 %v3644, %v3644
        %v3677 = vpack.c.bf16 %v3645, %v3645
        %v3678 = vpack.c.bf16 %v3646, %v3646
        %v3679 = vpack.c.bf16 %v3647, %v3647
        %v3680 = vpack.c.bf16 %v3648, %v3648
        %v3681 = vpack.c.bf16 %v3649, %v3649
        %v3682 = vpack.c.bf16 %v3650, %v3650
        %3715 = vrot.lane.b32.xlu0 %v3651, 40
        %v3716 = vpop.permute.xlu0 %3715
        %3717 = vrot.lane.b32.xlu0 %v3652, 40
        %v3718 = vpop.permute.xlu0 %3717
        %3719 = vrot.lane.b32.xlu0 %v3653, 40
        %v3720 = vpop.permute.xlu0 %3719
        %3721 = vrot.lane.b32.xlu0 %v3654, 40
        %v3722 = vpop.permute.xlu0 %3721
        %3723 = vrot.lane.b32.xlu0 %v3655, 40
        %v3724 = vpop.permute.xlu0 %3723
        %3725 = vrot.lane.b32.xlu0 %v3656, 40
        %v3726 = vpop.permute.xlu0 %3725
        %3727 = vrot.lane.b32.xlu0 %v3657, 40
        %v3728 = vpop.permute.xlu0 %3727
        %3729 = vrot.lane.b32.xlu0 %v3658, 40
        %v3730 = vpop.permute.xlu0 %3729
        %3731 = vrot.lane.b32.xlu0 %v3659, 40
        %v3732 = vpop.permute.xlu0 %3731
        %3733 = vrot.lane.b32.xlu0 %v3660, 40
        %v3734 = vpop.permute.xlu0 %3733
        %3735 = vrot.lane.b32.xlu0 %v3661, 40
        %v3736 = vpop.permute.xlu0 %3735
        %3737 = vrot.lane.b32.xlu0 %v3662, 40
        %v3738 = vpop.permute.xlu0 %3737
        %3739 = vrot.lane.b32.xlu0 %v3663, 40
        %v3740 = vpop.permute.xlu0 %3739
        %3741 = vrot.lane.b32.xlu0 %v3664, 40
        %v3742 = vpop.permute.xlu0 %3741
        %3743 = vrot.lane.b32.xlu0 %v3665, 40
        %v3744 = vpop.permute.xlu0 %3743
        %3745 = vrot.lane.b32.xlu0 %v3666, 40
        %v3746 = vpop.permute.xlu0 %3745
        %3747 = vrot.lane.b32.xlu0 %v3667, 40
        %v3748 = vpop.permute.xlu0 %3747
        %3749 = vrot.lane.b32.xlu0 %v3668, 40
        %v3750 = vpop.permute.xlu0 %3749
        %3751 = vrot.lane.b32.xlu0 %v3669, 40
        %v3752 = vpop.permute.xlu0 %3751
        %3753 = vrot.lane.b32.xlu0 %v3670, 40
        %v3754 = vpop.permute.xlu0 %3753
        %3755 = vrot.lane.b32.xlu0 %v3671, 40
        %v3756 = vpop.permute.xlu0 %3755
        %3757 = vrot.lane.b32.xlu0 %v3672, 40
        %v3758 = vpop.permute.xlu0 %3757
        %3759 = vrot.lane.b32.xlu0 %v3673, 40
        %v3760 = vpop.permute.xlu0 %3759
        %3761 = vrot.lane.b32.xlu0 %v3674, 40
        %v3762 = vpop.permute.xlu0 %3761
        %3763 = vrot.lane.b32.xlu0 %v3675, 40
        %v3764 = vpop.permute.xlu0 %3763
        %3765 = vrot.lane.b32.xlu0 %v3676, 40
        %v3766 = vpop.permute.xlu0 %3765
        %3767 = vrot.lane.b32.xlu0 %v3677, 40
        %v3768 = vpop.permute.xlu0 %3767
        %3769 = vrot.lane.b32.xlu0 %v3678, 40
        %v3770 = vpop.permute.xlu0 %3769
        %3771 = vrot.lane.b32.xlu0 %v3679, 40
        %v3772 = vpop.permute.xlu0 %3771
        %3773 = vrot.lane.b32.xlu0 %v3680, 40
        %v3774 = vpop.permute.xlu0 %3773
        %3775 = vrot.lane.b32.xlu0 %v3681, 40
        %v3776 = vpop.permute.xlu0 %3775
        %3777 = vrot.lane.b32.xlu0 %v3682, 40
        %v3778 = vpop.permute.xlu0 %3777
        %vm3811 = vcmask 388416
        %3812 = vst.msk [vmem:[#allocation5] sm:$0xf] %vm3811, %v3716
        %3813 = vst.msk [vmem:[#allocation5 + $0x4] sm:$0xf] %vm3811, %v3718
        %3814 = vst.msk [vmem:[#allocation5 + $0x8] sm:$0xf] %vm3811, %v3720
        %3815 = vst.msk [vmem:[#allocation5 + $0xc] sm:$0xf] %vm3811, %v3722
        %3816 = vst.msk [vmem:[#allocation5 + $0x10] sm:$0xf] %vm3811, %v3724
        %3817 = vst.msk [vmem:[#allocation5 + $0x14] sm:$0xf] %vm3811, %v3726
        %3818 = vst.msk [vmem:[#allocation5 + $0x18] sm:$0xf] %vm3811, %v3728
        %3819 = vst.msk [vmem:[#allocation5 + $0x1c] sm:$0xf] %vm3811, %v3730
        %3820 = vst.msk [vmem:[#allocation5 + $0x20] sm:$0xf] %vm3811, %v3732
        %3821 = vst.msk [vmem:[#allocation5 + $0x24] sm:$0xf] %vm3811, %v3734
        %3822 = vst.msk [vmem:[#allocation5 + $0x28] sm:$0xf] %vm3811, %v3736
        %3823 = vst.msk [vmem:[#allocation5 + $0x2c] sm:$0xf] %vm3811, %v3738
        %3824 = vst.msk [vmem:[#allocation5 + $0x30] sm:$0xf] %vm3811, %v3740
        %3825 = vst.msk [vmem:[#allocation5 + $0x34] sm:$0xf] %vm3811, %v3742
        %3826 = vst.msk [vmem:[#allocation5 + $0x38] sm:$0xf] %vm3811, %v3744
        %3827 = vst.msk [vmem:[#allocation5 + $0x3c] sm:$0xf] %vm3811, %v3746
        %3828 = vst.msk [vmem:[#allocation5 + $0x40] sm:$0xf] %vm3811, %v3748
        %3829 = vst.msk [vmem:[#allocation5 + $0x44] sm:$0xf] %vm3811, %v3750
        %3830 = vst.msk [vmem:[#allocation5 + $0x48] sm:$0xf] %vm3811, %v3752
        %3831 = vst.msk [vmem:[#allocation5 + $0x4c] sm:$0xf] %vm3811, %v3754
        %3832 = vst.msk [vmem:[#allocation5 + $0x50] sm:$0xf] %vm3811, %v3756
        %3833 = vst.msk [vmem:[#allocation5 + $0x54] sm:$0xf] %vm3811, %v3758
        %3834 = vst.msk [vmem:[#allocation5 + $0x58] sm:$0xf] %vm3811, %v3760
        %3835 = vst.msk [vmem:[#allocation5 + $0x5c] sm:$0xf] %vm3811, %v3762
        %3836 = vst.msk [vmem:[#allocation5 + $0x60] sm:$0xf] %vm3811, %v3764
        %3837 = vst.msk [vmem:[#allocation5 + $0x64] sm:$0xf] %vm3811, %v3766
        %3838 = vst.msk [vmem:[#allocation5 + $0x68] sm:$0xf] %vm3811, %v3768
        %3839 = vst.msk [vmem:[#allocation5 + $0x6c] sm:$0xf] %vm3811, %v3770
        %3840 = vst.msk [vmem:[#allocation5 + $0x70] sm:$0xf] %vm3811, %v3772
        %3841 = vst.msk [vmem:[#allocation5 + $0x74] sm:$0xf] %vm3811, %v3774
        %3842 = vst.msk [vmem:[#allocation5 + $0x78] sm:$0xf] %vm3811, %v3776
        %3843 = vst.msk [vmem:[#allocation5 + $0x7c] sm:$0xf] %vm3811, %v3778
        %s3844 = scalar_lea.vmem [#allocation3], 48
        %v3845 = vld [vmem:[%s3844] sm:$0xff]
        %v3846 = vld [vmem:[%s3844 + $0x8] sm:$0xff]
        %v3847 = vld [vmem:[%s3844 + $0x18] sm:$0xff]
        %v3848 = vld [vmem:[%s3844 + $0x20] sm:$0xff]
        %v3849 = vld [vmem:[%s3844 + $0x30] sm:$0xff]
        %v3850 = vld [vmem:[%s3844 + $0x38] sm:$0xff]
        %v3851 = vld [vmem:[%s3844 + $0x48] sm:$0xff]
        %v3852 = vld [vmem:[%s3844 + $0x50] sm:$0xff]
        %v3853 = vld [vmem:[%s3844 + $0x60] sm:$0xff]
        %v3854 = vld [vmem:[%s3844 + $0x68] sm:$0xff]
        %v3855 = vld [vmem:[%s3844 + $0x78] sm:$0xff]
        %v3856 = vld [vmem:[%s3844 + $0x80] sm:$0xff]
        %v3857 = vld [vmem:[%s3844 + $0x90] sm:$0xff]
        %v3858 = vld [vmem:[%s3844 + $0x98] sm:$0xff]
        %v3859 = vld [vmem:[%s3844 + $0xa8] sm:$0xff]
        %v3860 = vld [vmem:[%s3844 + $0xb0] sm:$0xff]
        %v3861 = vld [vmem:[%s3844 + $0xc0] sm:$0xff]
        %v3862 = vld [vmem:[%s3844 + $0xc8] sm:$0xff]
        %v3863 = vld [vmem:[%s3844 + $0xd8] sm:$0xff]
        %v3864 = vld [vmem:[%s3844 + $0xe0] sm:$0xff]
        %v3865 = vld [vmem:[%s3844 + $0xf0] sm:$0xff]
        %v3866 = vld [vmem:[%s3844 + $0xf8] sm:$0xff]
        %v3867 = vld [vmem:[%s3844 + $0x108] sm:$0xff]
        %v3868 = vld [vmem:[%s3844 + $0x110] sm:$0xff]
        %v3869 = vld [vmem:[%s3844 + $0x120] sm:$0xff]
        %v3870 = vld [vmem:[%s3844 + $0x128] sm:$0xff]
        %v3871 = vld [vmem:[%s3844 + $0x138] sm:$0xff]
        %v3872 = vld [vmem:[%s3844 + $0x140] sm:$0xff]
        %v3873 = vld [vmem:[%s3844 + $0x150] sm:$0xff]
        %v3874 = vld [vmem:[%s3844 + $0x158] sm:$0xff]
        %v3875 = vld [vmem:[%s3844 + $0x168] sm:$0xff]
        %v3876 = vld [vmem:[%s3844 + $0x170] sm:$0xff]
        %v3877 = vpack.c.bf16 %v3845, %v3845
        %v3878 = vpack.c.bf16 %v3846, %v3846
        %v3879 = vpack.c.bf16 %v3847, %v3847
        %v3880 = vpack.c.bf16 %v3848, %v3848
        %v3881 = vpack.c.bf16 %v3849, %v3849
        %v3882 = vpack.c.bf16 %v3850, %v3850
        %v3883 = vpack.c.bf16 %v3851, %v3851
        %v3884 = vpack.c.bf16 %v3852, %v3852
        %v3885 = vpack.c.bf16 %v3853, %v3853
        %v3886 = vpack.c.bf16 %v3854, %v3854
        %v3887 = vpack.c.bf16 %v3855, %v3855
        %v3888 = vpack.c.bf16 %v3856, %v3856
        %v3889 = vpack.c.bf16 %v3857, %v3857
        %v3890 = vpack.c.bf16 %v3858, %v3858
        %v3891 = vpack.c.bf16 %v3859, %v3859
        %v3892 = vpack.c.bf16 %v3860, %v3860
        %v3893 = vpack.c.bf16 %v3861, %v3861
        %v3894 = vpack.c.bf16 %v3862, %v3862
        %v3895 = vpack.c.bf16 %v3863, %v3863
        %v3896 = vpack.c.bf16 %v3864, %v3864
        %v3897 = vpack.c.bf16 %v3865, %v3865
        %v3898 = vpack.c.bf16 %v3866, %v3866
        %v3899 = vpack.c.bf16 %v3867, %v3867
        %v3900 = vpack.c.bf16 %v3868, %v3868
        %v3901 = vpack.c.bf16 %v3869, %v3869
        %v3902 = vpack.c.bf16 %v3870, %v3870
        %v3903 = vpack.c.bf16 %v3871, %v3871
        %v3904 = vpack.c.bf16 %v3872, %v3872
        %v3905 = vpack.c.bf16 %v3873, %v3873
        %v3906 = vpack.c.bf16 %v3874, %v3874
        %v3907 = vpack.c.bf16 %v3875, %v3875
        %v3908 = vpack.c.bf16 %v3876, %v3876
        %3941 = vrot.lane.b32.xlu0 %v3877, 48
        %v3942 = vpop.permute.xlu0 %3941
        %3943 = vrot.lane.b32.xlu0 %v3878, 48
        %v3944 = vpop.permute.xlu0 %3943
        %3945 = vrot.lane.b32.xlu0 %v3879, 48
        %v3946 = vpop.permute.xlu0 %3945
        %3947 = vrot.lane.b32.xlu0 %v3880, 48
        %v3948 = vpop.permute.xlu0 %3947
        %3949 = vrot.lane.b32.xlu0 %v3881, 48
        %v3950 = vpop.permute.xlu0 %3949
        %3951 = vrot.lane.b32.xlu0 %v3882, 48
        %v3952 = vpop.permute.xlu0 %3951
        %3953 = vrot.lane.b32.xlu0 %v3883, 48
        %v3954 = vpop.permute.xlu0 %3953
        %3955 = vrot.lane.b32.xlu0 %v3884, 48
        %v3956 = vpop.permute.xlu0 %3955
        %3957 = vrot.lane.b32.xlu0 %v3885, 48
        %v3958 = vpop.permute.xlu0 %3957
        %3959 = vrot.lane.b32.xlu0 %v3886, 48
        %v3960 = vpop.permute.xlu0 %3959
        %3961 = vrot.lane.b32.xlu0 %v3887, 48
        %v3962 = vpop.permute.xlu0 %3961
        %3963 = vrot.lane.b32.xlu0 %v3888, 48
        %v3964 = vpop.permute.xlu0 %3963
        %3965 = vrot.lane.b32.xlu0 %v3889, 48
        %v3966 = vpop.permute.xlu0 %3965
        %3967 = vrot.lane.b32.xlu0 %v3890, 48
        %v3968 = vpop.permute.xlu0 %3967
        %3969 = vrot.lane.b32.xlu0 %v3891, 48
        %v3970 = vpop.permute.xlu0 %3969
        %3971 = vrot.lane.b32.xlu0 %v3892, 48
        %v3972 = vpop.permute.xlu0 %3971
        %3973 = vrot.lane.b32.xlu0 %v3893, 48
        %v3974 = vpop.permute.xlu0 %3973
        %3975 = vrot.lane.b32.xlu0 %v3894, 48
        %v3976 = vpop.permute.xlu0 %3975
        %3977 = vrot.lane.b32.xlu0 %v3895, 48
        %v3978 = vpop.permute.xlu0 %3977
        %3979 = vrot.lane.b32.xlu0 %v3896, 48
        %v3980 = vpop.permute.xlu0 %3979
        %3981 = vrot.lane.b32.xlu0 %v3897, 48
        %v3982 = vpop.permute.xlu0 %3981
        %3983 = vrot.lane.b32.xlu0 %v3898, 48
        %v3984 = vpop.permute.xlu0 %3983
        %3985 = vrot.lane.b32.xlu0 %v3899, 48
        %v3986 = vpop.permute.xlu0 %3985
        %3987 = vrot.lane.b32.xlu0 %v3900, 48
        %v3988 = vpop.permute.xlu0 %3987
        %3989 = vrot.lane.b32.xlu0 %v3901, 48
        %v3990 = vpop.permute.xlu0 %3989
        %3991 = vrot.lane.b32.xlu0 %v3902, 48
        %v3992 = vpop.permute.xlu0 %3991
        %3993 = vrot.lane.b32.xlu0 %v3903, 48
        %v3994 = vpop.permute.xlu0 %3993
        %3995 = vrot.lane.b32.xlu0 %v3904, 48
        %v3996 = vpop.permute.xlu0 %3995
        %3997 = vrot.lane.b32.xlu0 %v3905, 48
        %v3998 = vpop.permute.xlu0 %3997
        %3999 = vrot.lane.b32.xlu0 %v3906, 48
        %v4000 = vpop.permute.xlu0 %3999
        %4001 = vrot.lane.b32.xlu0 %v3907, 48
        %v4002 = vpop.permute.xlu0 %4001
        %4003 = vrot.lane.b32.xlu0 %v3908, 48
        %v4004 = vpop.permute.xlu0 %4003
        %vm4037 = vcmask 454016
        %4038 = vst.msk [vmem:[#allocation5] sm:$0xf] %vm4037, %v3942
        %4039 = vst.msk [vmem:[#allocation5 + $0x4] sm:$0xf] %vm4037, %v3944
        %4040 = vst.msk [vmem:[#allocation5 + $0x8] sm:$0xf] %vm4037, %v3946
        %4041 = vst.msk [vmem:[#allocation5 + $0xc] sm:$0xf] %vm4037, %v3948
        %4042 = vst.msk [vmem:[#allocation5 + $0x10] sm:$0xf] %vm4037, %v3950
        %4043 = vst.msk [vmem:[#allocation5 + $0x14] sm:$0xf] %vm4037, %v3952
        %4044 = vst.msk [vmem:[#allocation5 + $0x18] sm:$0xf] %vm4037, %v3954
        %4045 = vst.msk [vmem:[#allocation5 + $0x1c] sm:$0xf] %vm4037, %v3956
        %4046 = vst.msk [vmem:[#allocation5 + $0x20] sm:$0xf] %vm4037, %v3958
        %4047 = vst.msk [vmem:[#allocation5 + $0x24] sm:$0xf] %vm4037, %v3960
        %4048 = vst.msk [vmem:[#allocation5 + $0x28] sm:$0xf] %vm4037, %v3962
        %4049 = vst.msk [vmem:[#allocation5 + $0x2c] sm:$0xf] %vm4037, %v3964
        %4050 = vst.msk [vmem:[#allocation5 + $0x30] sm:$0xf] %vm4037, %v3966
        %4051 = vst.msk [vmem:[#allocation5 + $0x34] sm:$0xf] %vm4037, %v3968
        %4052 = vst.msk [vmem:[#allocation5 + $0x38] sm:$0xf] %vm4037, %v3970
        %4053 = vst.msk [vmem:[#allocation5 + $0x3c] sm:$0xf] %vm4037, %v3972
        %4054 = vst.msk [vmem:[#allocation5 + $0x40] sm:$0xf] %vm4037, %v3974
        %4055 = vst.msk [vmem:[#allocation5 + $0x44] sm:$0xf] %vm4037, %v3976
        %4056 = vst.msk [vmem:[#allocation5 + $0x48] sm:$0xf] %vm4037, %v3978
        %4057 = vst.msk [vmem:[#allocation5 + $0x4c] sm:$0xf] %vm4037, %v3980
        %4058 = vst.msk [vmem:[#allocation5 + $0x50] sm:$0xf] %vm4037, %v3982
        %4059 = vst.msk [vmem:[#allocation5 + $0x54] sm:$0xf] %vm4037, %v3984
        %4060 = vst.msk [vmem:[#allocation5 + $0x58] sm:$0xf] %vm4037, %v3986
        %4061 = vst.msk [vmem:[#allocation5 + $0x5c] sm:$0xf] %vm4037, %v3988
        %4062 = vst.msk [vmem:[#allocation5 + $0x60] sm:$0xf] %vm4037, %v3990
        %4063 = vst.msk [vmem:[#allocation5 + $0x64] sm:$0xf] %vm4037, %v3992
        %4064 = vst.msk [vmem:[#allocation5 + $0x68] sm:$0xf] %vm4037, %v3994
        %4065 = vst.msk [vmem:[#allocation5 + $0x6c] sm:$0xf] %vm4037, %v3996
        %4066 = vst.msk [vmem:[#allocation5 + $0x70] sm:$0xf] %vm4037, %v3998
        %4067 = vst.msk [vmem:[#allocation5 + $0x74] sm:$0xf] %vm4037, %v4000
        %4068 = vst.msk [vmem:[#allocation5 + $0x78] sm:$0xf] %vm4037, %v4002
        %4069 = vst.msk [vmem:[#allocation5 + $0x7c] sm:$0xf] %vm4037, %v4004
        %v4070 = vld [vmem:[%s3844 + $0x1] sm:$0xff]
        %v4071 = vld [vmem:[%s3844 + $0x9] sm:$0xff]
        %v4072 = vld [vmem:[%s3844 + $0x19] sm:$0xff]
        %v4073 = vld [vmem:[%s3844 + $0x21] sm:$0xff]
        %v4074 = vld [vmem:[%s3844 + $0x31] sm:$0xff]
        %v4075 = vld [vmem:[%s3844 + $0x39] sm:$0xff]
        %v4076 = vld [vmem:[%s3844 + $0x49] sm:$0xff]
        %v4077 = vld [vmem:[%s3844 + $0x51] sm:$0xff]
        %v4078 = vld [vmem:[%s3844 + $0x61] sm:$0xff]
        %v4079 = vld [vmem:[%s3844 + $0x69] sm:$0xff]
        %v4080 = vld [vmem:[%s3844 + $0x79] sm:$0xff]
        %v4081 = vld [vmem:[%s3844 + $0x81] sm:$0xff]
        %v4082 = vld [vmem:[%s3844 + $0x91] sm:$0xff]
        %v4083 = vld [vmem:[%s3844 + $0x99] sm:$0xff]
        %v4084 = vld [vmem:[%s3844 + $0xa9] sm:$0xff]
        %v4085 = vld [vmem:[%s3844 + $0xb1] sm:$0xff]
        %v4086 = vld [vmem:[%s3844 + $0xc1] sm:$0xff]
        %v4087 = vld [vmem:[%s3844 + $0xc9] sm:$0xff]
        %v4088 = vld [vmem:[%s3844 + $0xd9] sm:$0xff]
        %v4089 = vld [vmem:[%s3844 + $0xe1] sm:$0xff]
        %v4090 = vld [vmem:[%s3844 + $0xf1] sm:$0xff]
        %v4091 = vld [vmem:[%s3844 + $0xf9] sm:$0xff]
        %v4092 = vld [vmem:[%s3844 + $0x109] sm:$0xff]
        %v4093 = vld [vmem:[%s3844 + $0x111] sm:$0xff]
        %v4094 = vld [vmem:[%s3844 + $0x121] sm:$0xff]
        %v4095 = vld [vmem:[%s3844 + $0x129] sm:$0xff]
        %v4096 = vld [vmem:[%s3844 + $0x139] sm:$0xff]
        %v4097 = vld [vmem:[%s3844 + $0x141] sm:$0xff]
        %v4098 = vld [vmem:[%s3844 + $0x151] sm:$0xff]
        %v4099 = vld [vmem:[%s3844 + $0x159] sm:$0xff]
        %v4100 = vld [vmem:[%s3844 + $0x169] sm:$0xff]
        %v4101 = vld [vmem:[%s3844 + $0x171] sm:$0xff]
        %v4102 = vpack.c.bf16 %v4070, %v4070
        %v4103 = vpack.c.bf16 %v4071, %v4071
        %v4104 = vpack.c.bf16 %v4072, %v4072
        %v4105 = vpack.c.bf16 %v4073, %v4073
        %v4106 = vpack.c.bf16 %v4074, %v4074
        %v4107 = vpack.c.bf16 %v4075, %v4075
        %v4108 = vpack.c.bf16 %v4076, %v4076
        %v4109 = vpack.c.bf16 %v4077, %v4077
        %v4110 = vpack.c.bf16 %v4078, %v4078
        %v4111 = vpack.c.bf16 %v4079, %v4079
        %v4112 = vpack.c.bf16 %v4080, %v4080
        %v4113 = vpack.c.bf16 %v4081, %v4081
        %v4114 = vpack.c.bf16 %v4082, %v4082
        %v4115 = vpack.c.bf16 %v4083, %v4083
        %v4116 = vpack.c.bf16 %v4084, %v4084
        %v4117 = vpack.c.bf16 %v4085, %v4085
        %v4118 = vpack.c.bf16 %v4086, %v4086
        %v4119 = vpack.c.bf16 %v4087, %v4087
        %v4120 = vpack.c.bf16 %v4088, %v4088
        %v4121 = vpack.c.bf16 %v4089, %v4089
        %v4122 = vpack.c.bf16 %v4090, %v4090
        %v4123 = vpack.c.bf16 %v4091, %v4091
        %v4124 = vpack.c.bf16 %v4092, %v4092
        %v4125 = vpack.c.bf16 %v4093, %v4093
        %v4126 = vpack.c.bf16 %v4094, %v4094
        %v4127 = vpack.c.bf16 %v4095, %v4095
        %v4128 = vpack.c.bf16 %v4096, %v4096
        %v4129 = vpack.c.bf16 %v4097, %v4097
        %v4130 = vpack.c.bf16 %v4098, %v4098
        %v4131 = vpack.c.bf16 %v4099, %v4099
        %v4132 = vpack.c.bf16 %v4100, %v4100
        %v4133 = vpack.c.bf16 %v4101, %v4101
        %4166 = vrot.lane.b32.xlu0 %v4102, 56
        %v4167 = vpop.permute.xlu0 %4166
        %4168 = vrot.lane.b32.xlu0 %v4103, 56
        %v4169 = vpop.permute.xlu0 %4168
        %4170 = vrot.lane.b32.xlu0 %v4104, 56
        %v4171 = vpop.permute.xlu0 %4170
        %4172 = vrot.lane.b32.xlu0 %v4105, 56
        %v4173 = vpop.permute.xlu0 %4172
        %4174 = vrot.lane.b32.xlu0 %v4106, 56
        %v4175 = vpop.permute.xlu0 %4174
        %4176 = vrot.lane.b32.xlu0 %v4107, 56
        %v4177 = vpop.permute.xlu0 %4176
        %4178 = vrot.lane.b32.xlu0 %v4108, 56
        %v4179 = vpop.permute.xlu0 %4178
        %4180 = vrot.lane.b32.xlu0 %v4109, 56
        %v4181 = vpop.permute.xlu0 %4180
        %4182 = vrot.lane.b32.xlu0 %v4110, 56
        %v4183 = vpop.permute.xlu0 %4182
        %4184 = vrot.lane.b32.xlu0 %v4111, 56
        %v4185 = vpop.permute.xlu0 %4184
        %4186 = vrot.lane.b32.xlu0 %v4112, 56
        %v4187 = vpop.permute.xlu0 %4186
        %4188 = vrot.lane.b32.xlu0 %v4113, 56
        %v4189 = vpop.permute.xlu0 %4188
        %4190 = vrot.lane.b32.xlu0 %v4114, 56
        %v4191 = vpop.permute.xlu0 %4190
        %4192 = vrot.lane.b32.xlu0 %v4115, 56
        %v4193 = vpop.permute.xlu0 %4192
        %4194 = vrot.lane.b32.xlu0 %v4116, 56
        %v4195 = vpop.permute.xlu0 %4194
        %4196 = vrot.lane.b32.xlu0 %v4117, 56
        %v4197 = vpop.permute.xlu0 %4196
        %4198 = vrot.lane.b32.xlu0 %v4118, 56
        %v4199 = vpop.permute.xlu0 %4198
        %4200 = vrot.lane.b32.xlu0 %v4119, 56
        %v4201 = vpop.permute.xlu0 %4200
        %4202 = vrot.lane.b32.xlu0 %v4120, 56
        %v4203 = vpop.permute.xlu0 %4202
        %4204 = vrot.lane.b32.xlu0 %v4121, 56
        %v4205 = vpop.permute.xlu0 %4204
        %4206 = vrot.lane.b32.xlu0 %v4122, 56
        %v4207 = vpop.permute.xlu0 %4206
        %4208 = vrot.lane.b32.xlu0 %v4123, 56
        %v4209 = vpop.permute.xlu0 %4208
        %4210 = vrot.lane.b32.xlu0 %v4124, 56
        %v4211 = vpop.permute.xlu0 %4210
        %4212 = vrot.lane.b32.xlu0 %v4125, 56
        %v4213 = vpop.permute.xlu0 %4212
        %4214 = vrot.lane.b32.xlu0 %v4126, 56
        %v4215 = vpop.permute.xlu0 %4214
        %4216 = vrot.lane.b32.xlu0 %v4127, 56
        %v4217 = vpop.permute.xlu0 %4216
        %4218 = vrot.lane.b32.xlu0 %v4128, 56
        %v4219 = vpop.permute.xlu0 %4218
        %4220 = vrot.lane.b32.xlu0 %v4129, 56
        %v4221 = vpop.permute.xlu0 %4220
        %4222 = vrot.lane.b32.xlu0 %v4130, 56
        %v4223 = vpop.permute.xlu0 %4222
        %4224 = vrot.lane.b32.xlu0 %v4131, 56
        %v4225 = vpop.permute.xlu0 %4224
        %4226 = vrot.lane.b32.xlu0 %v4132, 56
        %v4227 = vpop.permute.xlu0 %4226
        %4228 = vrot.lane.b32.xlu0 %v4133, 56
        %v4229 = vpop.permute.xlu0 %4228
        %vm4262 = vcmask 519616
        %4263 = vst.msk [vmem:[#allocation5] sm:$0xf] %vm4262, %v4167
        %4264 = vst.msk [vmem:[#allocation5 + $0x4] sm:$0xf] %vm4262, %v4169
        %4265 = vst.msk [vmem:[#allocation5 + $0x8] sm:$0xf] %vm4262, %v4171
        %4266 = vst.msk [vmem:[#allocation5 + $0xc] sm:$0xf] %vm4262, %v4173
        %4267 = vst.msk [vmem:[#allocation5 + $0x10] sm:$0xf] %vm4262, %v4175
        %4268 = vst.msk [vmem:[#allocation5 + $0x14] sm:$0xf] %vm4262, %v4177
        %4269 = vst.msk [vmem:[#allocation5 + $0x18] sm:$0xf] %vm4262, %v4179
        %4270 = vst.msk [vmem:[#allocation5 + $0x1c] sm:$0xf] %vm4262, %v4181
        %4271 = vst.msk [vmem:[#allocation5 + $0x20] sm:$0xf] %vm4262, %v4183
        %4272 = vst.msk [vmem:[#allocation5 + $0x24] sm:$0xf] %vm4262, %v4185
        %4273 = vst.msk [vmem:[#allocation5 + $0x28] sm:$0xf] %vm4262, %v4187
        %4274 = vst.msk [vmem:[#allocation5 + $0x2c] sm:$0xf] %vm4262, %v4189
        %4275 = vst.msk [vmem:[#allocation5 + $0x30] sm:$0xf] %vm4262, %v4191
        %4276 = vst.msk [vmem:[#allocation5 + $0x34] sm:$0xf] %vm4262, %v4193
        %4277 = vst.msk [vmem:[#allocation5 + $0x38] sm:$0xf] %vm4262, %v4195
        %4278 = vst.msk [vmem:[#allocation5 + $0x3c] sm:$0xf] %vm4262, %v4197
        %4279 = vst.msk [vmem:[#allocation5 + $0x40] sm:$0xf] %vm4262, %v4199
        %4280 = vst.msk [vmem:[#allocation5 + $0x44] sm:$0xf] %vm4262, %v4201
        %4281 = vst.msk [vmem:[#allocation5 + $0x48] sm:$0xf] %vm4262, %v4203
        %4282 = vst.msk [vmem:[#allocation5 + $0x4c] sm:$0xf] %vm4262, %v4205
        %4283 = vst.msk [vmem:[#allocation5 + $0x50] sm:$0xf] %vm4262, %v4207
        %4284 = vst.msk [vmem:[#allocation5 + $0x54] sm:$0xf] %vm4262, %v4209
        %4285 = vst.msk [vmem:[#allocation5 + $0x58] sm:$0xf] %vm4262, %v4211
        %4286 = vst.msk [vmem:[#allocation5 + $0x5c] sm:$0xf] %vm4262, %v4213
        %4287 = vst.msk [vmem:[#allocation5 + $0x60] sm:$0xf] %vm4262, %v4215
        %4288 = vst.msk [vmem:[#allocation5 + $0x64] sm:$0xf] %vm4262, %v4217
        %4289 = vst.msk [vmem:[#allocation5 + $0x68] sm:$0xf] %vm4262, %v4219
        %4290 = vst.msk [vmem:[#allocation5 + $0x6c] sm:$0xf] %vm4262, %v4221
        %4291 = vst.msk [vmem:[#allocation5 + $0x70] sm:$0xf] %vm4262, %v4223
        %4292 = vst.msk [vmem:[#allocation5 + $0x74] sm:$0xf] %vm4262, %v4225
        %4293 = vst.msk [vmem:[#allocation5 + $0x78] sm:$0xf] %vm4262, %v4227
        %4294 = vst.msk [vmem:[#allocation5 + $0x7c] sm:$0xf] %vm4262, %v4229
        %v4295 = vld [vmem:[%s3844 + $0x2] sm:$0xff]
        %v4296 = vld [vmem:[%s3844 + $0xa] sm:$0xff]
        %v4297 = vld [vmem:[%s3844 + $0x1a] sm:$0xff]
        %v4298 = vld [vmem:[%s3844 + $0x22] sm:$0xff]
        %v4299 = vld [vmem:[%s3844 + $0x32] sm:$0xff]
        %v4300 = vld [vmem:[%s3844 + $0x3a] sm:$0xff]
        %v4301 = vld [vmem:[%s3844 + $0x4a] sm:$0xff]
        %v4302 = vld [vmem:[%s3844 + $0x52] sm:$0xff]
        %v4303 = vld [vmem:[%s3844 + $0x62] sm:$0xff]
        %v4304 = vld [vmem:[%s3844 + $0x6a] sm:$0xff]
        %v4305 = vld [vmem:[%s3844 + $0x7a] sm:$0xff]
        %v4306 = vld [vmem:[%s3844 + $0x82] sm:$0xff]
        %v4307 = vld [vmem:[%s3844 + $0x92] sm:$0xff]
        %v4308 = vld [vmem:[%s3844 + $0x9a] sm:$0xff]
        %v4309 = vld [vmem:[%s3844 + $0xaa] sm:$0xff]
        %v4310 = vld [vmem:[%s3844 + $0xb2] sm:$0xff]
        %v4311 = vld [vmem:[%s3844 + $0xc2] sm:$0xff]
        %v4312 = vld [vmem:[%s3844 + $0xca] sm:$0xff]
        %v4313 = vld [vmem:[%s3844 + $0xda] sm:$0xff]
        %v4314 = vld [vmem:[%s3844 + $0xe2] sm:$0xff]
        %v4315 = vld [vmem:[%s3844 + $0xf2] sm:$0xff]
        %v4316 = vld [vmem:[%s3844 + $0xfa] sm:$0xff]
        %v4317 = vld [vmem:[%s3844 + $0x10a] sm:$0xff]
        %v4318 = vld [vmem:[%s3844 + $0x112] sm:$0xff]
        %v4319 = vld [vmem:[%s3844 + $0x122] sm:$0xff]
        %v4320 = vld [vmem:[%s3844 + $0x12a] sm:$0xff]
        %v4321 = vld [vmem:[%s3844 + $0x13a] sm:$0xff]
        %v4322 = vld [vmem:[%s3844 + $0x142] sm:$0xff]
        %v4323 = vld [vmem:[%s3844 + $0x152] sm:$0xff]
        %v4324 = vld [vmem:[%s3844 + $0x15a] sm:$0xff]
        %v4325 = vld [vmem:[%s3844 + $0x16a] sm:$0xff]
        %v4326 = vld [vmem:[%s3844 + $0x172] sm:$0xff]
        %v4327 = vpack.c.bf16 %v4295, %v4295
        %v4328 = vpack.c.bf16 %v4296, %v4296
        %v4329 = vpack.c.bf16 %v4297, %v4297
        %v4330 = vpack.c.bf16 %v4298, %v4298
        %v4331 = vpack.c.bf16 %v4299, %v4299
        %v4332 = vpack.c.bf16 %v4300, %v4300
        %v4333 = vpack.c.bf16 %v4301, %v4301
        %v4334 = vpack.c.bf16 %v4302, %v4302
        %v4335 = vpack.c.bf16 %v4303, %v4303
        %v4336 = vpack.c.bf16 %v4304, %v4304
        %v4337 = vpack.c.bf16 %v4305, %v4305
        %v4338 = vpack.c.bf16 %v4306, %v4306
        %v4339 = vpack.c.bf16 %v4307, %v4307
        %v4340 = vpack.c.bf16 %v4308, %v4308
        %v4341 = vpack.c.bf16 %v4309, %v4309
        %v4342 = vpack.c.bf16 %v4310, %v4310
        %v4343 = vpack.c.bf16 %v4311, %v4311
        %v4344 = vpack.c.bf16 %v4312, %v4312
        %v4345 = vpack.c.bf16 %v4313, %v4313
        %v4346 = vpack.c.bf16 %v4314, %v4314
        %v4347 = vpack.c.bf16 %v4315, %v4315
        %v4348 = vpack.c.bf16 %v4316, %v4316
        %v4349 = vpack.c.bf16 %v4317, %v4317
        %v4350 = vpack.c.bf16 %v4318, %v4318
        %v4351 = vpack.c.bf16 %v4319, %v4319
        %v4352 = vpack.c.bf16 %v4320, %v4320
        %v4353 = vpack.c.bf16 %v4321, %v4321
        %v4354 = vpack.c.bf16 %v4322, %v4322
        %v4355 = vpack.c.bf16 %v4323, %v4323
        %v4356 = vpack.c.bf16 %v4324, %v4324
        %v4357 = vpack.c.bf16 %v4325, %v4325
        %v4358 = vpack.c.bf16 %v4326, %v4326
        %4391 = vrot.lane.b32.xlu0 %v4327, 64
        %v4392 = vpop.permute.xlu0 %4391
        %4393 = vrot.lane.b32.xlu0 %v4328, 64
        %v4394 = vpop.permute.xlu0 %4393
        %4395 = vrot.lane.b32.xlu0 %v4329, 64
        %v4396 = vpop.permute.xlu0 %4395
        %4397 = vrot.lane.b32.xlu0 %v4330, 64
        %v4398 = vpop.permute.xlu0 %4397
        %4399 = vrot.lane.b32.xlu0 %v4331, 64
        %v4400 = vpop.permute.xlu0 %4399
        %4401 = vrot.lane.b32.xlu0 %v4332, 64
        %v4402 = vpop.permute.xlu0 %4401
        %4403 = vrot.lane.b32.xlu0 %v4333, 64
        %v4404 = vpop.permute.xlu0 %4403
        %4405 = vrot.lane.b32.xlu0 %v4334, 64
        %v4406 = vpop.permute.xlu0 %4405
        %4407 = vrot.lane.b32.xlu0 %v4335, 64
        %v4408 = vpop.permute.xlu0 %4407
        %4409 = vrot.lane.b32.xlu0 %v4336, 64
        %v4410 = vpop.permute.xlu0 %4409
        %4411 = vrot.lane.b32.xlu0 %v4337, 64
        %v4412 = vpop.permute.xlu0 %4411
        %4413 = vrot.lane.b32.xlu0 %v4338, 64
        %v4414 = vpop.permute.xlu0 %4413
        %4415 = vrot.lane.b32.xlu0 %v4339, 64
        %v4416 = vpop.permute.xlu0 %4415
        %4417 = vrot.lane.b32.xlu0 %v4340, 64
        %v4418 = vpop.permute.xlu0 %4417
        %4419 = vrot.lane.b32.xlu0 %v4341, 64
        %v4420 = vpop.permute.xlu0 %4419
        %4421 = vrot.lane.b32.xlu0 %v4342, 64
        %v4422 = vpop.permute.xlu0 %4421
        %4423 = vrot.lane.b32.xlu0 %v4343, 64
        %v4424 = vpop.permute.xlu0 %4423
        %4425 = vrot.lane.b32.xlu0 %v4344, 64
        %v4426 = vpop.permute.xlu0 %4425
        %4427 = vrot.lane.b32.xlu0 %v4345, 64
        %v4428 = vpop.permute.xlu0 %4427
        %4429 = vrot.lane.b32.xlu0 %v4346, 64
        %v4430 = vpop.permute.xlu0 %4429
        %4431 = vrot.lane.b32.xlu0 %v4347, 64
        %v4432 = vpop.permute.xlu0 %4431
        %4433 = vrot.lane.b32.xlu0 %v4348, 64
        %v4434 = vpop.permute.xlu0 %4433
        %4435 = vrot.lane.b32.xlu0 %v4349, 64
        %v4436 = vpop.permute.xlu0 %4435
        %4437 = vrot.lane.b32.xlu0 %v4350, 64
        %v4438 = vpop.permute.xlu0 %4437
        %4439 = vrot.lane.b32.xlu0 %v4351, 64
        %v4440 = vpop.permute.xlu0 %4439
        %4441 = vrot.lane.b32.xlu0 %v4352, 64
        %v4442 = vpop.permute.xlu0 %4441
        %4443 = vrot.lane.b32.xlu0 %v4353, 64
        %v4444 = vpop.permute.xlu0 %4443
        %4445 = vrot.lane.b32.xlu0 %v4354, 64
        %v4446 = vpop.permute.xlu0 %4445
        %4447 = vrot.lane.b32.xlu0 %v4355, 64
        %v4448 = vpop.permute.xlu0 %4447
        %4449 = vrot.lane.b32.xlu0 %v4356, 64
        %v4450 = vpop.permute.xlu0 %4449
        %4451 = vrot.lane.b32.xlu0 %v4357, 64
        %v4452 = vpop.permute.xlu0 %4451
        %4453 = vrot.lane.b32.xlu0 %v4358, 64
        %v4454 = vpop.permute.xlu0 %4453
        %vm4487 = vcmask 585216
        %4488 = vst.msk [vmem:[#allocation5] sm:$0xf] %vm4487, %v4392
        %4489 = vst.msk [vmem:[#allocation5 + $0x4] sm:$0xf] %vm4487, %v4394
        %4490 = vst.msk [vmem:[#allocation5 + $0x8] sm:$0xf] %vm4487, %v4396
        %4491 = vst.msk [vmem:[#allocation5 + $0xc] sm:$0xf] %vm4487, %v4398
        %4492 = vst.msk [vmem:[#allocation5 + $0x10] sm:$0xf] %vm4487, %v4400
        %4493 = vst.msk [vmem:[#allocation5 + $0x14] sm:$0xf] %vm4487, %v4402
        %4494 = vst.msk [vmem:[#allocation5 + $0x18] sm:$0xf] %vm4487, %v4404
        %4495 = vst.msk [vmem:[#allocation5 + $0x1c] sm:$0xf] %vm4487, %v4406
        %4496 = vst.msk [vmem:[#allocation5 + $0x20] sm:$0xf] %vm4487, %v4408
        %4497 = vst.msk [vmem:[#allocation5 + $0x24] sm:$0xf] %vm4487, %v4410
        %4498 = vst.msk [vmem:[#allocation5 + $0x28] sm:$0xf] %vm4487, %v4412
        %4499 = vst.msk [vmem:[#allocation5 + $0x2c] sm:$0xf] %vm4487, %v4414
        %4500 = vst.msk [vmem:[#allocation5 + $0x30] sm:$0xf] %vm4487, %v4416
        %4501 = vst.msk [vmem:[#allocation5 + $0x34] sm:$0xf] %vm4487, %v4418
        %4502 = vst.msk [vmem:[#allocation5 + $0x38] sm:$0xf] %vm4487, %v4420
        %4503 = vst.msk [vmem:[#allocation5 + $0x3c] sm:$0xf] %vm4487, %v4422
        %4504 = vst.msk [vmem:[#allocation5 + $0x40] sm:$0xf] %vm4487, %v4424
        %4505 = vst.msk [vmem:[#allocation5 + $0x44] sm:$0xf] %vm4487, %v4426
        %4506 = vst.msk [vmem:[#allocation5 + $0x48] sm:$0xf] %vm4487, %v4428
        %4507 = vst.msk [vmem:[#allocation5 + $0x4c] sm:$0xf] %vm4487, %v4430
        %4508 = vst.msk [vmem:[#allocation5 + $0x50] sm:$0xf] %vm4487, %v4432
        %4509 = vst.msk [vmem:[#allocation5 + $0x54] sm:$0xf] %vm4487, %v4434
        %4510 = vst.msk [vmem:[#allocation5 + $0x58] sm:$0xf] %vm4487, %v4436
        %4511 = vst.msk [vmem:[#allocation5 + $0x5c] sm:$0xf] %vm4487, %v4438
        %4512 = vst.msk [vmem:[#allocation5 + $0x60] sm:$0xf] %vm4487, %v4440
        %4513 = vst.msk [vmem:[#allocation5 + $0x64] sm:$0xf] %vm4487, %v4442
        %4514 = vst.msk [vmem:[#allocation5 + $0x68] sm:$0xf] %vm4487, %v4444
        %4515 = vst.msk [vmem:[#allocation5 + $0x6c] sm:$0xf] %vm4487, %v4446
        %4516 = vst.msk [vmem:[#allocation5 + $0x70] sm:$0xf] %vm4487, %v4448
        %4517 = vst.msk [vmem:[#allocation5 + $0x74] sm:$0xf] %vm4487, %v4450
        %4518 = vst.msk [vmem:[#allocation5 + $0x78] sm:$0xf] %vm4487, %v4452
        %4519 = vst.msk [vmem:[#allocation5 + $0x7c] sm:$0xf] %vm4487, %v4454
        %v4520 = vld [vmem:[%s3] sm:$0xf]
        %v4521 = vld [vmem:[#allocation5] sm:$0xf]
        %v4522 = vld [vmem:[#allocation5 + $0x4] sm:$0xf]
        %v4523 = vld [vmem:[#allocation5 + $0x8] sm:$0xf]
        %v4524 = vld [vmem:[#allocation5 + $0xc] sm:$0xf]
        %v4525 = vld [vmem:[#allocation5 + $0x10] sm:$0xf]
        %v4526 = vld [vmem:[#allocation5 + $0x14] sm:$0xf]
        %v4527 = vld [vmem:[#allocation5 + $0x18] sm:$0xf]
        %v4528 = vld [vmem:[#allocation5 + $0x1c] sm:$0xf]
        %v4529 = vld [vmem:[#allocation5 + $0x20] sm:$0xf]
        %v4530 = vld [vmem:[#allocation5 + $0x24] sm:$0xf]
        %v4531 = vld [vmem:[#allocation5 + $0x28] sm:$0xf]
        %v4532 = vld [vmem:[#allocation5 + $0x2c] sm:$0xf]
        %v4533 = vld [vmem:[#allocation5 + $0x30] sm:$0xf]
        %v4534 = vld [vmem:[#allocation5 + $0x34] sm:$0xf]
        %v4535 = vld [vmem:[#allocation5 + $0x38] sm:$0xf]
        %v4536 = vld [vmem:[#allocation5 + $0x3c] sm:$0xf]
        %v4537 = vld [vmem:[#allocation5 + $0x40] sm:$0xf]
        %v4538 = vld [vmem:[#allocation5 + $0x44] sm:$0xf]
        %v4539 = vld [vmem:[#allocation5 + $0x48] sm:$0xf]
        %v4540 = vld [vmem:[#allocation5 + $0x4c] sm:$0xf]
        %v4541 = vld [vmem:[#allocation5 + $0x50] sm:$0xf]
        %v4542 = vld [vmem:[#allocation5 + $0x54] sm:$0xf]
        %v4543 = vld [vmem:[#allocation5 + $0x58] sm:$0xf]
        %v4544 = vld [vmem:[#allocation5 + $0x5c] sm:$0xf]
        %v4545 = vld [vmem:[#allocation5 + $0x60] sm:$0xf]
        %v4546 = vld [vmem:[#allocation5 + $0x64] sm:$0xf]
        %v4547 = vld [vmem:[#allocation5 + $0x68] sm:$0xf]
        %v4548 = vld [vmem:[#allocation5 + $0x6c] sm:$0xf]
        %v4549 = vld [vmem:[#allocation5 + $0x70] sm:$0xf]
        %v4550 = vld [vmem:[#allocation5 + $0x74] sm:$0xf]
        %v4551 = vld [vmem:[#allocation5 + $0x78] sm:$0xf]
        %v4552 = vld [vmem:[#allocation5 + $0x7c] sm:$0xf]
        %v4553 = vld [vmem:[%s4] sm:$0xff]
        %4555 = vset.pattern.permute.xlu0 0
        %4556 = vperm.xlu0 %4555, %v4553
        %v4557 = vpop.permute.xlu0 %4556
        %v4591 = vunpack.c.l.b16 %v4521
        %v4592 = vunpack.c.l.b16 %v4522
        %v4593 = vunpack.c.l.b16 %v4523
        %v4594 = vunpack.c.l.b16 %v4524
        %v4595 = vunpack.c.l.b16 %v4525
        %v4596 = vunpack.c.l.b16 %v4526
        %v4597 = vunpack.c.l.b16 %v4527
        %v4598 = vunpack.c.l.b16 %v4528
        %v4599 = vunpack.c.l.b16 %v4529
        %v4600 = vunpack.c.l.b16 %v4530
        %v4601 = vunpack.c.l.b16 %v4531
        %v4602 = vunpack.c.l.b16 %v4532
        %v4603 = vunpack.c.l.b16 %v4533
        %v4604 = vunpack.c.l.b16 %v4534
        %v4605 = vunpack.c.l.b16 %v4535
        %v4606 = vunpack.c.l.b16 %v4536
        %v4607 = vunpack.c.l.b16 %v4537
        %v4608 = vunpack.c.l.b16 %v4538
        %v4609 = vunpack.c.l.b16 %v4539
        %v4610 = vunpack.c.l.b16 %v4540
        %v4611 = vunpack.c.l.b16 %v4541
        %v4612 = vunpack.c.l.b16 %v4542
        %v4613 = vunpack.c.l.b16 %v4543
        %v4614 = vunpack.c.l.b16 %v4544
        %v4615 = vunpack.c.l.b16 %v4545
        %v4616 = vunpack.c.l.b16 %v4546
        %v4617 = vunpack.c.l.b16 %v4547
        %v4618 = vunpack.c.l.b16 %v4548
        %v4619 = vunpack.c.l.b16 %v4549
        %v4620 = vunpack.c.l.b16 %v4550
        %v4621 = vunpack.c.l.b16 %v4551
        %v4622 = vunpack.c.l.b16 %v4552
        %v4623 = vpack.c.b16 %v4592, %v4591
        %v4624 = vpack.c.b16 %v4594, %v4593
        %v4625 = vpack.c.b16 %v4596, %v4595
        %v4626 = vpack.c.b16 %v4598, %v4597
        %v4627 = vpack.c.b16 %v4600, %v4599
        %v4628 = vpack.c.b16 %v4602, %v4601
        %v4629 = vpack.c.b16 %v4604, %v4603
        %v4630 = vpack.c.b16 %v4606, %v4605
        %v4631 = vpack.c.b16 %v4608, %v4607
        %v4632 = vpack.c.b16 %v4610, %v4609
        %v4633 = vpack.c.b16 %v4612, %v4611
        %v4634 = vpack.c.b16 %v4614, %v4613
        %v4635 = vpack.c.b16 %v4616, %v4615
        %v4636 = vpack.c.b16 %v4618, %v4617
        %v4637 = vpack.c.b16 %v4620, %v4619
        %v4638 = vpack.c.b16 %v4622, %v4621
        %vm4639 = vcmask 588800
        %v4641 = vsel %vm4639, %v4520, 0
        %v4644 = vsel %vm4639, %v4623, 0
        %v4647 = vsel %vm4639, %v4624, 0
        %v4650 = vsel %vm4639, %v4625, 0
        %v4653 = vsel %vm4639, %v4626, 0
        %v4656 = vsel %vm4639, %v4627, 0
        %v4659 = vsel %vm4639, %v4628, 0
        %v4662 = vsel %vm4639, %v4629, 0
        %v4665 = vsel %vm4639, %v4630, 0
        %v4668 = vsel %vm4639, %v4631, 0
        %v4671 = vsel %vm4639, %v4632, 0
        %v4674 = vsel %vm4639, %v4633, 0
        %v4677 = vsel %vm4639, %v4634, 0
        %v4680 = vsel %vm4639, %v4635, 0
        %v4683 = vsel %vm4639, %v4636, 0
        %v4686 = vsel %vm4639, %v4637, 0
        %v4689 = vsel %vm4639, %v4638, 0
        %4691 = vmatpush.bf16.xpose.msra.mxu0 %v4665
        %4692 = vmatpush.bf16.xpose.msra.mxu0 %v4662
        %4693 = vmatpush.bf16.xpose.msra.mxu0 %v4659
        %4694 = vmatpush.bf16.xpose.msra.mxu0 %v4656
        %4695 = vmatpush.bf16.xpose.msra.mxu0 %v4653
        %4696 = vmatpush.bf16.xpose.msra.mxu0 %v4650
        %4697 = vmatpush.bf16.xpose.msra.mxu0 %v4647
        %4698 = vmatpush.bf16.xpose.msra.mxu0 %v4644
        %4699 = vmatmul.bf16.gmra.mxu0 %v4641
        %v4700 = vpop.f32.mrf.mxu0
        %v4701 = vadd.f32 %v4557, %v4700
        %v4702 = vpop.f32.mrf.mxu0
        %4703 = vdwg.mxu0
        %4704 = vmatpush.bf16.xpose.msra.mxu0 %v4689
        %4705 = vmatpush.bf16.xpose.msra.mxu0 %v4686
        %4706 = vmatpush.bf16.xpose.msra.mxu0 %v4683
        %4707 = vmatpush.bf16.xpose.msra.mxu0 %v4680
        %4708 = vmatpush.bf16.xpose.msra.mxu0 %v4677
        %4709 = vmatpush.bf16.xpose.msra.mxu0 %v4674
        %4710 = vmatpush.bf16.xpose.msra.mxu0 %v4671
        %4711 = vmatpush.bf16.xpose.msra.mxu0 %v4668
        %4712 = vmatmul.bf16.gmra.mxu0 %v4641
        %v4713 = vpop.f32.mrf.mxu0
        %v4714 = vadd.f32 %v4557, %v4713
        %v4715 = vpop.f32.mrf.mxu0
        %4716 = vdwg.mxu0
        %v4717 = vmax.f32 %v4701, 0.0
        %v4718 = vmax.f32 %v4714, 0.0
        %4719 = vst [vmem:[%s217] sm:$0xff] %v4717
        %4720 = vst [vmem:[%s217 + $0x8] sm:$0xff] %v4718
        %s4721 = sand.u32 %s137, 1
        %s4722 = scalar_lea.sflag [#allocation7], %s4721
        %s4723 = sand.u32 %s137, 1
        %s4724 = smul.addr %s4723, 16
        %s4725 = scalar_lea.vmem [#allocation6], %s4724
        // Predicated region
        $region41: #{tpu_custom_call.1} parent=39 // pred_check
          %p4726 = pneg %p147
        $region42: #{tpu_custom_call.1} parent=39 // pred_check_branch
          %4728 = sbr.rel (%p4726) target = $region44
        $region43: #{tpu_custom_call.1} parent=39 // pred_region
          %4730 = vsyncadd %s4722, 0
          %s4731 = smul.addr %s19, 2
          %s4732 = smul.addr %s4731, 8
          %s4733 = scalar_lea.hbm %s5, %s4732
          %s4735 = sshll.u32 %s4725, 4
          %s4736 = int_to_ptr.vmem [resolvable:$true] %s4735
          %s4737 = sshll.u32 %s4733, 4
          %s4738 = int_to_ptr.hbm [resolvable:$true] %s4737
          %4740 = dma.vmem_to_hbm [thread:$0]  %s4736, 256, %s4738, %s4722
        $region44: #{tpu_custom_call.1} parent=39 // pred_fallthru
          _
      $region40: #{tpu_custom_call.1} parent=5 // pred_fallthru
        _
      %p4741 = scmp.le.s32.totalorder 2, %s14
      // Predicated region
      $region45: #{tpu_custom_call.1} parent=5 // pred_check
        %p4742 = pneg %p4741
      $region46: #{tpu_custom_call.1} parent=5 // pred_check_branch
        %4744 = sbr.rel (%p4742) target = $region48
      $region47: #{tpu_custom_call.1} parent=5 // pred_region
        %s4745 = ssub.s32 %s14, 2
        // Predicated region
        $region49: #{tpu_custom_call.1} parent=47 // pred_check
          %p4746 = pneg %p153
        $region50: #{tpu_custom_call.1} parent=47 // pred_check_branch
          %4748 = sbr.rel (%p4746) target = $region52
        $region51: #{tpu_custom_call.1} parent=47 // pred_region
          %s4749 = sand.u32 %s138, 1
          %s4750 = scalar_lea.sflag [#allocation7], %s4749
          %s4751 = sand.u32 %s138, 1
          %s4752 = smul.addr %s4751, 16
          %s4753 = scalar_lea.vmem [#allocation6], %s4752
          %4755 = dma.done %s4750, 256
        $region52: #{tpu_custom_call.1} parent=47 // pred_fallthru
          _
      $region48: #{tpu_custom_call.1} parent=5 // pred_fallthru
        _
    $region6: #{tpu_custom_call.1} parent=1 // loop_footer
      %s18 = sadd.s32 1, %s14
    $region7: #{tpu_custom_call.1} parent=1 // loop_footer_branch
      %13 = sbr.rel target = $region3
    $region8: #{tpu_custom_call.1} parent=1 // loop_exit
      _
    %4756 = vsyncpa [#allocation7], 1
    %s4757 = scalar_lea.sflag [#allocation7], 1
    %4758 = vsyncpa %s4757, 1

</llo_original>
